<compile_context>
chip_gen: v6e
topology: v6e:2x2x1
jax: 0.10.0
libtpu: 0.0.40
codegen_flags: <defaults>
</compile_context>

<pallas_src>
import functools

import jax
import jax.numpy as jnp
from jax.experimental import pallas as pl
from jax.experimental.pallas import tpu as pltpu


def _vmem_limit():
    """Generation-aware scoped-VMEM cap (v7x has only 64 MiB per TensorCore)."""
    try:
        cap = pltpu.get_tpu_info().vmem_capacity_bytes
        return int(min(cap * 5 // 8, 48 * 1024 * 1024))
    except Exception:  # pragma: no cover - conservative fallback
        return 32 * 1024 * 1024


# ----------------------------- in-kernel helpers -----------------------------

def _layernorm(x, g, b, eps):
    """LayerNorm over the last dim, f32 statistics (matches torch, eps=1e-5)."""
    mu = jnp.mean(x, axis=-1, keepdims=True)
    xc = x - mu
    var = jnp.mean(xc * xc, axis=-1, keepdims=True)
    return xc * jax.lax.rsqrt(var + eps) * g + b


def _gelu_tanh(x):
    # TODO(synk): torch.nn.GELU() default is exact erf; the tanh approximation
    # is used so the transcendental runs on the EUP (|dev| ~1e-3, below the
    # bf16 matmul noise floor of this kernel).
    c = 0.7978845608028654  # sqrt(2/pi)
    return 0.5 * x * (1.0 + jnp.tanh(c * (x + 0.044715 * x * x * x)))


# ----------------------------- Pallas kernels -----------------------------

def _patch_embed_kernel(x_ref, w_ref, b_ref, o_ref):
    # [tm, K] bf16 @ [K, D] bf16 -> f32 accum + bias
    o_ref[...] = (jnp.dot(x_ref[...], w_ref[...],
                          preferred_element_type=jnp.float32) + b_ref[...])


def _encoder_kernel(z_ref, ln1g_ref, ln1b_ref, wqkv_ref, wo_ref, bo_ref,
                    ln2g_ref, ln2b_ref, w1_ref, b1_ref, w2_ref, b2_ref,
                    o_ref, *, head, eps):
    """One grid step == one full pre-LN encoder block applied to resident z."""
    l = pl.program_id(0)
    B, N, D = o_ref.shape
    dh = D // head
    scale = 1.0 / float(dh) ** 0.5

    # Layer 0: pull the embedded tokens (single constant-index DMA) into the
    # resident output block; every later layer updates o_ref in place in VMEM.
    @pl.when(l == 0)
    def _():
        o_ref[...] = z_ref[...]

    ln1g, ln1b = ln1g_ref[0], ln1b_ref[0]
    ln2g, ln2b = ln2g_ref[0], ln2b_ref[0]
    wqkv, wo, bo = wqkv_ref[0], wo_ref[0], bo_ref[0]
    w1, b1, w2, b2 = w1_ref[0], b1_ref[0], w2_ref[0], b2_ref[0]

    for b in range(B):
        z = o_ref[b]                                           # [N, D] f32

        # ---- LN1 + fused QKV projection (bf16 MXU inputs, f32 accum) ----
        ln1 = _layernorm(z, ln1g, ln1b, eps)
        qkv = jnp.dot(ln1.astype(jnp.bfloat16), wqkv,
                      preferred_element_type=jnp.float32
                      ).astype(jnp.bfloat16)                   # [N, 3D] bf16

        # ---- multi-head softmax attention (bf16 dots, f32 softmax) ----
        heads = []
        for h in range(head):
            q = qkv[:, h * dh:(h + 1) * dh]
            k = qkv[:, D + h * dh:D + (h + 1) * dh]
            v = qkv[:, 2 * D + h * dh:2 * D + (h + 1) * dh]
            s = jax.lax.dot_general(q, k, (((1,), (1,)), ((), ())),
                                    preferred_element_type=jnp.float32) * scale
            s = s - jnp.max(s, axis=-1, keepdims=True)
            p = jnp.exp(s)
            p = p * pl.reciprocal(jnp.sum(p, axis=-1, keepdims=True),
                                  approx=True)
            heads.append(jnp.dot(p.astype(jnp.bfloat16), v,
                                 preferred_element_type=jnp.float32))
        attn = jnp.concatenate(heads, axis=-1).astype(jnp.bfloat16)  # [N, D]

        # ---- output projection + residual ----
        z1 = jnp.dot(attn, wo, preferred_element_type=jnp.float32) + bo + z

        # ---- LN2 + MLP (matmul -> GELU -> matmul) + residual ----
        ln2 = _layernorm(z1, ln2g, ln2b, eps)
        h1 = (jnp.dot(ln2.astype(jnp.bfloat16), w1,
                      preferred_element_type=jnp.float32) + b1)
        h1 = _gelu_tanh(h1)
        z2 = (jnp.dot(h1.astype(jnp.bfloat16), w2,
                      preferred_element_type=jnp.float32) + b2 + z1)

        o_ref[b] = z2


def _head_kernel(x_ref, g_ref, bln_ref, w_ref, b_ref, o_ref, *, eps):
    xn = _layernorm(x_ref[...], g_ref[...], bln_ref[...], eps)
    o_ref[...] = (jnp.dot(xn.astype(jnp.bfloat16), w_ref[...],
                          preferred_element_type=jnp.float32) + b_ref[...])


# ----------------------------- Pallas wrappers -----------------------------

def _row_tile(m, cap=512):
    """Pick a row tile: whole thing if small, else largest mult-of-8 divisor."""
    if m <= cap:
        return m
    for t in range(cap, 7, -8):
        if m % t == 0:
            return t
    return m


def pallas_patch_embed(patches, w, b):
    """patches:[M,K] bf16 @ w:[K,D] bf16 + b:[1,D] f32 -> [M,D] f32."""
    M, K = patches.shape
    D = w.shape[1]
    tm = _row_tile(M)
    return pl.pallas_call(
        _patch_embed_kernel,
        out_shape=jax.ShapeDtypeStruct((M, D), jnp.float32),
        grid=(M // tm,),
        in_specs=[pl.BlockSpec((tm, K), lambda i: (i, 0)),
                  pl.BlockSpec((K, D), lambda i: (0, 0)),
                  pl.BlockSpec((1, D), lambda i: (0, 0))],
        out_specs=pl.BlockSpec((tm, D), lambda i: (i, 0)),
        compiler_params=pltpu.CompilerParams(
            dimension_semantics=("parallel",),
            vmem_limit_bytes=_vmem_limit()),
    )(patches, w, b)


def pallas_encoder(z, enc, *, head, eps=1e-5):
    """All L encoder blocks in one pallas_call; grid=(L,), z resident in VMEM."""
    B, N, D = z.shape
    L = enc["wqkv"].shape[0]
    Hd = enc["w1"].shape[-1]

    def wspec(*shape):
        # Per-layer weight slab: block index l along the stacked layer axis so
        # the pipeline prefetches layer l+1 while layer l computes.
        return pl.BlockSpec((1,) + shape, lambda l: (l,) + (0,) * len(shape))

    kernel = functools.partial(_encoder_kernel, head=head, eps=eps)
    return pl.pallas_call(
        kernel,
        out_shape=jax.ShapeDtypeStruct((B, N, D), jnp.float32),
        grid=(L,),
        in_specs=[pl.BlockSpec((B, N, D), lambda l: (0, 0, 0)),   # z (once)
                  wspec(1, D), wspec(1, D),                       # ln1 g/b
                  wspec(D, 3 * D),                                # fused Wqkv
                  wspec(D, D), wspec(1, D),                       # Wo, bo
                  wspec(1, D), wspec(1, D),                       # ln2 g/b
                  wspec(D, Hd), wspec(1, Hd),                     # W1, b1
                  wspec(Hd, D), wspec(1, D)],                     # W2, b2
        out_specs=pl.BlockSpec((B, N, D), lambda l: (0, 0, 0)),   # resident
        compiler_params=pltpu.CompilerParams(
            dimension_semantics=("arbitrary",),
            vmem_limit_bytes=_vmem_limit()),
    )(z, enc["ln1_g"], enc["ln1_b"], enc["wqkv"], enc["wo"], enc["bo"],
      enc["ln2_g"], enc["ln2_b"], enc["w1"], enc["b1"], enc["w2"], enc["b2"])


def pallas_mlp_head(cls_tok, params, eps=1e-5):
    """Fused LayerNorm + Linear classification head on the CLS token."""
    B, D = cls_tok.shape
    C = params["head_w"].shape[1]
    return pl.pallas_call(
        functools.partial(_head_kernel, eps=eps),
        out_shape=jax.ShapeDtypeStruct((B, C), jnp.float32),
        grid=(1,),
        in_specs=[pl.BlockSpec((B, D), lambda i: (0, 0)),
                  pl.BlockSpec((1, D), lambda i: (0, 0)),
                  pl.BlockSpec((1, D), lambda i: (0, 0)),
                  pl.BlockSpec((D, C), lambda i: (0, 0)),
                  pl.BlockSpec((1, C), lambda i: (0, 0))],
        out_specs=pl.BlockSpec((B, C), lambda i: (0, 0)),
        compiler_params=pltpu.CompilerParams(
            dimension_semantics=("arbitrary",),
            vmem_limit_bytes=_vmem_limit()),
    )(cls_tok, params["head_ln_g"], params["head_ln_b"],
      params["head_w"], params["head_b"])


# ----------------------------- Parameters -----------------------------

def init_params(key, in_channels, image_size, emb_dim, num_patch_row,
                hidden_dim, head, num_blocks, num_classes):
    patch_size = image_size // num_patch_row
    num_patch = num_patch_row ** 2
    keys = jax.random.split(key, 6 + num_blocks)

    def normal(k, shape, scale=0.02):
        return (scale * jax.random.normal(k, shape)).astype(jnp.float32)

    # Conv2d(in_channels, emb_dim, kernel=stride=patch_size) == matmul over
    # flattened (c, ph, pw) patches.  Weight pre-reshaped/transposed + bf16.
    conv_w = normal(keys[0], (emb_dim, in_channels, patch_size, patch_size))
    params = {
        "patch_w": conv_w.reshape(emb_dim, -1).T.astype(jnp.bfloat16),
        "patch_b": normal(keys[1], (1, emb_dim)),
        "cls_token": normal(keys[2], (1, 1, emb_dim), scale=1.0),
        "pos_emb": normal(keys[3], (1, num_patch + 1, emb_dim), scale=1.0),
        "head_ln_g": jnp.ones((1, emb_dim), jnp.float32),
        "head_ln_b": jnp.zeros((1, emb_dim), jnp.float32),
    }
    hk = jax.random.split(keys[4], 2)
    params["head_w"] = normal(hk[0], (emb_dim, num_classes)).astype(jnp.bfloat16)
    params["head_b"] = normal(hk[1], (1, num_classes))

    # Per-layer weights stacked along a leading layer axis so the whole encoder
    # runs as one pallas_call with grid=(L,).
    names = ("ln1_g", "ln1_b", "wqkv", "wo", "bo",
             "ln2_g", "ln2_b", "w1", "b1", "w2", "b2")
    blks = {n: [] for n in names}
    for bi in range(num_blocks):
        bk = jax.random.split(keys[5 + bi], 9)
        wq = normal(bk[0], (emb_dim, emb_dim))   # Linear(..., bias=False)
        wk = normal(bk[1], (emb_dim, emb_dim))
        wv = normal(bk[2], (emb_dim, emb_dim))
        blks["ln1_g"].append(jnp.ones((1, emb_dim), jnp.float32))
        blks["ln1_b"].append(jnp.zeros((1, emb_dim), jnp.float32))
        blks["wqkv"].append(
            jnp.concatenate([wq, wk, wv], axis=1).astype(jnp.bfloat16))
        blks["wo"].append(normal(bk[3], (emb_dim, emb_dim)).astype(jnp.bfloat16))
        blks["bo"].append(normal(bk[4], (1, emb_dim)))
        blks["ln2_g"].append(jnp.ones((1, emb_dim), jnp.float32))
        blks["ln2_b"].append(jnp.zeros((1, emb_dim), jnp.float32))
        blks["w1"].append(normal(bk[5], (emb_dim, hidden_dim)).astype(jnp.bfloat16))
        blks["b1"].append(normal(bk[6], (1, hidden_dim)))
        blks["w2"].append(normal(bk[7], (hidden_dim, emb_dim)).astype(jnp.bfloat16))
        blks["b2"].append(normal(bk[8], (1, emb_dim)))
    params["enc"] = {n: jnp.stack(v, axis=0) for n, v in blks.items()}
    return params


# ----------------------------- Forward pass -----------------------------

def vit_forward(params, x, *, num_patch_row, head):
    B, C, H, W = x.shape
    P = H // num_patch_row
    Np = num_patch_row ** 2
    D = params["patch_b"].shape[-1]

    # ---- VitInputLayer: Conv2d(k=s=P) as patch-extract (layout-only, JAX)
    #      followed by a Pallas matmul + bias. Patches cast to bf16 to halve
    #      the memory-bound kernel's HBM->VMEM traffic.
    patches = x.reshape(B, C, num_patch_row, P, num_patch_row, P)
    patches = patches.transpose(0, 2, 4, 1, 3, 5).reshape(B * Np, C * P * P)
    patches = patches.astype(jnp.bfloat16)
    z = pallas_patch_embed(patches, params["patch_w"], params["patch_b"])
    z = z.reshape(B, Np, D)
    cls = jnp.broadcast_to(params["cls_token"], (B, 1, D))
    z = jnp.concatenate([cls, z], axis=1) + params["pos_emb"]    # [B, N, D]

    # ---- Encoder: ONE fused Pallas kernel for all blocks (z resident in VMEM)
    z = pallas_encoder(z, params["enc"], head=head)

    # ---- MLP head on the CLS token (fused LN + Linear)
    return pallas_mlp_head(z[:, 0], params)                      # [B, classes]


# ----------------------------- Main -----------------------------

if __name__ == "__main__":
    # Small configuration consistent with the module (emb_dim divisible by
    # head, image size divisible by num_patch_row).
    B, C, IMG = 2, 3, 16
    emb_dim, num_patch_row, head = 32, 2, 4
    hidden_dim, num_blocks, num_classes = 64, 2, 10

    key = jax.random.PRNGKey(0)
    pkey, xkey = jax.random.split(key)
    params = init_params(pkey, C, IMG, emb_dim, num_patch_row,
                         hidden_dim, head, num_blocks, num_classes)
    x = jax.random.normal(xkey, (B, C, IMG, IMG), dtype=jnp.float32)

    fwd = jax.jit(functools.partial(vit_forward,
                                    num_patch_row=num_patch_row, head=head))
    out = fwd(params, x)
    jax.block_until_ready(out)
    assert out.shape == (B, num_classes), out.shape
    print("KERNEL_OK")
</pallas_src>

<mosaic_0001>
module attributes {stable_mosaic.version = 11 : i64} {
  func.func @_patch_embed_kernel(%arg0: i32, %arg1: memref<8x192xbf16, #tpu.memory_space<vmem>>, %arg2: memref<192x32xbf16, #tpu.memory_space<vmem>>, %arg3: memref<1x32xf32, #tpu.memory_space<vmem>>, %arg4: memref<8x32xf32, #tpu.memory_space<vmem>>) attributes {dimension_semantics = [#tpu.dimension_semantics<parallel>], iteration_bounds = array<i64: 1>, scalar_prefetch = 0 : i64, scratch_operands = 0 : i64, tpu.core_type = #tpu.core_type<tc>, window_params = [{transform_indices = @transform_0, window_bounds = array<i64: 8, 192>}, {pipeline_mode = #tpu.pipeline_mode<synchronous>, transform_indices = @transform_1, window_bounds = array<i64: 192, 32>}, {pipeline_mode = #tpu.pipeline_mode<synchronous>, transform_indices = @transform_2, window_bounds = array<i64: 1, 32>}, {transform_indices = @transform_3, window_bounds = array<i64: 8, 32>}]} {
    %c0 = arith.constant 0 : index
    %c0_0 = arith.constant 0 : index
    %0 = vector.load %arg1[%c0, %c0_0] : memref<8x192xbf16, #tpu.memory_space<vmem>>, vector<8x192xbf16>
    %c0_1 = arith.constant 0 : index
    %c0_2 = arith.constant 0 : index
    %1 = vector.load %arg2[%c0_1, %c0_2] : memref<192x32xbf16, #tpu.memory_space<vmem>>, vector<192x32xbf16>
    %cst = arith.constant dense<0.000000e+00> : vector<8x32xf32>
    %2 = tpu.matmul %0, %1, %cst {dimension_numbers = #tpu.dot_dimension_numbers<[1], [0], [0], [1], [0, 0, 1, 1], [], []>} : vector<8x192xbf16>, vector<192x32xbf16>, vector<8x32xf32> -> vector<8x32xf32>
    %c0_3 = arith.constant 0 : index
    %c0_4 = arith.constant 0 : index
    %3 = vector.load %arg3[%c0_3, %c0_4] : memref<1x32xf32, #tpu.memory_space<vmem>>, vector<1x32xf32>
    %4 = vector.broadcast %3 : vector<1x32xf32> to vector<8x32xf32>
    %5 = arith.addf %2, %4 : vector<8x32xf32>
    %c0_5 = arith.constant 0 : index
    %c0_6 = arith.constant 0 : index
    %6 = vector.load %arg4[%c0_5, %c0_6] : memref<8x32xf32, #tpu.memory_space<vmem>>, vector<8x32xf32>
    tpu.vector_store %arg4[%c0_5, %c0_6], %5 {strides = array<i32>} : memref<8x32xf32, #tpu.memory_space<vmem>>, vector<8x32xf32>,
    return
  }
  func.func @transform_0(%arg0: i32) -> (i32, i32) {
    %c0_i32 = arith.constant 0 : i32
    %c0_i32_0 = arith.constant 0 : i32
    return %arg0, %c0_i32 : i32, i32
  }
  func.func @transform_1(%arg0: i32) -> (i32, i32) {
    %c0_i32 = arith.constant 0 : i32
    %c0_i32_0 = arith.constant 0 : i32
    %c0_i32_1 = arith.constant 0 : i32
    return %c0_i32, %c0_i32_0 : i32, i32
  }
  func.func @transform_2(%arg0: i32) -> (i32, i32) {
    %c0_i32 = arith.constant 0 : i32
    %c0_i32_0 = arith.constant 0 : i32
    %c0_i32_1 = arith.constant 0 : i32
    return %c0_i32, %c0_i32_0 : i32, i32
  }
  func.func @transform_3(%arg0: i32) -> (i32, i32) {
    %c0_i32 = arith.constant 0 : i32
    %c0_i32_0 = arith.constant 0 : i32
    return %arg0, %c0_i32 : i32, i32
  }
}

module attributes {stable_mosaic.version = 11 : i64} {
  func.func @_head_kernel(%arg0: i32, %arg1: memref<2x32xf32, #tpu.memory_space<vmem>>, %arg2: memref<1x32xf32, #tpu.memory_space<vmem>>, %arg3: memref<1x32xf32, #tpu.memory_space<vmem>>, %arg4: memref<32x10xbf16, #tpu.memory_space<vmem>>, %arg5: memref<1x10xf32, #tpu.memory_space<vmem>>, %arg6: memref<2x10xf32, #tpu.memory_space<vmem>>) attributes {dimension_semantics = [#tpu.dimension_semantics<arbitrary>], iteration_bounds = array<i64: 1>, scalar_prefetch = 0 : i64, scratch_operands = 0 : i64, tpu.core_type = #tpu.core_type<tc>, window_params = [{pipeline_mode = #tpu.pipeline_mode<synchronous>, transform_indices = @transform_0, window_bounds = array<i64: 2, 32>}, {pipeline_mode = #tpu.pipeline_mode<synchronous>, transform_indices = @transform_1, window_bounds = array<i64: 1, 32>}, {pipeline_mode = #tpu.pipeline_mode<synchronous>, transform_indices = @transform_2, window_bounds = array<i64: 1, 32>}, {pipeline_mode = #tpu.pipeline_mode<synchronous>, transform_indices = @transform_3, window_bounds = array<i64: 32, 10>}, {pipeline_mode = #tpu.pipeline_mode<synchronous>, transform_indices = @transform_4, window_bounds = array<i64: 1, 10>}, {pipeline_mode = #tpu.pipeline_mode<synchronous>, transform_indices = @transform_5, window_bounds = array<i64: 2, 10>}]} {
    %c0 = arith.constant 0 : index
    %c0_0 = arith.constant 0 : index
    %0 = vector.load %arg1[%c0, %c0_0] : memref<2x32xf32, #tpu.memory_space<vmem>>, vector<2x32xf32>
    %c0_1 = arith.constant 0 : index
    %c0_2 = arith.constant 0 : index
    %1 = vector.load %arg2[%c0_1, %c0_2] : memref<1x32xf32, #tpu.memory_space<vmem>>, vector<1x32xf32>
    %c0_3 = arith.constant 0 : index
    %c0_4 = arith.constant 0 : index
    %2 = vector.load %arg3[%c0_3, %c0_4] : memref<1x32xf32, #tpu.memory_space<vmem>>, vector<1x32xf32>
    %cst = arith.constant dense<0.000000e+00> : vector<2xf32>
    %3 = vector.multi_reduction <add>, %0, %cst [1] : vector<2x32xf32> to vector<2xf32>
    %4 = vector.shape_cast %3 : vector<2xf32> to vector<2x1xf32>
    %cst_5 = arith.constant 3.200000e+01 : f32
    %5 = vector.broadcast %cst_5 : f32 to vector<2x1xf32>
    %6 = arith.divf %4, %5 : vector<2x1xf32>
    %7 = vector.broadcast %6 : vector<2x1xf32> to vector<2x32xf32>
    %8 = arith.subf %0, %7 : vector<2x32xf32>
    %9 = arith.mulf %8, %8 : vector<2x32xf32>
    %cst_6 = arith.constant dense<0.000000e+00> : vector<2xf32>
    %10 = vector.multi_reduction <add>, %9, %cst_6 [1] : vector<2x32xf32> to vector<2xf32>
    %11 = vector.shape_cast %10 : vector<2xf32> to vector<2x1xf32>
    %cst_7 = arith.constant 3.200000e+01 : f32
    %12 = vector.broadcast %cst_7 : f32 to vector<2x1xf32>
    %13 = arith.divf %11, %12 : vector<2x1xf32>
    %cst_8 = arith.constant 9.99999974E-6 : f32
    %14 = vector.broadcast %cst_8 : f32 to vector<2x1xf32>
    %15 = arith.addf %13, %14 : vector<2x1xf32>
    %16 = math.rsqrt %15 : vector<2x1xf32>
    %17 = vector.broadcast %16 : vector<2x1xf32> to vector<2x32xf32>
    %18 = arith.mulf %8, %17 : vector<2x32xf32>
    %19 = vector.broadcast %1 : vector<1x32xf32> to vector<2x32xf32>
    %20 = arith.mulf %18, %19 : vector<2x32xf32>
    %21 = vector.broadcast %2 : vector<1x32xf32> to vector<2x32xf32>
    %22 = arith.addf %20, %21 : vector<2x32xf32>
    %23 = arith.truncf %22 : vector<2x32xf32> to vector<2x32xbf16>
    %c0_9 = arith.constant 0 : index
    %c0_10 = arith.constant 0 : index
    %24 = vector.load %arg4[%c0_9, %c0_10] : memref<32x10xbf16, #tpu.memory_space<vmem>>, vector<32x10xbf16>
    %cst_11 = arith.constant dense<0.000000e+00> : vector<2x10xf32>
    %25 = tpu.matmul %23, %24, %cst_11 {dimension_numbers = #tpu.dot_dimension_numbers<[1], [0], [0], [1], [0, 0, 1, 1], [], []>} : vector<2x32xbf16>, vector<32x10xbf16>, vector<2x10xf32> -> vector<2x10xf32>
    %c0_12 = arith.constant 0 : index
    %c0_13 = arith.constant 0 : index
    %26 = vector.load %arg5[%c0_12, %c0_13] : memref<1x10xf32, #tpu.memory_space<vmem>>, vector<1x10xf32>
    %27 = vector.broadcast %26 : vector<1x10xf32> to vector<2x10xf32>
    %28 = arith.addf %25, %27 : vector<2x10xf32>
    %c0_14 = arith.constant 0 : index
    %c0_15 = arith.constant 0 : index
    %29 = vector.load %arg6[%c0_14, %c0_15] : memref<2x10xf32, #tpu.memory_space<vmem>>, vector<2x10xf32>
    tpu.vector_store %arg6[%c0_14, %c0_15], %28 {strides = array<i32>} : memref<2x10xf32, #tpu.memory_space<vmem>>, vector<2x10xf32>,
    return
  }
  func.func @transform_0(%arg0: i32) -> (i32, i32) {
    %c0_i32 = arith.constant 0 : i32
    %c0_i32_0 = arith.constant 0 : i32
    %c0_i32_1 = arith.constant 0 : i32
    return %c0_i32, %c0_i32_0 : i32, i32
  }
  func.func @transform_1(%arg0: i32) -> (i32, i32) {
    %c0_i32 = arith.constant 0 : i32
    %c0_i32_0 = arith.constant 0 : i32
    %c0_i32_1 = arith.constant 0 : i32
    return %c0_i32, %c0_i32_0 : i32, i32
  }
  func.func @transform_2(%arg0: i32) -> (i32, i32) {
    %c0_i32 = arith.constant 0 : i32
    %c0_i32_0 = arith.constant 0 : i32
    %c0_i32_1 = arith.constant 0 : i32
    return %c0_i32, %c0_i32_0 : i32, i32
  }
  func.func @transform_3(%arg0: i32) -> (i32, i32) {
    %c0_i32 = arith.constant 0 : i32
    %c0_i32_0 = arith.constant 0 : i32
    %c0_i32_1 = arith.constant 0 : i32
    return %c0_i32, %c0_i32_0 : i32, i32
  }
  func.func @transform_4(%arg0: i32) -> (i32, i32) {
    %c0_i32 = arith.constant 0 : i32
    %c0_i32_0 = arith.constant 0 : i32
    %c0_i32_1 = arith.constant 0 : i32
    return %c0_i32, %c0_i32_0 : i32, i32
  }
  func.func @transform_5(%arg0: i32) -> (i32, i32) {
    %c0_i32 = arith.constant 0 : i32
    %c0_i32_0 = arith.constant 0 : i32
    %c0_i32_1 = arith.constant 0 : i32
    return %c0_i32, %c0_i32_0 : i32, i32
  }
}

module attributes {stable_mosaic.version = 11 : i64} {
  func.func @_encoder_kernel(%arg0: i32, %arg1: memref<2x5x32xf32, #tpu.memory_space<vmem>>, %arg2: memref<1x1x32xf32, #tpu.memory_space<vmem>>, %arg3: memref<1x1x32xf32, #tpu.memory_space<vmem>>, %arg4: memref<1x32x96xbf16, #tpu.memory_space<vmem>>, %arg5: memref<1x32x32xbf16, #tpu.memory_space<vmem>>, %arg6: memref<1x1x32xf32, #tpu.memory_space<vmem>>, %arg7: memref<1x1x32xf32, #tpu.memory_space<vmem>>, %arg8: memref<1x1x32xf32, #tpu.memory_space<vmem>>, %arg9: memref<1x32x64xbf16, #tpu.memory_space<vmem>>, %arg10: memref<1x1x64xf32, #tpu.memory_space<vmem>>, %arg11: memref<1x64x32xbf16, #tpu.memory_space<vmem>>, %arg12: memref<1x1x32xf32, #tpu.memory_space<vmem>>, %arg13: memref<2x5x32xf32, #tpu.memory_space<vmem>>) attributes {dimension_semantics = [#tpu.dimension_semantics<arbitrary>], iteration_bounds = array<i64: 2>, scalar_prefetch = 0 : i64, scratch_operands = 0 : i64, tpu.core_type = #tpu.core_type<tc>, window_params = [{pipeline_mode = #tpu.pipeline_mode<synchronous>, transform_indices = @transform_0, window_bounds = array<i64: 2, 5, 32>}, {transform_indices = @transform_1, window_bounds = array<i64: 1, 1, 32>}, {transform_indices = @transform_2, window_bounds = array<i64: 1, 1, 32>}, {transform_indices = @transform_3, window_bounds = array<i64: 1, 32, 96>}, {transform_indices = @transform_4, window_bounds = array<i64: 1, 32, 32>}, {transform_indices = @transform_5, window_bounds = array<i64: 1, 1, 32>}, {transform_indices = @transform_6, window_bounds = array<i64: 1, 1, 32>}, {transform_indices = @transform_7, window_bounds = array<i64: 1, 1, 32>}, {transform_indices = @transform_8, window_bounds = array<i64: 1, 32, 64>}, {transform_indices = @transform_9, window_bounds = array<i64: 1, 1, 64>}, {transform_indices = @transform_10, window_bounds = array<i64: 1, 64, 32>}, {transform_indices = @transform_11, window_bounds = array<i64: 1, 1, 32>}, {pipeline_mode = #tpu.pipeline_mode<synchronous>, transform_indices = @transform_12, window_bounds = array<i64: 2, 5, 32>}]} {
    %c0_i32 = arith.constant 0 : i32
    %0 = arith.cmpi eq, %arg0, %c0_i32 : i32
    %1 = arith.extui %0 : i1 to i32
    %c0_i32_0 = arith.constant 0 : i32
    %2 = arith.cmpi ne, %1, %c0_i32_0 : i32
    scf.if %2 {
      %c0_119 = arith.constant 0 : index
      %c0_120 = arith.constant 0 : index
      %c0_121 = arith.constant 0 : index
      %321 = vector.load %arg1[%c0_119, %c0_120, %c0_121] : memref<2x5x32xf32, #tpu.memory_space<vmem>>, vector<2x5x32xf32>
      %c0_122 = arith.constant 0 : index
      %c0_123 = arith.constant 0 : index
      %c0_124 = arith.constant 0 : index
      %322 = vector.load %arg13[%c0_122, %c0_123, %c0_124] : memref<2x5x32xf32, #tpu.memory_space<vmem>>, vector<2x5x32xf32>
      tpu.vector_store %arg13[%c0_122, %c0_123, %c0_124], %321 {strides = array<i32>} : memref<2x5x32xf32, #tpu.memory_space<vmem>>, vector<2x5x32xf32>,
    } else {
    }
    %c0 = arith.constant 0 : index
    %c0_1 = arith.constant 0 : index
    %c0_2 = arith.constant 0 : index
    %3 = vector.load %arg2[%c0, %c0_1, %c0_2] : memref<1x1x32xf32, #tpu.memory_space<vmem>>, vector<1x1x32xf32>
    %4 = vector.shape_cast %3 : vector<1x1x32xf32> to vector<1x32xf32>
    %c0_3 = arith.constant 0 : index
    %c0_4 = arith.constant 0 : index
    %c0_5 = arith.constant 0 : index
    %5 = vector.load %arg3[%c0_3, %c0_4, %c0_5] : memref<1x1x32xf32, #tpu.memory_space<vmem>>, vector<1x1x32xf32>
    %6 = vector.shape_cast %5 : vector<1x1x32xf32> to vector<1x32xf32>
    %c0_6 = arith.constant 0 : index
    %c0_7 = arith.constant 0 : index
    %c0_8 = arith.constant 0 : index
    %7 = vector.load %arg7[%c0_6, %c0_7, %c0_8] : memref<1x1x32xf32, #tpu.memory_space<vmem>>, vector<1x1x32xf32>
    %8 = vector.shape_cast %7 : vector<1x1x32xf32> to vector<1x32xf32>
    %c0_9 = arith.constant 0 : index
    %c0_10 = arith.constant 0 : index
    %c0_11 = arith.constant 0 : index
    %9 = vector.load %arg8[%c0_9, %c0_10, %c0_11] : memref<1x1x32xf32, #tpu.memory_space<vmem>>, vector<1x1x32xf32>
    %10 = vector.shape_cast %9 : vector<1x1x32xf32> to vector<1x32xf32>
    %c0_12 = arith.constant 0 : index
    %c0_13 = arith.constant 0 : index
    %c0_14 = arith.constant 0 : index
    %11 = vector.load %arg4[%c0_12, %c0_13, %c0_14] : memref<1x32x96xbf16, #tpu.memory_space<vmem>>, vector<1x32x96xbf16>
    %12 = vector.shape_cast %11 : vector<1x32x96xbf16> to vector<32x96xbf16>
    %c0_15 = arith.constant 0 : index
    %c0_16 = arith.constant 0 : index
    %c0_17 = arith.constant 0 : index
    %13 = vector.load %arg5[%c0_15, %c0_16, %c0_17] : memref<1x32x32xbf16, #tpu.memory_space<vmem>>, vector<1x32x32xbf16>
    %14 = vector.shape_cast %13 : vector<1x32x32xbf16> to vector<32x32xbf16>
    %c0_18 = arith.constant 0 : index
    %c0_19 = arith.constant 0 : index
    %c0_20 = arith.constant 0 : index
    %15 = vector.load %arg6[%c0_18, %c0_19, %c0_20] : memref<1x1x32xf32, #tpu.memory_space<vmem>>, vector<1x1x32xf32>
    %16 = vector.shape_cast %15 : vector<1x1x32xf32> to vector<1x32xf32>
    %c0_21 = arith.constant 0 : index
    %c0_22 = arith.constant 0 : index
    %c0_23 = arith.constant 0 : index
    %17 = vector.load %arg9[%c0_21, %c0_22, %c0_23] : memref<1x32x64xbf16, #tpu.memory_space<vmem>>, vector<1x32x64xbf16>
    %18 = vector.shape_cast %17 : vector<1x32x64xbf16> to vector<32x64xbf16>
    %c0_24 = arith.constant 0 : index
    %c0_25 = arith.constant 0 : index
    %c0_26 = arith.constant 0 : index
    %19 = vector.load %arg10[%c0_24, %c0_25, %c0_26] : memref<1x1x64xf32, #tpu.memory_space<vmem>>, vector<1x1x64xf32>
    %20 = vector.shape_cast %19 : vector<1x1x64xf32> to vector<1x64xf32>
    %c0_27 = arith.constant 0 : index
    %c0_28 = arith.constant 0 : index
    %c0_29 = arith.constant 0 : index
    %21 = vector.load %arg11[%c0_27, %c0_28, %c0_29] : memref<1x64x32xbf16, #tpu.memory_space<vmem>>, vector<1x64x32xbf16>
    %22 = vector.shape_cast %21 : vector<1x64x32xbf16> to vector<64x32xbf16>
    %c0_30 = arith.constant 0 : index
    %c0_31 = arith.constant 0 : index
    %c0_32 = arith.constant 0 : index
    %23 = vector.load %arg12[%c0_30, %c0_31, %c0_32] : memref<1x1x32xf32, #tpu.memory_space<vmem>>, vector<1x1x32xf32>
    %24 = vector.shape_cast %23 : vector<1x1x32xf32> to vector<1x32xf32>
    %c0_33 = arith.constant 0 : index
    %c0_34 = arith.constant 0 : index
    %c0_35 = arith.constant 0 : index
    %25 = vector.load %arg13[%c0_33, %c0_34, %c0_35] : memref<2x5x32xf32, #tpu.memory_space<vmem>>, vector<1x5x32xf32>
    %26 = vector.shape_cast %25 : vector<1x5x32xf32> to vector<5x32xf32>
    %cst = arith.constant dense<0.000000e+00> : vector<5xf32>
    %27 = vector.multi_reduction <add>, %26, %cst [1] : vector<5x32xf32> to vector<5xf32>
    %28 = vector.shape_cast %27 : vector<5xf32> to vector<5x1xf32>
    %cst_36 = arith.constant 3.200000e+01 : f32
    %29 = vector.broadcast %cst_36 : f32 to vector<5x1xf32>
    %30 = arith.divf %28, %29 : vector<5x1xf32>
    %31 = vector.broadcast %30 : vector<5x1xf32> to vector<5x32xf32>
    %32 = arith.subf %26, %31 : vector<5x32xf32>
    %33 = arith.mulf %32, %32 : vector<5x32xf32>
    %cst_37 = arith.constant dense<0.000000e+00> : vector<5xf32>
    %34 = vector.multi_reduction <add>, %33, %cst_37 [1] : vector<5x32xf32> to vector<5xf32>
    %35 = vector.shape_cast %34 : vector<5xf32> to vector<5x1xf32>
    %cst_38 = arith.constant 3.200000e+01 : f32
    %36 = vector.broadcast %cst_38 : f32 to vector<5x1xf32>
    %37 = arith.divf %35, %36 : vector<5x1xf32>
    %cst_39 = arith.constant 9.99999974E-6 : f32
    %38 = vector.broadcast %cst_39 : f32 to vector<5x1xf32>
    %39 = arith.addf %37, %38 : vector<5x1xf32>
    %40 = math.rsqrt %39 : vector<5x1xf32>
    %41 = vector.broadcast %40 : vector<5x1xf32> to vector<5x32xf32>
    %42 = arith.mulf %32, %41 : vector<5x32xf32>
    %43 = vector.broadcast %4 : vector<1x32xf32> to vector<5x32xf32>
    %44 = arith.mulf %42, %43 : vector<5x32xf32>
    %45 = vector.broadcast %6 : vector<1x32xf32> to vector<5x32xf32>
    %46 = arith.addf %44, %45 : vector<5x32xf32>
    %47 = arith.truncf %46 : vector<5x32xf32> to vector<5x32xbf16>
    %cst_40 = arith.constant dense<0.000000e+00> : vector<5x96xf32>
    %48 = tpu.matmul %47, %12, %cst_40 {dimension_numbers = #tpu.dot_dimension_numbers<[1], [0], [0], [1], [0, 0, 1, 1], [], []>} : vector<5x32xbf16>, vector<32x96xbf16>, vector<5x96xf32> -> vector<5x96xf32>
    %49 = arith.truncf %48 : vector<5x96xf32> to vector<5x96xbf16>
    %50 = vector.extract_strided_slice %49 {offsets = [0, 0], sizes = [5, 8], strides = [1, 1]} : vector<5x96xbf16> to vector<5x8xbf16>
    %51 = vector.extract_strided_slice %49 {offsets = [0, 32], sizes = [5, 8], strides = [1, 1]} : vector<5x96xbf16> to vector<5x8xbf16>
    %52 = vector.extract_strided_slice %49 {offsets = [0, 64], sizes = [5, 8], strides = [1, 1]} : vector<5x96xbf16> to vector<5x8xbf16>
    %cst_41 = arith.constant dense<0.000000e+00> : vector<5x5xf32>
    %53 = tpu.matmul %50, %51, %cst_41 {dimension_numbers = #tpu.dot_dimension_numbers<[1], [1], [0], [0], [0, 0, 1, 0], [], []>} : vector<5x8xbf16>, vector<5x8xbf16>, vector<5x5xf32> -> vector<5x5xf32>
    %cst_42 = arith.constant 0.353553385 : f32
    %54 = vector.broadcast %cst_42 : f32 to vector<5x5xf32>
    %55 = arith.mulf %53, %54 : vector<5x5xf32>
    %cst_43 = arith.constant dense<0xFF800000> : vector<5xf32>
    %56 = vector.multi_reduction <maximumf>, %55, %cst_43 [1] : vector<5x5xf32> to vector<5xf32>
    %57 = vector.shape_cast %56 : vector<5xf32> to vector<5x1xf32>
    %58 = vector.broadcast %57 : vector<5x1xf32> to vector<5x5xf32>
    %59 = arith.subf %55, %58 : vector<5x5xf32>
    %60 = math.exp %59 : vector<5x5xf32>
    %cst_44 = arith.constant dense<0.000000e+00> : vector<5xf32>
    %61 = vector.multi_reduction <add>, %60, %cst_44 [1] : vector<5x5xf32> to vector<5xf32>
    %62 = vector.shape_cast %61 : vector<5xf32> to vector<5x1xf32>
    %63 = tpu.reciprocal %62 {approx = true} : vector<5x1xf32> -> vector<5x1xf32>
    %64 = vector.broadcast %63 : vector<5x1xf32> to vector<5x5xf32>
    %65 = arith.mulf %60, %64 : vector<5x5xf32>
    %66 = arith.truncf %65 : vector<5x5xf32> to vector<5x5xbf16>
    %cst_45 = arith.constant dense<0.000000e+00> : vector<5x8xf32>
    %67 = tpu.matmul %66, %52, %cst_45 {dimension_numbers = #tpu.dot_dimension_numbers<[1], [0], [0], [1], [0, 0, 1, 1], [], []>} : vector<5x5xbf16>, vector<5x8xbf16>, vector<5x8xf32> -> vector<5x8xf32>
    %68 = vector.extract_strided_slice %49 {offsets = [0, 8], sizes = [5, 8], strides = [1, 1]} : vector<5x96xbf16> to vector<5x8xbf16>
    %69 = vector.extract_strided_slice %49 {offsets = [0, 40], sizes = [5, 8], strides = [1, 1]} : vector<5x96xbf16> to vector<5x8xbf16>
    %70 = vector.extract_strided_slice %49 {offsets = [0, 72], sizes = [5, 8], strides = [1, 1]} : vector<5x96xbf16> to vector<5x8xbf16>
    %cst_46 = arith.constant dense<0.000000e+00> : vector<5x5xf32>
    %71 = tpu.matmul %68, %69, %cst_46 {dimension_numbers = #tpu.dot_dimension_numbers<[1], [1], [0], [0], [0, 0, 1, 0], [], []>} : vector<5x8xbf16>, vector<5x8xbf16>, vector<5x5xf32> -> vector<5x5xf32>
    %cst_47 = arith.constant 0.353553385 : f32
    %72 = vector.broadcast %cst_47 : f32 to vector<5x5xf32>
    %73 = arith.mulf %71, %72 : vector<5x5xf32>
    %cst_48 = arith.constant dense<0xFF800000> : vector<5xf32>
    %74 = vector.multi_reduction <maximumf>, %73, %cst_48 [1] : vector<5x5xf32> to vector<5xf32>
    %75 = vector.shape_cast %74 : vector<5xf32> to vector<5x1xf32>
    %76 = vector.broadcast %75 : vector<5x1xf32> to vector<5x5xf32>
    %77 = arith.subf %73, %76 : vector<5x5xf32>
    %78 = math.exp %77 : vector<5x5xf32>
    %cst_49 = arith.constant dense<0.000000e+00> : vector<5xf32>
    %79 = vector.multi_reduction <add>, %78, %cst_49 [1] : vector<5x5xf32> to vector<5xf32>
    %80 = vector.shape_cast %79 : vector<5xf32> to vector<5x1xf32>
    %81 = tpu.reciprocal %80 {approx = true} : vector<5x1xf32> -> vector<5x1xf32>
    %82 = vector.broadcast %81 : vector<5x1xf32> to vector<5x5xf32>
    %83 = arith.mulf %78, %82 : vector<5x5xf32>
    %84 = arith.truncf %83 : vector<5x5xf32> to vector<5x5xbf16>
    %cst_50 = arith.constant dense<0.000000e+00> : vector<5x8xf32>
    %85 = tpu.matmul %84, %70, %cst_50 {dimension_numbers = #tpu.dot_dimension_numbers<[1], [0], [0], [1], [0, 0, 1, 1], [], []>} : vector<5x5xbf16>, vector<5x8xbf16>, vector<5x8xf32> -> vector<5x8xf32>
    %86 = vector.extract_strided_slice %49 {offsets = [0, 16], sizes = [5, 8], strides = [1, 1]} : vector<5x96xbf16> to vector<5x8xbf16>
    %87 = vector.extract_strided_slice %49 {offsets = [0, 48], sizes = [5, 8], strides = [1, 1]} : vector<5x96xbf16> to vector<5x8xbf16>
    %88 = vector.extract_strided_slice %49 {offsets = [0, 80], sizes = [5, 8], strides = [1, 1]} : vector<5x96xbf16> to vector<5x8xbf16>
    %cst_51 = arith.constant dense<0.000000e+00> : vector<5x5xf32>
    %89 = tpu.matmul %86, %87, %cst_51 {dimension_numbers = #tpu.dot_dimension_numbers<[1], [1], [0], [0], [0, 0, 1, 0], [], []>} : vector<5x8xbf16>, vector<5x8xbf16>, vector<5x5xf32> -> vector<5x5xf32>
    %cst_52 = arith.constant 0.353553385 : f32
    %90 = vector.broadcast %cst_52 : f32 to vector<5x5xf32>
    %91 = arith.mulf %89, %90 : vector<5x5xf32>
    %cst_53 = arith.constant dense<0xFF800000> : vector<5xf32>
    %92 = vector.multi_reduction <maximumf>, %91, %cst_53 [1] : vector<5x5xf32> to vector<5xf32>
    %93 = vector.shape_cast %92 : vector<5xf32> to vector<5x1xf32>
    %94 = vector.broadcast %93 : vector<5x1xf32> to vector<5x5xf32>
    %95 = arith.subf %91, %94 : vector<5x5xf32>
    %96 = math.exp %95 : vector<5x5xf32>
    %cst_54 = arith.constant dense<0.000000e+00> : vector<5xf32>
    %97 = vector.multi_reduction <add>, %96, %cst_54 [1] : vector<5x5xf32> to vector<5xf32>
    %98 = vector.shape_cast %97 : vector<5xf32> to vector<5x1xf32>
    %99 = tpu.reciprocal %98 {approx = true} : vector<5x1xf32> -> vector<5x1xf32>
    %100 = vector.broadcast %99 : vector<5x1xf32> to vector<5x5xf32>
    %101 = arith.mulf %96, %100 : vector<5x5xf32>
    %102 = arith.truncf %101 : vector<5x5xf32> to vector<5x5xbf16>
    %cst_55 = arith.constant dense<0.000000e+00> : vector<5x8xf32>
    %103 = tpu.matmul %102, %88, %cst_55 {dimension_numbers = #tpu.dot_dimension_numbers<[1], [0], [0], [1], [0, 0, 1, 1], [], []>} : vector<5x5xbf16>, vector<5x8xbf16>, vector<5x8xf32> -> vector<5x8xf32>
    %104 = vector.extract_strided_slice %49 {offsets = [0, 24], sizes = [5, 8], strides = [1, 1]} : vector<5x96xbf16> to vector<5x8xbf16>
    %105 = vector.extract_strided_slice %49 {offsets = [0, 56], sizes = [5, 8], strides = [1, 1]} : vector<5x96xbf16> to vector<5x8xbf16>
    %106 = vector.extract_strided_slice %49 {offsets = [0, 88], sizes = [5, 8], strides = [1, 1]} : vector<5x96xbf16> to vector<5x8xbf16>
    %cst_56 = arith.constant dense<0.000000e+00> : vector<5x5xf32>
    %107 = tpu.matmul %104, %105, %cst_56 {dimension_numbers = #tpu.dot_dimension_numbers<[1], [1], [0], [0], [0, 0, 1, 0], [], []>} : vector<5x8xbf16>, vector<5x8xbf16>, vector<5x5xf32> -> vector<5x5xf32>
    %cst_57 = arith.constant 0.353553385 : f32
    %108 = vector.broadcast %cst_57 : f32 to vector<5x5xf32>
    %109 = arith.mulf %107, %108 : vector<5x5xf32>
    %cst_58 = arith.constant dense<0xFF800000> : vector<5xf32>
    %110 = vector.multi_reduction <maximumf>, %109, %cst_58 [1] : vector<5x5xf32> to vector<5xf32>
    %111 = vector.shape_cast %110 : vector<5xf32> to vector<5x1xf32>
    %112 = vector.broadcast %111 : vector<5x1xf32> to vector<5x5xf32>
    %113 = arith.subf %109, %112 : vector<5x5xf32>
    %114 = math.exp %113 : vector<5x5xf32>
    %cst_59 = arith.constant dense<0.000000e+00> : vector<5xf32>
    %115 = vector.multi_reduction <add>, %114, %cst_59 [1] : vector<5x5xf32> to vector<5xf32>
    %116 = vector.shape_cast %115 : vector<5xf32> to vector<5x1xf32>
    %117 = tpu.reciprocal %116 {approx = true} : vector<5x1xf32> -> vector<5x1xf32>
    %118 = vector.broadcast %117 : vector<5x1xf32> to vector<5x5xf32>
    %119 = arith.mulf %114, %118 : vector<5x5xf32>
    %120 = arith.truncf %119 : vector<5x5xf32> to vector<5x5xbf16>
    %cst_60 = arith.constant dense<0.000000e+00> : vector<5x8xf32>
    %121 = tpu.matmul %120, %106, %cst_60 {dimension_numbers = #tpu.dot_dimension_numbers<[1], [0], [0], [1], [0, 0, 1, 1], [], []>} : vector<5x5xbf16>, vector<5x8xbf16>, vector<5x8xf32> -> vector<5x8xf32>
    %122 = tpu.concatenate %67, %85, %103, %121 in 1 : vector<5x8xf32>, vector<5x8xf32>, vector<5x8xf32>, vector<5x8xf32> -> vector<5x32xf32>
    %123 = arith.truncf %122 : vector<5x32xf32> to vector<5x32xbf16>
    %cst_61 = arith.constant dense<0.000000e+00> : vector<5x32xf32>
    %124 = tpu.matmul %123, %14, %cst_61 {dimension_numbers = #tpu.dot_dimension_numbers<[1], [0], [0], [1], [0, 0, 1, 1], [], []>} : vector<5x32xbf16>, vector<32x32xbf16>, vector<5x32xf32> -> vector<5x32xf32>
    %125 = vector.broadcast %16 : vector<1x32xf32> to vector<5x32xf32>
    %126 = arith.addf %124, %125 : vector<5x32xf32>
    %127 = arith.addf %126, %26 : vector<5x32xf32>
    %cst_62 = arith.constant dense<0.000000e+00> : vector<5xf32>
    %128 = vector.multi_reduction <add>, %127, %cst_62 [1] : vector<5x32xf32> to vector<5xf32>
    %129 = vector.shape_cast %128 : vector<5xf32> to vector<5x1xf32>
    %cst_63 = arith.constant 3.200000e+01 : f32
    %130 = vector.broadcast %cst_63 : f32 to vector<5x1xf32>
    %131 = arith.divf %129, %130 : vector<5x1xf32>
    %132 = vector.broadcast %131 : vector<5x1xf32> to vector<5x32xf32>
    %133 = arith.subf %127, %132 : vector<5x32xf32>
    %134 = arith.mulf %133, %133 : vector<5x32xf32>
    %cst_64 = arith.constant dense<0.000000e+00> : vector<5xf32>
    %135 = vector.multi_reduction <add>, %134, %cst_64 [1] : vector<5x32xf32> to vector<5xf32>
    %136 = vector.shape_cast %135 : vector<5xf32> to vector<5x1xf32>
    %cst_65 = arith.constant 3.200000e+01 : f32
    %137 = vector.broadcast %cst_65 : f32 to vector<5x1xf32>
    %138 = arith.divf %136, %137 : vector<5x1xf32>
    %cst_66 = arith.constant 9.99999974E-6 : f32
    %139 = vector.broadcast %cst_66 : f32 to vector<5x1xf32>
    %140 = arith.addf %138, %139 : vector<5x1xf32>
    %141 = math.rsqrt %140 : vector<5x1xf32>
    %142 = vector.broadcast %141 : vector<5x1xf32> to vector<5x32xf32>
    %143 = arith.mulf %133, %142 : vector<5x32xf32>
    %144 = vector.broadcast %8 : vector<1x32xf32> to vector<5x32xf32>
    %145 = arith.mulf %143, %144 : vector<5x32xf32>
    %146 = vector.broadcast %10 : vector<1x32xf32> to vector<5x32xf32>
    %147 = arith.addf %145, %146 : vector<5x32xf32>
    %148 = arith.truncf %147 : vector<5x32xf32> to vector<5x32xbf16>
    %cst_67 = arith.constant dense<0.000000e+00> : vector<5x64xf32>
    %149 = tpu.matmul %148, %18, %cst_67 {dimension_numbers = #tpu.dot_dimension_numbers<[1], [0], [0], [1], [0, 0, 1, 1], [], []>} : vector<5x32xbf16>, vector<32x64xbf16>, vector<5x64xf32> -> vector<5x64xf32>
    %150 = vector.broadcast %20 : vector<1x64xf32> to vector<5x64xf32>
    %151 = arith.addf %149, %150 : vector<5x64xf32>
    %cst_68 = arith.constant 5.000000e-01 : f32
    %152 = vector.broadcast %cst_68 : f32 to vector<5x64xf32>
    %153 = arith.mulf %152, %151 : vector<5x64xf32>
    %cst_69 = arith.constant 4.471500e-02 : f32
    %154 = vector.broadcast %cst_69 : f32 to vector<5x64xf32>
    %155 = arith.mulf %154, %151 : vector<5x64xf32>
    %156 = arith.mulf %155, %151 : vector<5x64xf32>
    %157 = arith.mulf %156, %151 : vector<5x64xf32>
    %158 = arith.addf %151, %157 : vector<5x64xf32>
    %cst_70 = arith.constant 0.797884583 : f32
    %159 = vector.broadcast %cst_70 : f32 to vector<5x64xf32>
    %160 = arith.mulf %159, %158 : vector<5x64xf32>
    %161 = math.tanh %160 : vector<5x64xf32>
    %cst_71 = arith.constant 1.000000e+00 : f32
    %162 = vector.broadcast %cst_71 : f32 to vector<5x64xf32>
    %163 = arith.addf %162, %161 : vector<5x64xf32>
    %164 = arith.mulf %153, %163 : vector<5x64xf32>
    %165 = arith.truncf %164 : vector<5x64xf32> to vector<5x64xbf16>
    %cst_72 = arith.constant dense<0.000000e+00> : vector<5x32xf32>
    %166 = tpu.matmul %165, %22, %cst_72 {dimension_numbers = #tpu.dot_dimension_numbers<[1], [0], [0], [1], [0, 0, 1, 1], [], []>} : vector<5x64xbf16>, vector<64x32xbf16>, vector<5x32xf32> -> vector<5x32xf32>
    %167 = vector.broadcast %24 : vector<1x32xf32> to vector<5x32xf32>
    %168 = arith.addf %166, %167 : vector<5x32xf32>
    %169 = arith.addf %168, %127 : vector<5x32xf32>
    %c0_73 = arith.constant 0 : index
    %c0_74 = arith.constant 0 : index
    %c0_75 = arith.constant 0 : index
    %170 = vector.load %arg13[%c0_73, %c0_74, %c0_75] : memref<2x5x32xf32, #tpu.memory_space<vmem>>, vector<1x5x32xf32>
    %171 = vector.shape_cast %170 : vector<1x5x32xf32> to vector<5x32xf32>
    %172 = vector.shape_cast %169 : vector<5x32xf32> to vector<1x5x32xf32>
    tpu.vector_store %arg13[%c0_73, %c0_74, %c0_75], %172 {strides = array<i32>} : memref<2x5x32xf32, #tpu.memory_space<vmem>>, vector<1x5x32xf32>,
    %c1 = arith.constant 1 : index
    %c0_76 = arith.constant 0 : index
    %c0_77 = arith.constant 0 : index
    %173 = vector.load %arg13[%c1, %c0_76, %c0_77] : memref<2x5x32xf32, #tpu.memory_space<vmem>>, vector<1x5x32xf32>
    %174 = vector.shape_cast %173 : vector<1x5x32xf32> to vector<5x32xf32>
    %cst_78 = arith.constant dense<0.000000e+00> : vector<5xf32>
    %175 = vector.multi_reduction <add>, %174, %cst_78 [1] : vector<5x32xf32> to vector<5xf32>
    %176 = vector.shape_cast %175 : vector<5xf32> to vector<5x1xf32>
    %cst_79 = arith.constant 3.200000e+01 : f32
    %177 = vector.broadcast %cst_79 : f32 to vector<5x1xf32>
    %178 = arith.divf %176, %177 : vector<5x1xf32>
    %179 = vector.broadcast %178 : vector<5x1xf32> to vector<5x32xf32>
    %180 = arith.subf %174, %179 : vector<5x32xf32>
    %181 = arith.mulf %180, %180 : vector<5x32xf32>
    %cst_80 = arith.constant dense<0.000000e+00> : vector<5xf32>
    %182 = vector.multi_reduction <add>, %181, %cst_80 [1] : vector<5x32xf32> to vector<5xf32>
    %183 = vector.shape_cast %182 : vector<5xf32> to vector<5x1xf32>
    %cst_81 = arith.constant 3.200000e+01 : f32
    %184 = vector.broadcast %cst_81 : f32 to vector<5x1xf32>
    %185 = arith.divf %183, %184 : vector<5x1xf32>
    %cst_82 = arith.constant 9.99999974E-6 : f32
    %186 = vector.broadcast %cst_82 : f32 to vector<5x1xf32>
    %187 = arith.addf %185, %186 : vector<5x1xf32>
    %188 = math.rsqrt %187 : vector<5x1xf32>
    %189 = vector.broadcast %188 : vector<5x1xf32> to vector<5x32xf32>
    %190 = arith.mulf %180, %189 : vector<5x32xf32>
    %191 = vector.broadcast %4 : vector<1x32xf32> to vector<5x32xf32>
    %192 = arith.mulf %190, %191 : vector<5x32xf32>
    %193 = vector.broadcast %6 : vector<1x32xf32> to vector<5x32xf32>
    %194 = arith.addf %192, %193 : vector<5x32xf32>
    %195 = arith.truncf %194 : vector<5x32xf32> to vector<5x32xbf16>
    %cst_83 = arith.constant dense<0.000000e+00> : vector<5x96xf32>
    %196 = tpu.matmul %195, %12, %cst_83 {dimension_numbers = #tpu.dot_dimension_numbers<[1], [0], [0], [1], [0, 0, 1, 1], [], []>} : vector<5x32xbf16>, vector<32x96xbf16>, vector<5x96xf32> -> vector<5x96xf32>
    %197 = arith.truncf %196 : vector<5x96xf32> to vector<5x96xbf16>
    %198 = vector.extract_strided_slice %197 {offsets = [0, 0], sizes = [5, 8], strides = [1, 1]} : vector<5x96xbf16> to vector<5x8xbf16>
    %199 = vector.extract_strided_slice %197 {offsets = [0, 32], sizes = [5, 8], strides = [1, 1]} : vector<5x96xbf16> to vector<5x8xbf16>
    %200 = vector.extract_strided_slice %197 {offsets = [0, 64], sizes = [5, 8], strides = [1, 1]} : vector<5x96xbf16> to vector<5x8xbf16>
    %cst_84 = arith.constant dense<0.000000e+00> : vector<5x5xf32>
    %201 = tpu.matmul %198, %199, %cst_84 {dimension_numbers = #tpu.dot_dimension_numbers<[1], [1], [0], [0], [0, 0, 1, 0], [], []>} : vector<5x8xbf16>, vector<5x8xbf16>, vector<5x5xf32> -> vector<5x5xf32>
    %cst_85 = arith.constant 0.353553385 : f32
    %202 = vector.broadcast %cst_85 : f32 to vector<5x5xf32>
    %203 = arith.mulf %201, %202 : vector<5x5xf32>
    %cst_86 = arith.constant dense<0xFF800000> : vector<5xf32>
    %204 = vector.multi_reduction <maximumf>, %203, %cst_86 [1] : vector<5x5xf32> to vector<5xf32>
    %205 = vector.shape_cast %204 : vector<5xf32> to vector<5x1xf32>
    %206 = vector.broadcast %205 : vector<5x1xf32> to vector<5x5xf32>
    %207 = arith.subf %203, %206 : vector<5x5xf32>
    %208 = math.exp %207 : vector<5x5xf32>
    %cst_87 = arith.constant dense<0.000000e+00> : vector<5xf32>
    %209 = vector.multi_reduction <add>, %208, %cst_87 [1] : vector<5x5xf32> to vector<5xf32>
    %210 = vector.shape_cast %209 : vector<5xf32> to vector<5x1xf32>
    %211 = tpu.reciprocal %210 {approx = true} : vector<5x1xf32> -> vector<5x1xf32>
    %212 = vector.broadcast %211 : vector<5x1xf32> to vector<5x5xf32>
    %213 = arith.mulf %208, %212 : vector<5x5xf32>
    %214 = arith.truncf %213 : vector<5x5xf32> to vector<5x5xbf16>
    %cst_88 = arith.constant dense<0.000000e+00> : vector<5x8xf32>
    %215 = tpu.matmul %214, %200, %cst_88 {dimension_numbers = #tpu.dot_dimension_numbers<[1], [0], [0], [1], [0, 0, 1, 1], [], []>} : vector<5x5xbf16>, vector<5x8xbf16>, vector<5x8xf32> -> vector<5x8xf32>
    %216 = vector.extract_strided_slice %197 {offsets = [0, 8], sizes = [5, 8], strides = [1, 1]} : vector<5x96xbf16> to vector<5x8xbf16>
    %217 = vector.extract_strided_slice %197 {offsets = [0, 40], sizes = [5, 8], strides = [1, 1]} : vector<5x96xbf16> to vector<5x8xbf16>
    %218 = vector.extract_strided_slice %197 {offsets = [0, 72], sizes = [5, 8], strides = [1, 1]} : vector<5x96xbf16> to vector<5x8xbf16>
    %cst_89 = arith.constant dense<0.000000e+00> : vector<5x5xf32>
    %219 = tpu.matmul %216, %217, %cst_89 {dimension_numbers = #tpu.dot_dimension_numbers<[1], [1], [0], [0], [0, 0, 1, 0], [], []>} : vector<5x8xbf16>, vector<5x8xbf16>, vector<5x5xf32> -> vector<5x5xf32>
    %cst_90 = arith.constant 0.353553385 : f32
    %220 = vector.broadcast %cst_90 : f32 to vector<5x5xf32>
    %221 = arith.mulf %219, %220 : vector<5x5xf32>
    %cst_91 = arith.constant dense<0xFF800000> : vector<5xf32>
    %222 = vector.multi_reduction <maximumf>, %221, %cst_91 [1] : vector<5x5xf32> to vector<5xf32>
    %223 = vector.shape_cast %222 : vector<5xf32> to vector<5x1xf32>
    %224 = vector.broadcast %223 : vector<5x1xf32> to vector<5x5xf32>
    %225 = arith.subf %221, %224 : vector<5x5xf32>
    %226 = math.exp %225 : vector<5x5xf32>
    %cst_92 = arith.constant dense<0.000000e+00> : vector<5xf32>
    %227 = vector.multi_reduction <add>, %226, %cst_92 [1] : vector<5x5xf32> to vector<5xf32>
    %228 = vector.shape_cast %227 : vector<5xf32> to vector<5x1xf32>
    %229 = tpu.reciprocal %228 {approx = true} : vector<5x1xf32> -> vector<5x1xf32>
    %230 = vector.broadcast %229 : vector<5x1xf32> to vector<5x5xf32>
    %231 = arith.mulf %226, %230 : vector<5x5xf32>
    %232 = arith.truncf %231 : vector<5x5xf32> to vector<5x5xbf16>
    %cst_93 = arith.constant dense<0.000000e+00> : vector<5x8xf32>
    %233 = tpu.matmul %232, %218, %cst_93 {dimension_numbers = #tpu.dot_dimension_numbers<[1], [0], [0], [1], [0, 0, 1, 1], [], []>} : vector<5x5xbf16>, vector<5x8xbf16>, vector<5x8xf32> -> vector<5x8xf32>
    %234 = vector.extract_strided_slice %197 {offsets = [0, 16], sizes = [5, 8], strides = [1, 1]} : vector<5x96xbf16> to vector<5x8xbf16>
    %235 = vector.extract_strided_slice %197 {offsets = [0, 48], sizes = [5, 8], strides = [1, 1]} : vector<5x96xbf16> to vector<5x8xbf16>
    %236 = vector.extract_strided_slice %197 {offsets = [0, 80], sizes = [5, 8], strides = [1, 1]} : vector<5x96xbf16> to vector<5x8xbf16>
    %cst_94 = arith.constant dense<0.000000e+00> : vector<5x5xf32>
    %237 = tpu.matmul %234, %235, %cst_94 {dimension_numbers = #tpu.dot_dimension_numbers<[1], [1], [0], [0], [0, 0, 1, 0], [], []>} : vector<5x8xbf16>, vector<5x8xbf16>, vector<5x5xf32> -> vector<5x5xf32>
    %cst_95 = arith.constant 0.353553385 : f32
    %238 = vector.broadcast %cst_95 : f32 to vector<5x5xf32>
    %239 = arith.mulf %237, %238 : vector<5x5xf32>
    %cst_96 = arith.constant dense<0xFF800000> : vector<5xf32>
    %240 = vector.multi_reduction <maximumf>, %239, %cst_96 [1] : vector<5x5xf32> to vector<5xf32>
    %241 = vector.shape_cast %240 : vector<5xf32> to vector<5x1xf32>
    %242 = vector.broadcast %241 : vector<5x1xf32> to vector<5x5xf32>
    %243 = arith.subf %239, %242 : vector<5x5xf32>
    %244 = math.exp %243 : vector<5x5xf32>
    %cst_97 = arith.constant dense<0.000000e+00> : vector<5xf32>
    %245 = vector.multi_reduction <add>, %244, %cst_97 [1] : vector<5x5xf32> to vector<5xf32>
    %246 = vector.shape_cast %245 : vector<5xf32> to vector<5x1xf32>
    %247 = tpu.reciprocal %246 {approx = true} : vector<5x1xf32> -> vector<5x1xf32>
    %248 = vector.broadcast %247 : vector<5x1xf32> to vector<5x5xf32>
    %249 = arith.mulf %244, %248 : vector<5x5xf32>
    %250 = arith.truncf %249 : vector<5x5xf32> to vector<5x5xbf16>
    %cst_98 = arith.constant dense<0.000000e+00> : vector<5x8xf32>
    %251 = tpu.matmul %250, %236, %cst_98 {dimension_numbers = #tpu.dot_dimension_numbers<[1], [0], [0], [1], [0, 0, 1, 1], [], []>} : vector<5x5xbf16>, vector<5x8xbf16>, vector<5x8xf32> -> vector<5x8xf32>
    %252 = vector.extract_strided_slice %197 {offsets = [0, 24], sizes = [5, 8], strides = [1, 1]} : vector<5x96xbf16> to vector<5x8xbf16>
    %253 = vector.extract_strided_slice %197 {offsets = [0, 56], sizes = [5, 8], strides = [1, 1]} : vector<5x96xbf16> to vector<5x8xbf16>
    %254 = vector.extract_strided_slice %197 {offsets = [0, 88], sizes = [5, 8], strides = [1, 1]} : vector<5x96xbf16> to vector<5x8xbf16>
    %cst_99 = arith.constant dense<0.000000e+00> : vector<5x5xf32>
    %255 = tpu.matmul %252, %253, %cst_99 {dimension_numbers = #tpu.dot_dimension_numbers<[1], [1], [0], [0], [0, 0, 1, 0], [], []>} : vector<5x8xbf16>, vector<5x8xbf16>, vector<5x5xf32> -> vector<5x5xf32>
    %cst_100 = arith.constant 0.353553385 : f32
    %256 = vector.broadcast %cst_100 : f32 to vector<5x5xf32>
    %257 = arith.mulf %255, %256 : vector<5x5xf32>
    %cst_101 = arith.constant dense<0xFF800000> : vector<5xf32>
    %258 = vector.multi_reduction <maximumf>, %257, %cst_101 [1] : vector<5x5xf32> to vector<5xf32>
    %259 = vector.shape_cast %258 : vector<5xf32> to vector<5x1xf32>
    %260 = vector.broadcast %259 : vector<5x1xf32> to vector<5x5xf32>
    %261 = arith.subf %257, %260 : vector<5x5xf32>
    %262 = math.exp %261 : vector<5x5xf32>
    %cst_102 = arith.constant dense<0.000000e+00> : vector<5xf32>
    %263 = vector.multi_reduction <add>, %262, %cst_102 [1] : vector<5x5xf32> to vector<5xf32>
    %264 = vector.shape_cast %263 : vector<5xf32> to vector<5x1xf32>
    %265 = tpu.reciprocal %264 {approx = true} : vector<5x1xf32> -> vector<5x1xf32>
    %266 = vector.broadcast %265 : vector<5x1xf32> to vector<5x5xf32>
    %267 = arith.mulf %262, %266 : vector<5x5xf32>
    %268 = arith.truncf %267 : vector<5x5xf32> to vector<5x5xbf16>
    %cst_103 = arith.constant dense<0.000000e+00> : vector<5x8xf32>
    %269 = tpu.matmul %268, %254, %cst_103 {dimension_numbers = #tpu.dot_dimension_numbers<[1], [0], [0], [1], [0, 0, 1, 1], [], []>} : vector<5x5xbf16>, vector<5x8xbf16>, vector<5x8xf32> -> vector<5x8xf32>
    %270 = tpu.concatenate %215, %233, %251, %269 in 1 : vector<5x8xf32>, vector<5x8xf32>, vector<5x8xf32>, vector<5x8xf32> -> vector<5x32xf32>
    %271 = arith.truncf %270 : vector<5x32xf32> to vector<5x32xbf16>
    %cst_104 = arith.constant dense<0.000000e+00> : vector<5x32xf32>
    %272 = tpu.matmul %271, %14, %cst_104 {dimension_numbers = #tpu.dot_dimension_numbers<[1], [0], [0], [1], [0, 0, 1, 1], [], []>} : vector<5x32xbf16>, vector<32x32xbf16>, vector<5x32xf32> -> vector<5x32xf32>
    %273 = vector.broadcast %16 : vector<1x32xf32> to vector<5x32xf32>
    %274 = arith.addf %272, %273 : vector<5x32xf32>
    %275 = arith.addf %274, %174 : vector<5x32xf32>
    %cst_105 = arith.constant dense<0.000000e+00> : vector<5xf32>
    %276 = vector.multi_reduction <add>, %275, %cst_105 [1] : vector<5x32xf32> to vector<5xf32>
    %277 = vector.shape_cast %276 : vector<5xf32> to vector<5x1xf32>
    %cst_106 = arith.constant 3.200000e+01 : f32
    %278 = vector.broadcast %cst_106 : f32 to vector<5x1xf32>
    %279 = arith.divf %277, %278 : vector<5x1xf32>
    %280 = vector.broadcast %279 : vector<5x1xf32> to vector<5x32xf32>
    %281 = arith.subf %275, %280 : vector<5x32xf32>
    %282 = arith.mulf %281, %281 : vector<5x32xf32>
    %cst_107 = arith.constant dense<0.000000e+00> : vector<5xf32>
    %283 = vector.multi_reduction <add>, %282, %cst_107 [1] : vector<5x32xf32> to vector<5xf32>
    %284 = vector.shape_cast %283 : vector<5xf32> to vector<5x1xf32>
    %cst_108 = arith.constant 3.200000e+01 : f32
    %285 = vector.broadcast %cst_108 : f32 to vector<5x1xf32>
    %286 = arith.divf %284, %285 : vector<5x1xf32>
    %cst_109 = arith.constant 9.99999974E-6 : f32
    %287 = vector.broadcast %cst_109 : f32 to vector<5x1xf32>
    %288 = arith.addf %286, %287 : vector<5x1xf32>
    %289 = math.rsqrt %288 : vector<5x1xf32>
    %290 = vector.broadcast %289 : vector<5x1xf32> to vector<5x32xf32>
    %291 = arith.mulf %281, %290 : vector<5x32xf32>
    %292 = vector.broadcast %8 : vector<1x32xf32> to vector<5x32xf32>
    %293 = arith.mulf %291, %292 : vector<5x32xf32>
    %294 = vector.broadcast %10 : vector<1x32xf32> to vector<5x32xf32>
    %295 = arith.addf %293, %294 : vector<5x32xf32>
    %296 = arith.truncf %295 : vector<5x32xf32> to vector<5x32xbf16>
    %cst_110 = arith.constant dense<0.000000e+00> : vector<5x64xf32>
    %297 = tpu.matmul %296, %18, %cst_110 {dimension_numbers = #tpu.dot_dimension_numbers<[1], [0], [0], [1], [0, 0, 1, 1], [], []>} : vector<5x32xbf16>, vector<32x64xbf16>, vector<5x64xf32> -> vector<5x64xf32>
    %298 = vector.broadcast %20 : vector<1x64xf32> to vector<5x64xf32>
    %299 = arith.addf %297, %298 : vector<5x64xf32>
    %cst_111 = arith.constant 5.000000e-01 : f32
    %300 = vector.broadcast %cst_111 : f32 to vector<5x64xf32>
    %301 = arith.mulf %300, %299 : vector<5x64xf32>
    %cst_112 = arith.constant 4.471500e-02 : f32
    %302 = vector.broadcast %cst_112 : f32 to vector<5x64xf32>
    %303 = arith.mulf %302, %299 : vector<5x64xf32>
    %304 = arith.mulf %303, %299 : vector<5x64xf32>
    %305 = arith.mulf %304, %299 : vector<5x64xf32>
    %306 = arith.addf %299, %305 : vector<5x64xf32>
    %cst_113 = arith.constant 0.797884583 : f32
    %307 = vector.broadcast %cst_113 : f32 to vector<5x64xf32>
    %308 = arith.mulf %307, %306 : vector<5x64xf32>
    %309 = math.tanh %308 : vector<5x64xf32>
    %cst_114 = arith.constant 1.000000e+00 : f32
    %310 = vector.broadcast %cst_114 : f32 to vector<5x64xf32>
    %311 = arith.addf %310, %309 : vector<5x64xf32>
    %312 = arith.mulf %301, %311 : vector<5x64xf32>
    %313 = arith.truncf %312 : vector<5x64xf32> to vector<5x64xbf16>
    %cst_115 = arith.constant dense<0.000000e+00> : vector<5x32xf32>
    %314 = tpu.matmul %313, %22, %cst_115 {dimension_numbers = #tpu.dot_dimension_numbers<[1], [0], [0], [1], [0, 0, 1, 1], [], []>} : vector<5x64xbf16>, vector<64x32xbf16>, vector<5x32xf32> -> vector<5x32xf32>
    %315 = vector.broadcast %24 : vector<1x32xf32> to vector<5x32xf32>
    %316 = arith.addf %314, %315 : vector<5x32xf32>
    %317 = arith.addf %316, %275 : vector<5x32xf32>
    %c1_116 = arith.constant 1 : index
    %c0_117 = arith.constant 0 : index
    %c0_118 = arith.constant 0 : index
    %318 = vector.load %arg13[%c1_116, %c0_117, %c0_118] : memref<2x5x32xf32, #tpu.memory_space<vmem>>, vector<1x5x32xf32>
    %319 = vector.shape_cast %318 : vector<1x5x32xf32> to vector<5x32xf32>
    %320 = vector.shape_cast %317 : vector<5x32xf32> to vector<1x5x32xf32>
    tpu.vector_store %arg13[%c1_116, %c0_117, %c0_118], %320 {strides = array<i32>} : memref<2x5x32xf32, #tpu.memory_space<vmem>>, vector<1x5x32xf32>,
    return
  }
  func.func @transform_0(%arg0: i32) -> (i32, i32, i32) {
    %c0_i32 = arith.constant 0 : i32
    %c0_i32_0 = arith.constant 0 : i32
    %c0_i32_1 = arith.constant 0 : i32
    %c0_i32_2 = arith.constant 0 : i32
    return %c0_i32, %c0_i32_0, %c0_i32_1 : i32, i32, i32
  }
  func.func @transform_1(%arg0: i32) -> (i32, i32, i32) {
    %c0_i32 = arith.constant 0 : i32
    %c0_i32_0 = arith.constant 0 : i32
    %c0_i32_1 = arith.constant 0 : i32
    return %arg0, %c0_i32, %c0_i32_0 : i32, i32, i32
  }
  func.func @transform_2(%arg0: i32) -> (i32, i32, i32) {
    %c0_i32 = arith.constant 0 : i32
    %c0_i32_0 = arith.constant 0 : i32
    %c0_i32_1 = arith.constant 0 : i32
    return %arg0, %c0_i32, %c0_i32_0 : i32, i32, i32
  }
  func.func @transform_3(%arg0: i32) -> (i32, i32, i32) {
    %c0_i32 = arith.constant 0 : i32
    %c0_i32_0 = arith.constant 0 : i32
    %c0_i32_1 = arith.constant 0 : i32
    return %arg0, %c0_i32, %c0_i32_0 : i32, i32, i32
  }
  func.func @transform_4(%arg0: i32) -> (i32, i32, i32) {
    %c0_i32 = arith.constant 0 : i32
    %c0_i32_0 = arith.constant 0 : i32
    %c0_i32_1 = arith.constant 0 : i32
    return %arg0, %c0_i32, %c0_i32_0 : i32, i32, i32
  }
  func.func @transform_5(%arg0: i32) -> (i32, i32, i32) {
    %c0_i32 = arith.constant 0 : i32
    %c0_i32_0 = arith.constant 0 : i32
    %c0_i32_1 = arith.constant 0 : i32
    return %arg0, %c0_i32, %c0_i32_0 : i32, i32, i32
  }
  func.func @transform_6(%arg0: i32) -> (i32, i32, i32) {
    %c0_i32 = arith.constant 0 : i32
    %c0_i32_0 = arith.constant 0 : i32
    %c0_i32_1 = arith.constant 0 : i32
    return %arg0, %c0_i32, %c0_i32_0 : i32, i32, i32
  }
  func.func @transform_7(%arg0: i32) -> (i32, i32, i32) {
    %c0_i32 = arith.constant 0 : i32
    %c0_i32_0 = arith.constant 0 : i32
    %c0_i32_1 = arith.constant 0 : i32
    return %arg0, %c0_i32, %c0_i32_0 : i32, i32, i32
  }
  func.func @transform_8(%arg0: i32) -> (i32, i32, i32) {
    %c0_i32 = arith.constant 0 : i32
    %c0_i32_0 = arith.constant 0 : i32
    %c0_i32_1 = arith.constant 0 : i32
    return %arg0, %c0_i32, %c0_i32_0 : i32, i32, i32
  }
  func.func @transform_9(%arg0: i32) -> (i32, i32, i32) {
    %c0_i32 = arith.constant 0 : i32
    %c0_i32_0 = arith.constant 0 : i32
    %c0_i32_1 = arith.constant 0 : i32
    return %arg0, %c0_i32, %c0_i32_0 : i32, i32, i32
  }
  func.func @transform_10(%arg0: i32) -> (i32, i32, i32) {
    %c0_i32 = arith.constant 0 : i32
    %c0_i32_0 = arith.constant 0 : i32
    %c0_i32_1 = arith.constant 0 : i32
    return %arg0, %c0_i32, %c0_i32_0 : i32, i32, i32
  }
  func.func @transform_11(%arg0: i32) -> (i32, i32, i32) {
    %c0_i32 = arith.constant 0 : i32
    %c0_i32_0 = arith.constant 0 : i32
    %c0_i32_1 = arith.constant 0 : i32
    return %arg0, %c0_i32, %c0_i32_0 : i32, i32, i32
  }
  func.func @transform_12(%arg0: i32) -> (i32, i32, i32) {
    %c0_i32 = arith.constant 0 : i32
    %c0_i32_0 = arith.constant 0 : i32
    %c0_i32_1 = arith.constant 0 : i32
    %c0_i32_2 = arith.constant 0 : i32
    return %c0_i32, %c0_i32_0, %c0_i32_1 : i32, i32, i32
  }
}

</mosaic_0001>

<llo_original>
// kernel: vit_forward.5
$region0: #{vit_forward.5}
  #allocation0 [shape = 'u32[]', space=smem, size = 0x4, offset = 0x4, fixed_abs, tag = 'smem constant byte address 0x4 - core index']
  #allocation1 [shape = 'u32[144,128]{1,0:T(1,128)}', space=vmem, size = 0x12000, scoped, tag = 'internal scratch']
  %s0 = inlined_call_operand.vmem [shape: f32[2,32], index: 0, kind: input, shape index: {}]
  %s1 = inlined_call_operand.vmem [shape: f32[1,32], index: 1, kind: input, shape index: {}]
  %s2 = inlined_call_operand.vmem [shape: f32[1,32], index: 2, kind: input, shape index: {}]
  %s3 = inlined_call_operand.vmem [shape: bf16[32,10], index: 3, kind: input, shape index: {}]
  %s4 = inlined_call_operand.vmem [shape: f32[1,10], index: 4, kind: input, shape index: {}]
  %s5 = inlined_call_operand.hbm [shape: f32[2,10], index: 5, kind: output, shape index: {}]
  %s6 = sld [smem:[#allocation0]]
  $region30: #{vit_forward.5} parent=0
    _
  %s8 = ssub.s32 1, %s6
  %s9 = scalar_select 0, %s8, %s6
  $region1: #{vit_forward.5} parent=0
    #allocation2 [shape = 'u8[1024]{0}', space=vmem, size = 0x400, scoped, tag = 'output window, operand 0, single buffered']
    #allocation3 [shape = 's32[1]{0}', space=sflag, size = 0x4, scoped, tag = 'scoped memory for vit_forward.5']
    %10 = vsyncpa [#allocation3], 0
    // Predicated region
    $region2: #{vit_forward.5} parent=1 // pred_check
      _
    $region3: #{vit_forward.5} parent=1 // pred_check_branch
      %12 = sbr.rel (0) target = $region5
    $region4: #{vit_forward.5} parent=1 // pred_region
      _
    $region5: #{vit_forward.5} parent=1 // pred_fallthru
      _
    // Predicated region
    $region6: #{vit_forward.5} parent=1 // pred_check
      _
    $region7: #{vit_forward.5} parent=1 // pred_check_branch
      %14 = sbr.rel (0) target = $region9
    $region8: #{vit_forward.5} parent=1 // pred_region
      _
    $region9: #{vit_forward.5} parent=1 // pred_fallthru
      _
    // Predicated region
    $region10: #{vit_forward.5} parent=1 // pred_check
      _
    $region11: #{vit_forward.5} parent=1 // pred_check_branch
      %16 = sbr.rel (0) target = $region13
    $region12: #{vit_forward.5} parent=1 // pred_region
      _
    $region13: #{vit_forward.5} parent=1 // pred_fallthru
      _
    // Predicated region
    $region14: #{vit_forward.5} parent=1 // pred_check
      _
    $region15: #{vit_forward.5} parent=1 // pred_check_branch
      %18 = sbr.rel (0) target = $region17
    $region16: #{vit_forward.5} parent=1 // pred_region
      _
    $region17: #{vit_forward.5} parent=1 // pred_fallthru
      _
    // Predicated region
    $region18: #{vit_forward.5} parent=1 // pred_check
      _
    $region19: #{vit_forward.5} parent=1 // pred_check_branch
      %20 = sbr.rel (0) target = $region21
    $region20: #{vit_forward.5} parent=1 // pred_region
      _
    $region21: #{vit_forward.5} parent=1 // pred_fallthru
      _
    %v22 = vld [vmem:[%s0] sm:$0x3]
    %v23 = vld [vmem:[%s1] sm:$0x1]
    %v24 = vld [vmem:[%s2] sm:$0x1]
    %vm25 = vcmask 254976
    %v26 = vsel %vm25, %v22, 0.0
    %27 = vadd.xlane.f32.xlu0 %v26
    %v28 = vpop.xlane.xlu0 %27
    %v29 = vrcp.pop 32.0
    %v30 = vmul.f32 %v28, %v29
    %v31 = vsub.f32 %v22, %v30
    %v32 = vmul.f32 %v31, %v31
    %v33 = vsel %vm25, %v32, 0.0
    %34 = vadd.xlane.f32.xlu0 %v33
    %v35 = vpop.xlane.xlu0 %34
    %v36 = vmul.f32 %v35, %v29
    %v37 = vadd.f32 %v36, 1e-05
    %v38 = vrsqrt.pop %v37
    %v39 = vmul.f32 %v31, %v38
    %v41 = vlaneseq
    %v42 = vshrl.u32 %v41, 7
    %v43 = vsub.s32 0, %v42
    %v44 = vrot.slane %v23, %v43
    %v46 = vmul.f32 %v39, %v44
    %v48 = vlaneseq
    %v49 = vshrl.u32 %v48, 7
    %v50 = vsub.s32 0, %v49
    %v51 = vrot.slane %v24, %v50
    %v53 = vadd.f32 %v46, %v51
    %v54 = vpack.c.bf16 %v53, %v53
    %v55 = vld [vmem:[%s3] sm:$0xf]
    %v56 = vld [vmem:[%s3 + $0x4] sm:$0xf]
    %v57 = vld [vmem:[%s3 + $0x8] sm:$0xf]
    %v58 = vld [vmem:[%s3 + $0xc] sm:$0xf]
    %v59 = vld [vmem:[%s4] sm:$0x1]
    %v61 = vlaneseq
    %v62 = vshrl.u32 %v61, 7
    %v63 = vsub.s32 0, %v62
    %v64 = vrot.slane %v59, %v63
    %v70 = vunpack.c.l.b16 %v55
    %v71 = vunpack.c.l.b16 %v56
    %v72 = vunpack.c.l.b16 %v57
    %v73 = vunpack.c.l.b16 %v58
    %v74 = vpack.c.b16 %v71, %v70
    %v75 = vpack.c.b16 %v73, %v72
    %vm78 = vcmask 261120
    %v80 = vsel %vm78, %v54, 0
    %82 = vmatprep.subr.bf16.mxu0 0
    %83 = vmatpush1.bf16.msra.mxu0 0
    %84 = vmatprep.subr.bf16.mxu0 0
    %85 = vmatpush1.bf16.msra.mxu0 0
    %86 = vmatprep.subr.bf16.mxu0 0
    %87 = vmatpush1.bf16.msra.mxu0 0
    %88 = vmatprep.subr.bf16.mxu0 0
    %89 = vmatpush1.bf16.msra.mxu0 0
    %90 = vmatprep.subr.bf16.mxu0 0
    %91 = vmatpush1.bf16.msra.mxu0 0
    %92 = vmatprep.subr.bf16.mxu0 0
    %93 = vmatpush1.bf16.msra.mxu0 0
    %94 = vmatprep.subr.bf16.mxu0 0
    %95 = vmatpush1.bf16.msra.mxu0 %v75
    %96 = vmatprep.subr.bf16.mxu0 0
    %97 = vmatpush1.bf16.msra.mxu0 %v74
    %98 = vmatprep.subr.bf16.mxu0 0
    %99 = vmatpush2.bf16.msra.mxu0 0
    %100 = vmatprep.subr.bf16.mxu0 0
    %101 = vmatpush2.bf16.msra.mxu0 0
    %102 = vmatprep.subr.bf16.mxu0 0
    %103 = vmatpush2.bf16.msra.mxu0 0
    %104 = vmatprep.subr.bf16.mxu0 0
    %105 = vmatpush2.bf16.msra.mxu0 0
    %106 = vmatprep.subr.bf16.mxu0 0
    %107 = vmatpush2.bf16.msra.mxu0 0
    %108 = vmatprep.subr.bf16.mxu0 0
    %109 = vmatpush2.bf16.msra.mxu0 0
    %110 = vmatprep.subr.bf16.mxu0 0
    %111 = vmatpush2.bf16.msra.mxu0 0
    %112 = vmatprep.subr.bf16.mxu0 0
    %113 = vmatpush2.bf16.msra.mxu0 0
    %114 = vmatprep.mubr.bf16.mxu0 0
    %115 = vmatmul.mubr.bf16.gmra.mxu0 %v80
    %v116 = vpop.f32.mrf.mxu0
    %v117 = vadd.f32 %v64, %v116
    %v118 = vpop.f32.mrf.mxu0
    %v119 = vpop.f32.mrf.mxu0
    %v120 = vpop.f32.mrf.mxu0
    %121 = vdwg.mxu0
    %vm122 = vcmask 74752
    %123 = vst.msk [vmem:[#allocation2] sm:$0x3] %vm122, %v117
    // Predicated region
    $region22: #{vit_forward.5} parent=1 // pred_check
      _
    $region23: #{vit_forward.5} parent=1 // pred_check_branch
      %125 = sbr.rel (0) target = $region25
    $region24: #{vit_forward.5} parent=1 // pred_region
      %s127 = ssub.s32 32, 32
      %128 = vsyncadd [#allocation3], %s127
      %s130 = sshll.u32 [#allocation2], 4
      %s131 = int_to_ptr.vmem [resolvable:$true] %s130
      %133 = dma.vmem_to_hbm [thread:$0]  %s131, 32, %s5, [#allocation3]
    $region25: #{vit_forward.5} parent=1 // pred_fallthru
      _
    // Predicated region
    $region26: #{vit_forward.5} parent=1 // pred_check
      _
    $region27: #{vit_forward.5} parent=1 // pred_check_branch
      %135 = sbr.rel (0) target = $region29
    $region28: #{vit_forward.5} parent=1 // pred_region
      %136 = dma.done [#allocation3], 32
    $region29: #{vit_forward.5} parent=1 // pred_fallthru
      _
    %137 = vsyncpa [#allocation3], 1

// kernel: vit_forward.3
$region0: #{vit_forward.3}
  #allocation0 [shape = 'u32[]', space=smem, size = 0x4, offset = 0x4, fixed_abs, tag = 'smem constant byte address 0x4 - core index']
  #allocation1 [shape = 'u32[144,128]{1,0:T(1,128)}', space=vmem, size = 0x12000, scoped, tag = 'internal scratch']
  %s0 = inlined_call_operand.vmem [shape: bf16[8,192], index: 0, kind: input, shape index: {}]
  %s1 = inlined_call_operand.vmem [shape: bf16[192,32], index: 1, kind: input, shape index: {}]
  %s2 = inlined_call_operand.vmem [shape: f32[1,32], index: 2, kind: input, shape index: {}]
  %s3 = inlined_call_operand.vmem [shape: f32[8,32], index: 3, kind: output, shape index: {}]
  %s4 = sld [smem:[#allocation0]]
  $region22: #{vit_forward.3} parent=0
    _
  %s6 = ssub.s32 1, %s4
  %s7 = scalar_select 0, %s6, %s4
  // Predicated region
  $region2: #{vit_forward.3} parent=0 // pred_check
    _
  $region3: #{vit_forward.3} parent=0 // pred_check_branch
    %9 = sbr.rel (0) target = $region5
  $region4: #{vit_forward.3} parent=0 // pred_region
    _
  $region5: #{vit_forward.3} parent=0 // pred_fallthru
    _
  // Predicated region
  $region6: #{vit_forward.3} parent=0 // pred_check
    _
  $region7: #{vit_forward.3} parent=0 // pred_check_branch
    %11 = sbr.rel (0) target = $region9
  $region8: #{vit_forward.3} parent=0 // pred_region
    _
  $region9: #{vit_forward.3} parent=0 // pred_fallthru
    _
  // Predicated region
  $region10: #{vit_forward.3} parent=0 // pred_check
    _
  $region11: #{vit_forward.3} parent=0 // pred_check_branch
    %13 = sbr.rel (0) target = $region13
  $region12: #{vit_forward.3} parent=0 // pred_region
    _
  $region13: #{vit_forward.3} parent=0 // pred_fallthru
    _
  %v15 = vld [vmem:[%s0] sm:$0xff]
  %v16 = vld [vmem:[%s1] sm:$0xf]
  %v17 = vld [vmem:[%s1 + $0x4] sm:$0xf]
  %v18 = vld [vmem:[%s1 + $0x8] sm:$0xf]
  %v19 = vld [vmem:[%s1 + $0xc] sm:$0xf]
  %v20 = vld [vmem:[%s1 + $0x10] sm:$0xf]
  %v21 = vld [vmem:[%s1 + $0x14] sm:$0xf]
  %v22 = vld [vmem:[%s1 + $0x18] sm:$0xf]
  %v23 = vld [vmem:[%s1 + $0x1c] sm:$0xf]
  %v24 = vld [vmem:[%s1 + $0x20] sm:$0xf]
  %v25 = vld [vmem:[%s1 + $0x24] sm:$0xf]
  %v26 = vld [vmem:[%s1 + $0x28] sm:$0xf]
  %v27 = vld [vmem:[%s1 + $0x2c] sm:$0xf]
  %v28 = vld [vmem:[%s1 + $0x30] sm:$0xf]
  %v29 = vld [vmem:[%s1 + $0x34] sm:$0xf]
  %v30 = vld [vmem:[%s1 + $0x38] sm:$0xf]
  %v31 = vld [vmem:[%s1 + $0x3c] sm:$0xf]
  %v32 = vld [vmem:[%s1 + $0x40] sm:$0xf]
  %v33 = vld [vmem:[%s1 + $0x44] sm:$0xf]
  %v34 = vld [vmem:[%s1 + $0x48] sm:$0xf]
  %v35 = vld [vmem:[%s1 + $0x4c] sm:$0xf]
  %v36 = vld [vmem:[%s1 + $0x50] sm:$0xf]
  %v37 = vld [vmem:[%s1 + $0x54] sm:$0xf]
  %v38 = vld [vmem:[%s1 + $0x58] sm:$0xf]
  %v39 = vld [vmem:[%s1 + $0x5c] sm:$0xf]
  %v40 = vld [vmem:[%s2] sm:$0x1]
  %v42 = vlaneseq
  %v43 = vshrl.u32 %v42, 7
  %v44 = vsub.s32 0, %v43
  %v45 = vrot.slane %v40, %v44
  %v48 = vunpack.c.l.b16 %v15
  %v49 = vunpack.c.h.b16 %v15
  %v50 = vpack.c.b16 %v48, %v48
  %v51 = vpack.c.b16 %v49, %v49
  %v77 = vunpack.c.l.b16 %v16
  %v78 = vunpack.c.l.b16 %v17
  %v79 = vunpack.c.l.b16 %v18
  %v80 = vunpack.c.l.b16 %v19
  %v81 = vunpack.c.l.b16 %v20
  %v82 = vunpack.c.l.b16 %v21
  %v83 = vunpack.c.l.b16 %v22
  %v84 = vunpack.c.l.b16 %v23
  %v85 = vunpack.c.l.b16 %v24
  %v86 = vunpack.c.l.b16 %v25
  %v87 = vunpack.c.l.b16 %v26
  %v88 = vunpack.c.l.b16 %v27
  %v89 = vunpack.c.l.b16 %v28
  %v90 = vunpack.c.l.b16 %v29
  %v91 = vunpack.c.l.b16 %v30
  %v92 = vunpack.c.l.b16 %v31
  %v93 = vunpack.c.l.b16 %v32
  %v94 = vunpack.c.l.b16 %v33
  %v95 = vunpack.c.l.b16 %v34
  %v96 = vunpack.c.l.b16 %v35
  %v97 = vunpack.c.l.b16 %v36
  %v98 = vunpack.c.l.b16 %v37
  %v99 = vunpack.c.l.b16 %v38
  %v100 = vunpack.c.l.b16 %v39
  %v101 = vpack.c.b16 %v78, %v77
  %v102 = vpack.c.b16 %v80, %v79
  %v103 = vpack.c.b16 %v82, %v81
  %v104 = vpack.c.b16 %v84, %v83
  %v105 = vpack.c.b16 %v86, %v85
  %v106 = vpack.c.b16 %v88, %v87
  %v107 = vpack.c.b16 %v90, %v89
  %v108 = vpack.c.b16 %v92, %v91
  %v109 = vpack.c.b16 %v94, %v93
  %v110 = vpack.c.b16 %v96, %v95
  %v111 = vpack.c.b16 %v98, %v97
  %v112 = vpack.c.b16 %v100, %v99
  %vm125 = vcmask 523264
  %v127 = vsel %vm125, %v51, 0
  %129 = vmatprep.subr.bf16.mxu0 0
  %130 = vmatpush1.bf16.msra.mxu0 %v108
  %131 = vmatprep.subr.bf16.mxu0 0
  %132 = vmatpush1.bf16.msra.mxu0 %v107
  %133 = vmatprep.subr.bf16.mxu0 0
  %134 = vmatpush1.bf16.msra.mxu0 %v106
  %135 = vmatprep.subr.bf16.mxu0 0
  %136 = vmatpush1.bf16.msra.mxu0 %v105
  %137 = vmatprep.subr.bf16.mxu0 0
  %138 = vmatpush1.bf16.msra.mxu0 %v104
  %139 = vmatprep.subr.bf16.mxu0 0
  %140 = vmatpush1.bf16.msra.mxu0 %v103
  %141 = vmatprep.subr.bf16.mxu0 0
  %142 = vmatpush1.bf16.msra.mxu0 %v102
  %143 = vmatprep.subr.bf16.mxu0 0
  %144 = vmatpush1.bf16.msra.mxu0 %v101
  %145 = vmatprep.subr.bf16.mxu0 0
  %146 = vmatpush2.bf16.msra.mxu0 0
  %147 = vmatprep.subr.bf16.mxu0 0
  %148 = vmatpush2.bf16.msra.mxu0 0
  %149 = vmatprep.subr.bf16.mxu0 0
  %150 = vmatpush2.bf16.msra.mxu0 0
  %151 = vmatprep.subr.bf16.mxu0 0
  %152 = vmatpush2.bf16.msra.mxu0 0
  %153 = vmatprep.subr.bf16.mxu0 0
  %154 = vmatpush2.bf16.msra.mxu0 %v112
  %155 = vmatprep.subr.bf16.mxu0 0
  %156 = vmatpush2.bf16.msra.mxu0 %v111
  %157 = vmatprep.subr.bf16.mxu0 0
  %158 = vmatpush2.bf16.msra.mxu0 %v110
  %159 = vmatprep.subr.bf16.mxu0 0
  %160 = vmatpush2.bf16.msra.mxu0 %v109
  %161 = vmatprep.mubr.bf16.mxu0 %v127
  %162 = vmatmul.mubr.bf16.gmra.mxu0 %v50
  %v163 = vpop.f32.mrf.mxu0
  %v164 = vadd.f32 %v45, %v163
  %v165 = vpop.f32.mrf.mxu0
  %v166 = vpop.f32.mrf.mxu0
  %v167 = vpop.f32.mrf.mxu0
  %168 = vdwg.mxu0
  %vm169 = vcmask 261120
  %170 = vst.msk [vmem:[%s3] sm:$0xff] %vm169, %v164
  // Predicated region
  $region14: #{vit_forward.3} parent=0 // pred_check
    _
  $region15: #{vit_forward.3} parent=0 // pred_check_branch
    %172 = sbr.rel (0) target = $region17
  $region16: #{vit_forward.3} parent=0 // pred_region
    _
  $region17: #{vit_forward.3} parent=0 // pred_fallthru
    _
  // Predicated region
  $region18: #{vit_forward.3} parent=0 // pred_check
    _
  $region19: #{vit_forward.3} parent=0 // pred_check_branch
    %174 = sbr.rel (0) target = $region21
  $region20: #{vit_forward.3} parent=0 // pred_region
    _
  $region21: #{vit_forward.3} parent=0 // pred_fallthru
    _

// kernel: vit_forward.4
$region0: #{vit_forward.4}
  #allocation0 [shape = 'u32[]', space=smem, size = 0x4, offset = 0x4, fixed_abs, tag = 'smem constant byte address 0x4 - core index']
  #allocation1 [shape = 'u32[144,128]{1,0:T(1,128)}', space=vmem, size = 0x12000, scoped, tag = 'internal scratch']
  %s0 = inlined_call_operand.vmem [shape: f32[2,5,32], index: 0, kind: input, shape index: {}]
  %s1 = inlined_call_operand.vmem [shape: f32[2,1,32], index: 1, kind: input, shape index: {}]
  %s2 = inlined_call_operand.vmem [shape: f32[2,1,32], index: 2, kind: input, shape index: {}]
  %s3 = inlined_call_operand.vmem [shape: bf16[2,32,96], index: 3, kind: input, shape index: {}]
  %s4 = inlined_call_operand.vmem [shape: bf16[2,32,32], index: 4, kind: input, shape index: {}]
  %s5 = inlined_call_operand.vmem [shape: f32[2,1,32], index: 5, kind: input, shape index: {}]
  %s6 = inlined_call_operand.vmem [shape: f32[2,1,32], index: 6, kind: input, shape index: {}]
  %s7 = inlined_call_operand.vmem [shape: f32[2,1,32], index: 7, kind: input, shape index: {}]
  %s8 = inlined_call_operand.vmem [shape: bf16[2,32,64], index: 8, kind: input, shape index: {}]
  %s9 = inlined_call_operand.vmem [shape: f32[2,1,64], index: 9, kind: input, shape index: {}]
  %s10 = inlined_call_operand.vmem [shape: bf16[2,64,32], index: 10, kind: input, shape index: {}]
  %s11 = inlined_call_operand.vmem [shape: f32[2,1,32], index: 11, kind: input, shape index: {}]
  %s12 = inlined_call_operand.vmem [shape: f32[2,5,32], index: 12, kind: output, shape index: {}]
  %s13 = sld [smem:[#allocation0]]
  $region85: #{vit_forward.4} parent=0
    _
  %s15 = ssub.s32 1, %s13
  %s16 = scalar_select 0, %s15, %s13
  loop: start=0, step=1, limit=4
  $region2: #{vit_forward.4} parent=0 // loop_pre_header
    _
  $region3: #{vit_forward.4} parent=0 // loop_header
    %s18 = sphi 0, %s22
    %p19 = scmp.ge.s32.totalorder %s18, 4
    %s26 = sphi 0, %s26
    %s28 = sphi 0, %s26
    %s29 = sphi 0, %s28
    %s43 = sphi 0, %s29
    %s49 = sphi 0, %s51
    %s52 = sphi 0, %s49
    %s53 = sphi 0, %s52
    %s69 = sphi 0, %s53
    %s75 = sphi 0, %s77
    %s78 = sphi 0, %s75
    %s79 = sphi 0, %s78
    %s95 = sphi 0, %s79
    %s101 = sphi 0, %s103
    %s104 = sphi 0, %s101
    %s105 = sphi 0, %s104
    %s121 = sphi 0, %s105
    %s127 = sphi 0, %s129
    %s130 = sphi 0, %s127
    %s131 = sphi 0, %s130
    %s147 = sphi 0, %s131
    %s153 = sphi 0, %s155
    %s156 = sphi 0, %s153
    %s157 = sphi 0, %s156
    %s173 = sphi 0, %s157
    %s179 = sphi 0, %s181
    %s182 = sphi 0, %s179
    %s183 = sphi 0, %s182
    %s199 = sphi 0, %s183
    %s205 = sphi 0, %s207
    %s208 = sphi 0, %s205
    %s209 = sphi 0, %s208
    %s225 = sphi 0, %s209
    %s231 = sphi 0, %s233
    %s234 = sphi 0, %s231
    %s235 = sphi 0, %s234
    %s251 = sphi 0, %s235
    %s257 = sphi 0, %s259
    %s260 = sphi 0, %s257
    %s261 = sphi 0, %s260
    %s277 = sphi 0, %s261
    %s283 = sphi 0, %s285
    %s286 = sphi 0, %s283
    %s287 = sphi 0, %s286
    %s303 = sphi 0, %s287
    %s309 = sphi 0, %s311
    %s312 = sphi 0, %s309
    %s313 = sphi 0, %s312
    %s329 = sphi 0, %s313
    %s333 = sphi 0, %s333
    %s335 = sphi 0, %s333
    %s336 = sphi 0, %s335
    %s350 = sphi 0, %s336
  $region4: #{vit_forward.4} parent=0 // loop_header_branch
    %21 = sbr.rel (%p19) target = $region8
  $region5: #{vit_forward.4} parent=0 // loop_body
    %s23 = ssub.s32 %s18, 1
    %s24 = ssub.s32 %s18, 2
    %s25 = sadd.s32 %s18, 1
    %s27 = sadd.s32 %s26, 1
    %p30 = scmp.eq.s32.totalorder %s18, 1
    %p31 = scmp.ne.s32.totalorder %s26, %s28
    %p32 = scmp.eq.s32.totalorder %s18, 0
    %p33 = por %p31, %p32
    %p34 = scmp.ne.s32.totalorder %s26, %s28
    %p35 = scmp.eq.s32.totalorder %s23, 1
    %p36 = por %p34, %p35
    %p37 = scmp.ne.s32.totalorder %s28, %s29
    %p38 = scmp.eq.s32.totalorder %s23, 0
    %p39 = por %p37, %p38
    %p40 = scmp.ne.s32.totalorder %s28, %s29
    %p41 = scmp.eq.s32.totalorder %s24, 1
    %p42 = por %p40, %p41
    %p44 = scmp.ne.s32.totalorder %s29, %s43
    %p45 = scmp.eq.s32.totalorder %s24, 0
    %p46 = por %p44, %p45
    %s47 = ssub.s32 %s18, %s25
    %p48 = scmp.eq.s32.totalorder %s47, 0
    %s50 = sadd.s32 %s49, 1
    %s51 = scalar_select %p48, %s49, %s50
    %p54 = pneg %p48
    %p55 = scmp.eq.s32.totalorder %s18, 1
    %p56 = por %p54, %p55
    %p57 = scmp.ne.s32.totalorder %s49, %s52
    %p58 = scmp.eq.s32.totalorder %s18, 0
    %p59 = por %p57, %p58
    %p60 = scmp.ne.s32.totalorder %s49, %s52
    %p61 = scmp.eq.s32.totalorder %s23, 1
    %p62 = por %p60, %p61
    %p63 = scmp.ne.s32.totalorder %s52, %s53
    %p64 = scmp.eq.s32.totalorder %s23, 0
    %p65 = por %p63, %p64
    %p66 = scmp.ne.s32.totalorder %s52, %s53
    %p67 = scmp.eq.s32.totalorder %s24, 1
    %p68 = por %p66, %p67
    %p70 = scmp.ne.s32.totalorder %s53, %s69
    %p71 = scmp.eq.s32.totalorder %s24, 0
    %p72 = por %p70, %p71
    %s73 = ssub.s32 %s18, %s25
    %p74 = scmp.eq.s32.totalorder %s73, 0
    %s76 = sadd.s32 %s75, 1
    %s77 = scalar_select %p74, %s75, %s76
    %p80 = pneg %p74
    %p81 = scmp.eq.s32.totalorder %s18, 1
    %p82 = por %p80, %p81
    %p83 = scmp.ne.s32.totalorder %s75, %s78
    %p84 = scmp.eq.s32.totalorder %s18, 0
    %p85 = por %p83, %p84
    %p86 = scmp.ne.s32.totalorder %s75, %s78
    %p87 = scmp.eq.s32.totalorder %s23, 1
    %p88 = por %p86, %p87
    %p89 = scmp.ne.s32.totalorder %s78, %s79
    %p90 = scmp.eq.s32.totalorder %s23, 0
    %p91 = por %p89, %p90
    %p92 = scmp.ne.s32.totalorder %s78, %s79
    %p93 = scmp.eq.s32.totalorder %s24, 1
    %p94 = por %p92, %p93
    %p96 = scmp.ne.s32.totalorder %s79, %s95
    %p97 = scmp.eq.s32.totalorder %s24, 0
    %p98 = por %p96, %p97
    %s99 = ssub.s32 %s18, %s25
    %p100 = scmp.eq.s32.totalorder %s99, 0
    %s102 = sadd.s32 %s101, 1
    %s103 = scalar_select %p100, %s101, %s102
    %p106 = pneg %p100
    %p107 = scmp.eq.s32.totalorder %s18, 1
    %p108 = por %p106, %p107
    %p109 = scmp.ne.s32.totalorder %s101, %s104
    %p110 = scmp.eq.s32.totalorder %s18, 0
    %p111 = por %p109, %p110
    %p112 = scmp.ne.s32.totalorder %s101, %s104
    %p113 = scmp.eq.s32.totalorder %s23, 1
    %p114 = por %p112, %p113
    %p115 = scmp.ne.s32.totalorder %s104, %s105
    %p116 = scmp.eq.s32.totalorder %s23, 0
    %p117 = por %p115, %p116
    %p118 = scmp.ne.s32.totalorder %s104, %s105
    %p119 = scmp.eq.s32.totalorder %s24, 1
    %p120 = por %p118, %p119
    %p122 = scmp.ne.s32.totalorder %s105, %s121
    %p123 = scmp.eq.s32.totalorder %s24, 0
    %p124 = por %p122, %p123
    %s125 = ssub.s32 %s18, %s25
    %p126 = scmp.eq.s32.totalorder %s125, 0
    %s128 = sadd.s32 %s127, 1
    %s129 = scalar_select %p126, %s127, %s128
    %p132 = pneg %p126
    %p133 = scmp.eq.s32.totalorder %s18, 1
    %p134 = por %p132, %p133
    %p135 = scmp.ne.s32.totalorder %s127, %s130
    %p136 = scmp.eq.s32.totalorder %s18, 0
    %p137 = por %p135, %p136
    %p138 = scmp.ne.s32.totalorder %s127, %s130
    %p139 = scmp.eq.s32.totalorder %s23, 1
    %p140 = por %p138, %p139
    %p141 = scmp.ne.s32.totalorder %s130, %s131
    %p142 = scmp.eq.s32.totalorder %s23, 0
    %p143 = por %p141, %p142
    %p144 = scmp.ne.s32.totalorder %s130, %s131
    %p145 = scmp.eq.s32.totalorder %s24, 1
    %p146 = por %p144, %p145
    %p148 = scmp.ne.s32.totalorder %s131, %s147
    %p149 = scmp.eq.s32.totalorder %s24, 0
    %p150 = por %p148, %p149
    %s151 = ssub.s32 %s18, %s25
    %p152 = scmp.eq.s32.totalorder %s151, 0
    %s154 = sadd.s32 %s153, 1
    %s155 = scalar_select %p152, %s153, %s154
    %p158 = pneg %p152
    %p159 = scmp.eq.s32.totalorder %s18, 1
    %p160 = por %p158, %p159
    %p161 = scmp.ne.s32.totalorder %s153, %s156
    %p162 = scmp.eq.s32.totalorder %s18, 0
    %p163 = por %p161, %p162
    %p164 = scmp.ne.s32.totalorder %s153, %s156
    %p165 = scmp.eq.s32.totalorder %s23, 1
    %p166 = por %p164, %p165
    %p167 = scmp.ne.s32.totalorder %s156, %s157
    %p168 = scmp.eq.s32.totalorder %s23, 0
    %p169 = por %p167, %p168
    %p170 = scmp.ne.s32.totalorder %s156, %s157
    %p171 = scmp.eq.s32.totalorder %s24, 1
    %p172 = por %p170, %p171
    %p174 = scmp.ne.s32.totalorder %s157, %s173
    %p175 = scmp.eq.s32.totalorder %s24, 0
    %p176 = por %p174, %p175
    %s177 = ssub.s32 %s18, %s25
    %p178 = scmp.eq.s32.totalorder %s177, 0
    %s180 = sadd.s32 %s179, 1
    %s181 = scalar_select %p178, %s179, %s180
    %p184 = pneg %p178
    %p185 = scmp.eq.s32.totalorder %s18, 1
    %p186 = por %p184, %p185
    %p187 = scmp.ne.s32.totalorder %s179, %s182
    %p188 = scmp.eq.s32.totalorder %s18, 0
    %p189 = por %p187, %p188
    %p190 = scmp.ne.s32.totalorder %s179, %s182
    %p191 = scmp.eq.s32.totalorder %s23, 1
    %p192 = por %p190, %p191
    %p193 = scmp.ne.s32.totalorder %s182, %s183
    %p194 = scmp.eq.s32.totalorder %s23, 0
    %p195 = por %p193, %p194
    %p196 = scmp.ne.s32.totalorder %s182, %s183
    %p197 = scmp.eq.s32.totalorder %s24, 1
    %p198 = por %p196, %p197
    %p200 = scmp.ne.s32.totalorder %s183, %s199
    %p201 = scmp.eq.s32.totalorder %s24, 0
    %p202 = por %p200, %p201
    %s203 = ssub.s32 %s18, %s25
    %p204 = scmp.eq.s32.totalorder %s203, 0
    %s206 = sadd.s32 %s205, 1
    %s207 = scalar_select %p204, %s205, %s206
    %p210 = pneg %p204
    %p211 = scmp.eq.s32.totalorder %s18, 1
    %p212 = por %p210, %p211
    %p213 = scmp.ne.s32.totalorder %s205, %s208
    %p214 = scmp.eq.s32.totalorder %s18, 0
    %p215 = por %p213, %p214
    %p216 = scmp.ne.s32.totalorder %s205, %s208
    %p217 = scmp.eq.s32.totalorder %s23, 1
    %p218 = por %p216, %p217
    %p219 = scmp.ne.s32.totalorder %s208, %s209
    %p220 = scmp.eq.s32.totalorder %s23, 0
    %p221 = por %p219, %p220
    %p222 = scmp.ne.s32.totalorder %s208, %s209
    %p223 = scmp.eq.s32.totalorder %s24, 1
    %p224 = por %p222, %p223
    %p226 = scmp.ne.s32.totalorder %s209, %s225
    %p227 = scmp.eq.s32.totalorder %s24, 0
    %p228 = por %p226, %p227
    %s229 = ssub.s32 %s18, %s25
    %p230 = scmp.eq.s32.totalorder %s229, 0
    %s232 = sadd.s32 %s231, 1
    %s233 = scalar_select %p230, %s231, %s232
    %p236 = pneg %p230
    %p237 = scmp.eq.s32.totalorder %s18, 1
    %p238 = por %p236, %p237
    %p239 = scmp.ne.s32.totalorder %s231, %s234
    %p240 = scmp.eq.s32.totalorder %s18, 0
    %p241 = por %p239, %p240
    %p242 = scmp.ne.s32.totalorder %s231, %s234
    %p243 = scmp.eq.s32.totalorder %s23, 1
    %p244 = por %p242, %p243
    %p245 = scmp.ne.s32.totalorder %s234, %s235
    %p246 = scmp.eq.s32.totalorder %s23, 0
    %p247 = por %p245, %p246
    %p248 = scmp.ne.s32.totalorder %s234, %s235
    %p249 = scmp.eq.s32.totalorder %s24, 1
    %p250 = por %p248, %p249
    %p252 = scmp.ne.s32.totalorder %s235, %s251
    %p253 = scmp.eq.s32.totalorder %s24, 0
    %p254 = por %p252, %p253
    %s255 = ssub.s32 %s18, %s25
    %p256 = scmp.eq.s32.totalorder %s255, 0
    %s258 = sadd.s32 %s257, 1
    %s259 = scalar_select %p256, %s257, %s258
    %p262 = pneg %p256
    %p263 = scmp.eq.s32.totalorder %s18, 1
    %p264 = por %p262, %p263
    %p265 = scmp.ne.s32.totalorder %s257, %s260
    %p266 = scmp.eq.s32.totalorder %s18, 0
    %p267 = por %p265, %p266
    %p268 = scmp.ne.s32.totalorder %s257, %s260
    %p269 = scmp.eq.s32.totalorder %s23, 1
    %p270 = por %p268, %p269
    %p271 = scmp.ne.s32.totalorder %s260, %s261
    %p272 = scmp.eq.s32.totalorder %s23, 0
    %p273 = por %p271, %p272
    %p274 = scmp.ne.s32.totalorder %s260, %s261
    %p275 = scmp.eq.s32.totalorder %s24, 1
    %p276 = por %p274, %p275
    %p278 = scmp.ne.s32.totalorder %s261, %s277
    %p279 = scmp.eq.s32.totalorder %s24, 0
    %p280 = por %p278, %p279
    %s281 = ssub.s32 %s18, %s25
    %p282 = scmp.eq.s32.totalorder %s281, 0
    %s284 = sadd.s32 %s283, 1
    %s285 = scalar_select %p282, %s283, %s284
    %p288 = pneg %p282
    %p289 = scmp.eq.s32.totalorder %s18, 1
    %p290 = por %p288, %p289
    %p291 = scmp.ne.s32.totalorder %s283, %s286
    %p292 = scmp.eq.s32.totalorder %s18, 0
    %p293 = por %p291, %p292
    %p294 = scmp.ne.s32.totalorder %s283, %s286
    %p295 = scmp.eq.s32.totalorder %s23, 1
    %p296 = por %p294, %p295
    %p297 = scmp.ne.s32.totalorder %s286, %s287
    %p298 = scmp.eq.s32.totalorder %s23, 0
    %p299 = por %p297, %p298
    %p300 = scmp.ne.s32.totalorder %s286, %s287
    %p301 = scmp.eq.s32.totalorder %s24, 1
    %p302 = por %p300, %p301
    %p304 = scmp.ne.s32.totalorder %s287, %s303
    %p305 = scmp.eq.s32.totalorder %s24, 0
    %p306 = por %p304, %p305
    %s307 = ssub.s32 %s18, %s25
    %p308 = scmp.eq.s32.totalorder %s307, 0
    %s310 = sadd.s32 %s309, 1
    %s311 = scalar_select %p308, %s309, %s310
    %p314 = pneg %p308
    %p315 = scmp.eq.s32.totalorder %s18, 1
    %p316 = por %p314, %p315
    %p317 = scmp.ne.s32.totalorder %s309, %s312
    %p318 = scmp.eq.s32.totalorder %s18, 0
    %p319 = por %p317, %p318
    %p320 = scmp.ne.s32.totalorder %s309, %s312
    %p321 = scmp.eq.s32.totalorder %s23, 1
    %p322 = por %p320, %p321
    %p323 = scmp.ne.s32.totalorder %s312, %s313
    %p324 = scmp.eq.s32.totalorder %s23, 0
    %p325 = por %p323, %p324
    %p326 = scmp.ne.s32.totalorder %s312, %s313
    %p327 = scmp.eq.s32.totalorder %s24, 1
    %p328 = por %p326, %p327
    %p330 = scmp.ne.s32.totalorder %s313, %s329
    %p331 = scmp.eq.s32.totalorder %s24, 0
    %p332 = por %p330, %p331
    %s334 = sadd.s32 %s333, 1
    %p337 = scmp.eq.s32.totalorder %s18, 1
    %p338 = scmp.ne.s32.totalorder %s333, %s335
    %p339 = scmp.eq.s32.totalorder %s18, 0
    %p340 = por %p338, %p339
    %p341 = scmp.ne.s32.totalorder %s333, %s335
    %p342 = scmp.eq.s32.totalorder %s23, 1
    %p343 = por %p341, %p342
    %p344 = scmp.ne.s32.totalorder %s335, %s336
    %p345 = scmp.eq.s32.totalorder %s23, 0
    %p346 = por %p344, %p345
    %p347 = scmp.ne.s32.totalorder %s335, %s336
    %p348 = scmp.eq.s32.totalorder %s24, 1
    %p349 = por %p347, %p348
    %p351 = scmp.ne.s32.totalorder %s336, %s350
    %p352 = scmp.eq.s32.totalorder %s24, 0
    %p353 = por %p351, %p352
    %p354 = scmp.le.s32.totalorder 1, %s18
    %p355 = scmp.lt.s32.totalorder %s18, 3
    %p356 = pnand %p354, %p355
    %p357 = pneg %p356
    // Predicated region
    $region9: #{vit_forward.4} parent=5 // pred_check
      _
    $region10: #{vit_forward.4} parent=5 // pred_check_branch
      %359 = sbr.rel (%p356) target = $region12
    $region11: #{vit_forward.4} parent=5 // pred_region
      %s360 = ssub.s32 %s18, 1
      // Predicated region
      $region13: #{vit_forward.4} parent=11 // pred_check
        %p361 = pneg %p39
      $region14: #{vit_forward.4} parent=11 // pred_check_branch
        %363 = sbr.rel (%p361) target = $region16
      $region15: #{vit_forward.4} parent=11 // pred_region
        _
      $region16: #{vit_forward.4} parent=11 // pred_fallthru
        _
    $region12: #{vit_forward.4} parent=5 // pred_fallthru
      _
    %p364 = scmp.lt.s32.totalorder %s18, 2
    // Predicated region
    $region17: #{vit_forward.4} parent=5 // pred_check
      %p365 = pneg %p364
    $region18: #{vit_forward.4} parent=5 // pred_check_branch
      %367 = sbr.rel (%p365) target = $region20
    $region19: #{vit_forward.4} parent=5 // pred_region
      // Predicated region
      $region21: #{vit_forward.4} parent=19 // pred_check
        %p368 = pneg %p59
      $region22: #{vit_forward.4} parent=19 // pred_check_branch
        %370 = sbr.rel (%p368) target = $region24
      $region23: #{vit_forward.4} parent=19 // pred_region
        %p371 = scmp.lt.s32.totalorder %s18, 1
        %s372 = scalar_select %p371, %s18, 1
        %s373 = scalar_lea.vmem %s1, %s372
      $region24: #{vit_forward.4} parent=19 // pred_fallthru
        _
      // Predicated region
      $region25: #{vit_forward.4} parent=19 // pred_check
        %p374 = pneg %p85
      $region26: #{vit_forward.4} parent=19 // pred_check_branch
        %376 = sbr.rel (%p374) target = $region28
      $region27: #{vit_forward.4} parent=19 // pred_region
        %p377 = scmp.lt.s32.totalorder %s18, 1
        %s378 = scalar_select %p377, %s18, 1
        %s379 = scalar_lea.vmem %s2, %s378
      $region28: #{vit_forward.4} parent=19 // pred_fallthru
        _
      // Predicated region
      $region29: #{vit_forward.4} parent=19 // pred_check
        %p380 = pneg %p111
      $region30: #{vit_forward.4} parent=19 // pred_check_branch
        %382 = sbr.rel (%p380) target = $region32
      $region31: #{vit_forward.4} parent=19 // pred_region
        %p383 = scmp.lt.s32.totalorder %s18, 1
        %s384 = scalar_select %p383, %s18, 1
        %s385 = smul.addr %s384, 4
        %s386 = smul.addr %s385, 4
        %s387 = scalar_lea.vmem %s3, %s386
      $region32: #{vit_forward.4} parent=19 // pred_fallthru
        _
      // Predicated region
      $region33: #{vit_forward.4} parent=19 // pred_check
        %p388 = pneg %p137
      $region34: #{vit_forward.4} parent=19 // pred_check_branch
        %390 = sbr.rel (%p388) target = $region36
      $region35: #{vit_forward.4} parent=19 // pred_region
        %p391 = scmp.lt.s32.totalorder %s18, 1
        %s392 = scalar_select %p391, %s18, 1
        %s393 = smul.addr %s392, 4
        %s394 = smul.addr %s393, 4
        %s395 = scalar_lea.vmem %s4, %s394
      $region36: #{vit_forward.4} parent=19 // pred_fallthru
        _
      // Predicated region
      $region37: #{vit_forward.4} parent=19 // pred_check
        %p396 = pneg %p163
      $region38: #{vit_forward.4} parent=19 // pred_check_branch
        %398 = sbr.rel (%p396) target = $region40
      $region39: #{vit_forward.4} parent=19 // pred_region
        %p399 = scmp.lt.s32.totalorder %s18, 1
        %s400 = scalar_select %p399, %s18, 1
        %s401 = scalar_lea.vmem %s5, %s400
      $region40: #{vit_forward.4} parent=19 // pred_fallthru
        _
      // Predicated region
      $region41: #{vit_forward.4} parent=19 // pred_check
        %p402 = pneg %p189
      $region42: #{vit_forward.4} parent=19 // pred_check_branch
        %404 = sbr.rel (%p402) target = $region44
      $region43: #{vit_forward.4} parent=19 // pred_region
        %p405 = scmp.lt.s32.totalorder %s18, 1
        %s406 = scalar_select %p405, %s18, 1
        %s407 = scalar_lea.vmem %s6, %s406
      $region44: #{vit_forward.4} parent=19 // pred_fallthru
        _
      // Predicated region
      $region45: #{vit_forward.4} parent=19 // pred_check
        %p408 = pneg %p215
      $region46: #{vit_forward.4} parent=19 // pred_check_branch
        %410 = sbr.rel (%p408) target = $region48
      $region47: #{vit_forward.4} parent=19 // pred_region
        %p411 = scmp.lt.s32.totalorder %s18, 1
        %s412 = scalar_select %p411, %s18, 1
        %s413 = scalar_lea.vmem %s7, %s412
      $region48: #{vit_forward.4} parent=19 // pred_fallthru
        _
      // Predicated region
      $region49: #{vit_forward.4} parent=19 // pred_check
        %p414 = pneg %p241
      $region50: #{vit_forward.4} parent=19 // pred_check_branch
        %416 = sbr.rel (%p414) target = $region52
      $region51: #{vit_forward.4} parent=19 // pred_region
        %p417 = scmp.lt.s32.totalorder %s18, 1
        %s418 = scalar_select %p417, %s18, 1
        %s419 = smul.addr %s418, 4
        %s420 = smul.addr %s419, 4
        %s421 = scalar_lea.vmem %s8, %s420
      $region52: #{vit_forward.4} parent=19 // pred_fallthru
        _
      // Predicated region
      $region53: #{vit_forward.4} parent=19 // pred_check
        %p422 = pneg %p267
      $region54: #{vit_forward.4} parent=19 // pred_check_branch
        %424 = sbr.rel (%p422) target = $region56
      $region55: #{vit_forward.4} parent=19 // pred_region
        %p425 = scmp.lt.s32.totalorder %s18, 1
        %s426 = scalar_select %p425, %s18, 1
        %s427 = scalar_lea.vmem %s9, %s426
      $region56: #{vit_forward.4} parent=19 // pred_fallthru
        _
      // Predicated region
      $region57: #{vit_forward.4} parent=19 // pred_check
        %p428 = pneg %p293
      $region58: #{vit_forward.4} parent=19 // pred_check_branch
        %430 = sbr.rel (%p428) target = $region60
      $region59: #{vit_forward.4} parent=19 // pred_region
        %p431 = scmp.lt.s32.totalorder %s18, 1
        %s432 = scalar_select %p431, %s18, 1
        %s433 = smul.addr %s432, 8
        %s434 = smul.addr %s433, 4
        %s435 = scalar_lea.vmem %s10, %s434
      $region60: #{vit_forward.4} parent=19 // pred_fallthru
        _
      // Predicated region
      $region61: #{vit_forward.4} parent=19 // pred_check
        %p436 = pneg %p319
      $region62: #{vit_forward.4} parent=19 // pred_check_branch
        %438 = sbr.rel (%p436) target = $region64
      $region63: #{vit_forward.4} parent=19 // pred_region
        %p439 = scmp.lt.s32.totalorder %s18, 1
        %s440 = scalar_select %p439, %s18, 1
        %s441 = scalar_lea.vmem %s11, %s440
      $region64: #{vit_forward.4} parent=19 // pred_fallthru
        _
    $region20: #{vit_forward.4} parent=5 // pred_fallthru
      _
    %p442 = scmp.le.s32.totalorder 1, %s18
    %p443 = scmp.lt.s32.totalorder %s18, 3
    %p444 = pnand %p442, %p443
    %p445 = pneg %p444
    // Predicated region
    $region65: #{vit_forward.4} parent=5 // pred_check
      _
    $region66: #{vit_forward.4} parent=5 // pred_check_branch
      %447 = sbr.rel (%p444) target = $region68
    $region67: #{vit_forward.4} parent=5 // pred_region
      %s448 = ssub.s32 %s18, 1
      %p449 = pneg %p39
      %p450 = pneg %p36
      %p451 = scmp.lt.s32.totalorder %s23, 1
      %s452 = scalar_select %p451, %s23, 1
      %s453 = scalar_lea.vmem %s1, %s452
      %p454 = pneg %p65
      %p455 = pneg %p62
      %p456 = scmp.lt.s32.totalorder %s23, 1
      %s457 = scalar_select %p456, %s23, 1
      %s458 = scalar_lea.vmem %s2, %s457
      %p459 = pneg %p91
      %p460 = pneg %p88
      %p461 = scmp.lt.s32.totalorder %s23, 1
      %s462 = scalar_select %p461, %s23, 1
      %s463 = smul.addr %s462, 4
      %s464 = smul.addr %s463, 4
      %s465 = scalar_lea.vmem %s3, %s464
      %p466 = pneg %p117
      %p467 = pneg %p114
      %p468 = scmp.lt.s32.totalorder %s23, 1
      %s469 = scalar_select %p468, %s23, 1
      %s470 = smul.addr %s469, 4
      %s471 = smul.addr %s470, 4
      %s472 = scalar_lea.vmem %s4, %s471
      %p473 = pneg %p143
      %p474 = pneg %p140
      %p475 = scmp.lt.s32.totalorder %s23, 1
      %s476 = scalar_select %p475, %s23, 1
      %s477 = scalar_lea.vmem %s5, %s476
      %p478 = pneg %p169
      %p479 = pneg %p166
      %p480 = scmp.lt.s32.totalorder %s23, 1
      %s481 = scalar_select %p480, %s23, 1
      %s482 = scalar_lea.vmem %s6, %s481
      %p483 = pneg %p195
      %p484 = pneg %p192
      %p485 = scmp.lt.s32.totalorder %s23, 1
      %s486 = scalar_select %p485, %s23, 1
      %s487 = scalar_lea.vmem %s7, %s486
      %p488 = pneg %p221
      %p489 = pneg %p218
      %p490 = scmp.lt.s32.totalorder %s23, 1
      %s491 = scalar_select %p490, %s23, 1
      %s492 = smul.addr %s491, 4
      %s493 = smul.addr %s492, 4
      %s494 = scalar_lea.vmem %s8, %s493
      %p495 = pneg %p247
      %p496 = pneg %p244
      %p497 = scmp.lt.s32.totalorder %s23, 1
      %s498 = scalar_select %p497, %s23, 1
      %s499 = scalar_lea.vmem %s9, %s498
      %p500 = pneg %p273
      %p501 = pneg %p270
      %p502 = scmp.lt.s32.totalorder %s23, 1
      %s503 = scalar_select %p502, %s23, 1
      %s504 = smul.addr %s503, 8
      %s505 = smul.addr %s504, 4
      %s506 = scalar_lea.vmem %s10, %s505
      %p507 = pneg %p299
      %p508 = pneg %p296
      %p509 = scmp.lt.s32.totalorder %s23, 1
      %s510 = scalar_select %p509, %s23, 1
      %s511 = scalar_lea.vmem %s11, %s510
      %p512 = pneg %p325
      %p513 = pneg %p322
      %p514 = pneg %p346
      %p515 = pneg %p343
      %p516 = scmp.lt.s32.totalorder %s23, 1
      %s517 = scalar_select %p516, %s23, 1
      %s518 = scalar_lea.vmem %s1, %s517
      %p519 = scmp.lt.s32.totalorder %s23, 1
      %s520 = scalar_select %p519, %s23, 1
      %s521 = scalar_lea.vmem %s2, %s520
      %p522 = scmp.lt.s32.totalorder %s23, 1
      %s523 = scalar_select %p522, %s23, 1
      %s524 = smul.addr %s523, 4
      %s525 = smul.addr %s524, 4
      %s526 = scalar_lea.vmem %s3, %s525
      %p527 = scmp.lt.s32.totalorder %s23, 1
      %s528 = scalar_select %p527, %s23, 1
      %s529 = smul.addr %s528, 4
      %s530 = smul.addr %s529, 4
      %s531 = scalar_lea.vmem %s4, %s530
      %p532 = scmp.lt.s32.totalorder %s23, 1
      %s533 = scalar_select %p532, %s23, 1
      %s534 = scalar_lea.vmem %s5, %s533
      %p535 = scmp.lt.s32.totalorder %s23, 1
      %s536 = scalar_select %p535, %s23, 1
      %s537 = scalar_lea.vmem %s6, %s536
      %p538 = scmp.lt.s32.totalorder %s23, 1
      %s539 = scalar_select %p538, %s23, 1
      %s540 = scalar_lea.vmem %s7, %s539
      %p541 = scmp.lt.s32.totalorder %s23, 1
      %s542 = scalar_select %p541, %s23, 1
      %s543 = smul.addr %s542, 4
      %s544 = smul.addr %s543, 4
      %s545 = scalar_lea.vmem %s8, %s544
      %p546 = scmp.lt.s32.totalorder %s23, 1
      %s547 = scalar_select %p546, %s23, 1
      %s548 = scalar_lea.vmem %s9, %s547
      %p549 = scmp.lt.s32.totalorder %s23, 1
      %s550 = scalar_select %p549, %s23, 1
      %s551 = smul.addr %s550, 8
      %s552 = smul.addr %s551, 4
      %s553 = scalar_lea.vmem %s10, %s552
      %p554 = scmp.lt.s32.totalorder %s23, 1
      %s555 = scalar_select %p554, %s23, 1
      %s556 = scalar_lea.vmem %s11, %s555
      %p558 = scmp.eq.s32.totalorder %s23, 0
      // Predicated region
      $region69: #{vit_forward.4} parent=67 // pred_check
        %p559 = pneg %p558
      $region70: #{vit_forward.4} parent=67 // pred_check_branch
        %561 = sbr.rel (%p559) target = $region72
      $region71: #{vit_forward.4} parent=67 // pred_region
        %v562 = vld [vmem:[%s0] sm:$0x1f]
        %v563 = vld [vmem:[%s0 + $0x8] sm:$0x1f]
        %vm564 = vcmask 258048
        %565 = vst.msk [vmem:[%s12] sm:$0x1f] %vm564, %v562
        %566 = vst.msk [vmem:[%s12 + $0x8] sm:$0x1f] %vm564, %v563
      $region72: #{vit_forward.4} parent=67 // pred_fallthru
        _
      %v567 = vld [vmem:[%s518] sm:$0x1]
      %v568 = vld [vmem:[%s521] sm:$0x1]
      %v569 = vld [vmem:[%s537] sm:$0x1]
      %v570 = vld [vmem:[%s540] sm:$0x1]
      %v571 = vld [vmem:[%s526] sm:$0xf]
      %v572 = vld [vmem:[%s526 + $0x4] sm:$0xf]
      %v573 = vld [vmem:[%s526 + $0x8] sm:$0xf]
      %v574 = vld [vmem:[%s526 + $0xc] sm:$0xf]
      %v575 = vld [vmem:[%s531] sm:$0xf]
      %v576 = vld [vmem:[%s531 + $0x4] sm:$0xf]
      %v577 = vld [vmem:[%s531 + $0x8] sm:$0xf]
      %v578 = vld [vmem:[%s531 + $0xc] sm:$0xf]
      %v579 = vld [vmem:[%s534] sm:$0x1]
      %v580 = vld [vmem:[%s545] sm:$0xf]
      %v581 = vld [vmem:[%s545 + $0x4] sm:$0xf]
      %v582 = vld [vmem:[%s545 + $0x8] sm:$0xf]
      %v583 = vld [vmem:[%s545 + $0xc] sm:$0xf]
      %v584 = vld [vmem:[%s548] sm:$0x1]
      %v585 = vld [vmem:[%s553] sm:$0xf]
      %v586 = vld [vmem:[%s553 + $0x4] sm:$0xf]
      %v587 = vld [vmem:[%s553 + $0x8] sm:$0xf]
      %v588 = vld [vmem:[%s553 + $0xc] sm:$0xf]
      %v589 = vld [vmem:[%s553 + $0x10] sm:$0xf]
      %v590 = vld [vmem:[%s553 + $0x14] sm:$0xf]
      %v591 = vld [vmem:[%s553 + $0x18] sm:$0xf]
      %v592 = vld [vmem:[%s553 + $0x1c] sm:$0xf]
      %v593 = vld [vmem:[%s556] sm:$0x1]
      %v594 = vld [vmem:[%s12] sm:$0x1f]
      %vm595 = vcmask 258048
      %v596 = vsel %vm595, %v594, 0.0
      %597 = vadd.xlane.f32.xlu0 %v596
      %v598 = vpop.xlane.xlu0 %597
      %v599 = vrcp.pop 32.0
      %v600 = vmul.f32 %v598, %v599
      %v601 = vsub.f32 %v594, %v600
      %v602 = vmul.f32 %v601, %v601
      %v603 = vsel %vm595, %v602, 0.0
      %604 = vadd.xlane.f32.xlu0 %v603
      %v605 = vpop.xlane.xlu0 %604
      %v606 = vmul.f32 %v605, %v599
      %v607 = vadd.f32 %v606, 1e-05
      %v608 = vrsqrt.pop %v607
      %v609 = vmul.f32 %v601, %v608
      %v611 = vlaneseq
      %v612 = vshrl.u32 %v611, 7
      %v613 = vsub.s32 0, %v612
      %v614 = vrot.slane %v567, %v613
      %v616 = vmul.f32 %v609, %v614
      %v618 = vlaneseq
      %v619 = vshrl.u32 %v618, 7
      %v620 = vsub.s32 0, %v619
      %v621 = vrot.slane %v568, %v620
      %v623 = vadd.f32 %v616, %v621
      %v624 = vpack.c.bf16 %v623, %v623
      %v629 = vunpack.c.l.b16 %v571
      %v630 = vunpack.c.l.b16 %v572
      %v631 = vunpack.c.l.b16 %v573
      %v632 = vunpack.c.l.b16 %v574
      %v633 = vpack.c.b16 %v630, %v629
      %v634 = vpack.c.b16 %v632, %v631
      %vm637 = vcmask 261120
      %v639 = vsel %vm637, %v624, 0
      %641 = vmatprep.subr.bf16.mxu0 0
      %642 = vmatpush1.bf16.msra.mxu0 0
      %643 = vmatprep.subr.bf16.mxu0 0
      %644 = vmatpush1.bf16.msra.mxu0 0
      %645 = vmatprep.subr.bf16.mxu0 0
      %646 = vmatpush1.bf16.msra.mxu0 0
      %647 = vmatprep.subr.bf16.mxu0 0
      %648 = vmatpush1.bf16.msra.mxu0 0
      %649 = vmatprep.subr.bf16.mxu0 0
      %650 = vmatpush1.bf16.msra.mxu0 0
      %651 = vmatprep.subr.bf16.mxu0 0
      %652 = vmatpush1.bf16.msra.mxu0 0
      %653 = vmatprep.subr.bf16.mxu0 0
      %654 = vmatpush1.bf16.msra.mxu0 %v634
      %655 = vmatprep.subr.bf16.mxu0 0
      %656 = vmatpush1.bf16.msra.mxu0 %v633
      %657 = vmatprep.subr.bf16.mxu0 0
      %658 = vmatpush2.bf16.msra.mxu0 0
      %659 = vmatprep.subr.bf16.mxu0 0
      %660 = vmatpush2.bf16.msra.mxu0 0
      %661 = vmatprep.subr.bf16.mxu0 0
      %662 = vmatpush2.bf16.msra.mxu0 0
      %663 = vmatprep.subr.bf16.mxu0 0
      %664 = vmatpush2.bf16.msra.mxu0 0
      %665 = vmatprep.subr.bf16.mxu0 0
      %666 = vmatpush2.bf16.msra.mxu0 0
      %667 = vmatprep.subr.bf16.mxu0 0
      %668 = vmatpush2.bf16.msra.mxu0 0
      %669 = vmatprep.subr.bf16.mxu0 0
      %670 = vmatpush2.bf16.msra.mxu0 0
      %671 = vmatprep.subr.bf16.mxu0 0
      %672 = vmatpush2.bf16.msra.mxu0 0
      %673 = vmatprep.mubr.bf16.mxu0 0
      %674 = vmatmul.mubr.bf16.gmra.mxu0 %v639
      %v675 = vpop.f32.mrf.mxu0
      %v676 = vadd.f32 0.0, %v675
      %v677 = vpop.f32.mrf.mxu0
      %v678 = vpop.f32.mrf.mxu0
      %v679 = vpop.f32.mrf.mxu0
      %680 = vdwg.mxu0
      %v681 = vpack.c.bf16 %v676, %v676
      %683 = vrot.lane.b32.xlu0 %v681, 96
      %v684 = vpop.permute.xlu0 %683
      %vm685 = vcmask 64512
      %v687 = vsel %vm685, %v681, 0
      %v690 = vsel %vm685, %v684, 0
      %692 = vmatprep.subr.bf16.mxu0 0
      %693 = vmatpush1.bf16.xpose.msra.mxu0 0
      %694 = vmatprep.subr.bf16.mxu0 0
      %695 = vmatpush1.bf16.xpose.msra.mxu0 0
      %696 = vmatprep.subr.bf16.mxu0 0
      %697 = vmatpush1.bf16.xpose.msra.mxu0 0
      %698 = vmatprep.subr.bf16.mxu0 0
      %699 = vmatpush1.bf16.xpose.msra.mxu0 0
      %700 = vmatprep.subr.bf16.mxu0 0
      %701 = vmatpush1.bf16.xpose.msra.mxu0 0
      %702 = vmatprep.subr.bf16.mxu0 0
      %703 = vmatpush1.bf16.xpose.msra.mxu0 0
      %704 = vmatprep.subr.bf16.mxu0 0
      %705 = vmatpush1.bf16.xpose.msra.mxu0 0
      %706 = vmatprep.subr.bf16.mxu0 0
      %707 = vmatpush1.bf16.xpose.msra.mxu0 %v690
      %708 = vmatprep.subr.bf16.mxu0 0
      %709 = vmatpush2.bf16.xpose.msra.mxu0 0
      %710 = vmatprep.subr.bf16.mxu0 0
      %711 = vmatpush2.bf16.xpose.msra.mxu0 0
      %712 = vmatprep.subr.bf16.mxu0 0
      %713 = vmatpush2.bf16.xpose.msra.mxu0 0
      %714 = vmatprep.subr.bf16.mxu0 0
      %715 = vmatpush2.bf16.xpose.msra.mxu0 0
      %716 = vmatprep.subr.bf16.mxu0 0
      %717 = vmatpush2.bf16.xpose.msra.mxu0 0
      %718 = vmatprep.subr.bf16.mxu0 0
      %719 = vmatpush2.bf16.xpose.msra.mxu0 0
      %720 = vmatprep.subr.bf16.mxu0 0
      %721 = vmatpush2.bf16.xpose.msra.mxu0 0
      %722 = vmatprep.subr.bf16.mxu0 0
      %723 = vmatpush2.bf16.xpose.msra.mxu0 0
      %724 = vmatprep.mubr.bf16.mxu0 0
      %725 = vmatmul.mubr.bf16.gmra.mxu0 %v687
      %v726 = vpop.f32.mrf.mxu0
      %v727 = vadd.f32 0.0, %v726
      %v728 = vpop.f32.mrf.mxu0
      %v729 = vpop.f32.mrf.mxu0
      %v730 = vpop.f32.mrf.mxu0
      %731 = vdwg.mxu0
      %v732 = vmul.f32 %v727, 0.35355338
      %vm733 = vcmask 36864
      %v734 = vsel %vm733, %v732, -inf
      %735 = vmax.xlane.f32.xlu0 %v734
      %v736 = vpop.xlane.xlu0 %735
      %v737 = vsub.f32 %v732, %v736
      %v738 = vmul.f32 %v737, 1.442695
      %v739 = vpow.pop %v738
      %v740 = vsel %vm733, %v739, 0.0
      %741 = vadd.xlane.f32.xlu0 %v740
      %v742 = vpop.xlane.xlu0 %741
      %v743 = vrcp.pop %v742
      %v744 = vmul.f32 %v739, %v743
      %v745 = vpack.c.bf16 %v744, %v744
      %746 = vrot.lane.b32.xlu0 %v681, 64
      %v747 = vpop.permute.xlu0 %746
      %vm748 = vcmask 39936
      %v750 = vsel %vm748, %v745, 0
      %vm752 = vcmask 1041408
      %vm753 = vcmask 1042432
      %v754 = vsel %vm752, 4294967295, 65535
      %v755 = vsel %vm753, %v754, 0
      %v757 = vand.u32 %v747, %v755
      %759 = vmatprep.subr.bf16.mxu0 0
      %760 = vmatpush1.bf16.msra.mxu0 0
      %761 = vmatprep.subr.bf16.mxu0 0
      %762 = vmatpush1.bf16.msra.mxu0 0
      %763 = vmatprep.subr.bf16.mxu0 0
      %764 = vmatpush1.bf16.msra.mxu0 0
      %765 = vmatprep.subr.bf16.mxu0 0
      %766 = vmatpush1.bf16.msra.mxu0 0
      %767 = vmatprep.subr.bf16.mxu0 0
      %768 = vmatpush1.bf16.msra.mxu0 0
      %769 = vmatprep.subr.bf16.mxu0 0
      %770 = vmatpush1.bf16.msra.mxu0 0
      %771 = vmatprep.subr.bf16.mxu0 0
      %772 = vmatpush1.bf16.msra.mxu0 0
      %773 = vmatprep.subr.bf16.mxu0 0
      %774 = vmatpush1.bf16.msra.mxu0 %v757
      %775 = vmatprep.subr.bf16.mxu0 0
      %776 = vmatpush2.bf16.msra.mxu0 0
      %777 = vmatprep.subr.bf16.mxu0 0
      %778 = vmatpush2.bf16.msra.mxu0 0
      %779 = vmatprep.subr.bf16.mxu0 0
      %780 = vmatpush2.bf16.msra.mxu0 0
      %781 = vmatprep.subr.bf16.mxu0 0
      %782 = vmatpush2.bf16.msra.mxu0 0
      %783 = vmatprep.subr.bf16.mxu0 0
      %784 = vmatpush2.bf16.msra.mxu0 0
      %785 = vmatprep.subr.bf16.mxu0 0
      %786 = vmatpush2.bf16.msra.mxu0 0
      %787 = vmatprep.subr.bf16.mxu0 0
      %788 = vmatpush2.bf16.msra.mxu0 0
      %789 = vmatprep.subr.bf16.mxu0 0
      %790 = vmatpush2.bf16.msra.mxu0 0
      %791 = vmatprep.mubr.bf16.mxu0 0
      %792 = vmatmul.mubr.bf16.gmra.mxu0 %v750
      %v793 = vpop.f32.mrf.mxu0
      %v794 = vadd.f32 0.0, %v793
      %v795 = vpop.f32.mrf.mxu0
      %v796 = vpop.f32.mrf.mxu0
      %v797 = vpop.f32.mrf.mxu0
      %798 = vdwg.mxu0
      %799 = vrot.lane.b32.xlu0 %v681, 120
      %v800 = vpop.permute.xlu0 %799
      %801 = vrot.lane.b32.xlu0 %v681, 88
      %v802 = vpop.permute.xlu0 %801
      %v804 = vsel %vm685, %v800, 0
      %v807 = vsel %vm685, %v802, 0
      %809 = vmatprep.subr.bf16.mxu0 0
      %810 = vmatpush1.bf16.xpose.msra.mxu0 0
      %811 = vmatprep.subr.bf16.mxu0 0
      %812 = vmatpush1.bf16.xpose.msra.mxu0 0
      %813 = vmatprep.subr.bf16.mxu0 0
      %814 = vmatpush1.bf16.xpose.msra.mxu0 0
      %815 = vmatprep.subr.bf16.mxu0 0
      %816 = vmatpush1.bf16.xpose.msra.mxu0 0
      %817 = vmatprep.subr.bf16.mxu0 0
      %818 = vmatpush1.bf16.xpose.msra.mxu0 0
      %819 = vmatprep.subr.bf16.mxu0 0
      %820 = vmatpush1.bf16.xpose.msra.mxu0 0
      %821 = vmatprep.subr.bf16.mxu0 0
      %822 = vmatpush1.bf16.xpose.msra.mxu0 0
      %823 = vmatprep.subr.bf16.mxu0 0
      %824 = vmatpush1.bf16.xpose.msra.mxu0 %v807
      %825 = vmatprep.subr.bf16.mxu0 0
      %826 = vmatpush2.bf16.xpose.msra.mxu0 0
      %827 = vmatprep.subr.bf16.mxu0 0
      %828 = vmatpush2.bf16.xpose.msra.mxu0 0
      %829 = vmatprep.subr.bf16.mxu0 0
      %830 = vmatpush2.bf16.xpose.msra.mxu0 0
      %831 = vmatprep.subr.bf16.mxu0 0
      %832 = vmatpush2.bf16.xpose.msra.mxu0 0
      %833 = vmatprep.subr.bf16.mxu0 0
      %834 = vmatpush2.bf16.xpose.msra.mxu0 0
      %835 = vmatprep.subr.bf16.mxu0 0
      %836 = vmatpush2.bf16.xpose.msra.mxu0 0
      %837 = vmatprep.subr.bf16.mxu0 0
      %838 = vmatpush2.bf16.xpose.msra.mxu0 0
      %839 = vmatprep.subr.bf16.mxu0 0
      %840 = vmatpush2.bf16.xpose.msra.mxu0 0
      %841 = vmatprep.mubr.bf16.mxu0 0
      %842 = vmatmul.mubr.bf16.gmra.mxu0 %v804
      %v843 = vpop.f32.mrf.mxu0
      %v844 = vadd.f32 0.0, %v843
      %v845 = vpop.f32.mrf.mxu0
      %v846 = vpop.f32.mrf.mxu0
      %v847 = vpop.f32.mrf.mxu0
      %848 = vdwg.mxu0
      %v849 = vmul.f32 %v844, 0.35355338
      %v850 = vsel %vm733, %v849, -inf
      %851 = vmax.xlane.f32.xlu0 %v850
      %v852 = vpop.xlane.xlu0 %851
      %v853 = vsub.f32 %v849, %v852
      %v854 = vmul.f32 %v853, 1.442695
      %v855 = vpow.pop %v854
      %v856 = vsel %vm733, %v855, 0.0
      %857 = vadd.xlane.f32.xlu0 %v856
      %v858 = vpop.xlane.xlu0 %857
      %v859 = vrcp.pop %v858
      %v860 = vmul.f32 %v855, %v859
      %v861 = vpack.c.bf16 %v860, %v860
      %862 = vrot.lane.b32.xlu0 %v681, 56
      %v863 = vpop.permute.xlu0 %862
      %v865 = vsel %vm748, %v861, 0
      %v868 = vand.u32 %v863, %v755
      %870 = vmatprep.subr.bf16.mxu0 0
      %871 = vmatpush1.bf16.msra.mxu0 0
      %872 = vmatprep.subr.bf16.mxu0 0
      %873 = vmatpush1.bf16.msra.mxu0 0
      %874 = vmatprep.subr.bf16.mxu0 0
      %875 = vmatpush1.bf16.msra.mxu0 0
      %876 = vmatprep.subr.bf16.mxu0 0
      %877 = vmatpush1.bf16.msra.mxu0 0
      %878 = vmatprep.subr.bf16.mxu0 0
      %879 = vmatpush1.bf16.msra.mxu0 0
      %880 = vmatprep.subr.bf16.mxu0 0
      %881 = vmatpush1.bf16.msra.mxu0 0
      %882 = vmatprep.subr.bf16.mxu0 0
      %883 = vmatpush1.bf16.msra.mxu0 0
      %884 = vmatprep.subr.bf16.mxu0 0
      %885 = vmatpush1.bf16.msra.mxu0 %v868
      %886 = vmatprep.subr.bf16.mxu0 0
      %887 = vmatpush2.bf16.msra.mxu0 0
      %888 = vmatprep.subr.bf16.mxu0 0
      %889 = vmatpush2.bf16.msra.mxu0 0
      %890 = vmatprep.subr.bf16.mxu0 0
      %891 = vmatpush2.bf16.msra.mxu0 0
      %892 = vmatprep.subr.bf16.mxu0 0
      %893 = vmatpush2.bf16.msra.mxu0 0
      %894 = vmatprep.subr.bf16.mxu0 0
      %895 = vmatpush2.bf16.msra.mxu0 0
      %896 = vmatprep.subr.bf16.mxu0 0
      %897 = vmatpush2.bf16.msra.mxu0 0
      %898 = vmatprep.subr.bf16.mxu0 0
      %899 = vmatpush2.bf16.msra.mxu0 0
      %900 = vmatprep.subr.bf16.mxu0 0
      %901 = vmatpush2.bf16.msra.mxu0 0
      %902 = vmatprep.mubr.bf16.mxu0 0
      %903 = vmatmul.mubr.bf16.gmra.mxu0 %v865
      %v904 = vpop.f32.mrf.mxu0
      %v905 = vadd.f32 0.0, %v904
      %v906 = vpop.f32.mrf.mxu0
      %v907 = vpop.f32.mrf.mxu0
      %v908 = vpop.f32.mrf.mxu0
      %909 = vdwg.mxu0
      %910 = vrot.lane.b32.xlu0 %v681, 112
      %v911 = vpop.permute.xlu0 %910
      %912 = vrot.lane.b32.xlu0 %v681, 80
      %v913 = vpop.permute.xlu0 %912
      %v915 = vsel %vm685, %v911, 0
      %v918 = vsel %vm685, %v913, 0
      %920 = vmatprep.subr.bf16.mxu0 0
      %921 = vmatpush1.bf16.xpose.msra.mxu0 0
      %922 = vmatprep.subr.bf16.mxu0 0
      %923 = vmatpush1.bf16.xpose.msra.mxu0 0
      %924 = vmatprep.subr.bf16.mxu0 0
      %925 = vmatpush1.bf16.xpose.msra.mxu0 0
      %926 = vmatprep.subr.bf16.mxu0 0
      %927 = vmatpush1.bf16.xpose.msra.mxu0 0
      %928 = vmatprep.subr.bf16.mxu0 0
      %929 = vmatpush1.bf16.xpose.msra.mxu0 0
      %930 = vmatprep.subr.bf16.mxu0 0
      %931 = vmatpush1.bf16.xpose.msra.mxu0 0
      %932 = vmatprep.subr.bf16.mxu0 0
      %933 = vmatpush1.bf16.xpose.msra.mxu0 0
      %934 = vmatprep.subr.bf16.mxu0 0
      %935 = vmatpush1.bf16.xpose.msra.mxu0 %v918
      %936 = vmatprep.subr.bf16.mxu0 0
      %937 = vmatpush2.bf16.xpose.msra.mxu0 0
      %938 = vmatprep.subr.bf16.mxu0 0
      %939 = vmatpush2.bf16.xpose.msra.mxu0 0
      %940 = vmatprep.subr.bf16.mxu0 0
      %941 = vmatpush2.bf16.xpose.msra.mxu0 0
      %942 = vmatprep.subr.bf16.mxu0 0
      %943 = vmatpush2.bf16.xpose.msra.mxu0 0
      %944 = vmatprep.subr.bf16.mxu0 0
      %945 = vmatpush2.bf16.xpose.msra.mxu0 0
      %946 = vmatprep.subr.bf16.mxu0 0
      %947 = vmatpush2.bf16.xpose.msra.mxu0 0
      %948 = vmatprep.subr.bf16.mxu0 0
      %949 = vmatpush2.bf16.xpose.msra.mxu0 0
      %950 = vmatprep.subr.bf16.mxu0 0
      %951 = vmatpush2.bf16.xpose.msra.mxu0 0
      %952 = vmatprep.mubr.bf16.mxu0 0
      %953 = vmatmul.mubr.bf16.gmra.mxu0 %v915
      %v954 = vpop.f32.mrf.mxu0
      %v955 = vadd.f32 0.0, %v954
      %v956 = vpop.f32.mrf.mxu0
      %v957 = vpop.f32.mrf.mxu0
      %v958 = vpop.f32.mrf.mxu0
      %959 = vdwg.mxu0
      %v960 = vmul.f32 %v955, 0.35355338
      %v961 = vsel %vm733, %v960, -inf
      %962 = vmax.xlane.f32.xlu0 %v961
      %v963 = vpop.xlane.xlu0 %962
      %v964 = vsub.f32 %v960, %v963
      %v965 = vmul.f32 %v964, 1.442695
      %v966 = vpow.pop %v965
      %v967 = vsel %vm733, %v966, 0.0
      %968 = vadd.xlane.f32.xlu0 %v967
      %v969 = vpop.xlane.xlu0 %968
      %v970 = vrcp.pop %v969
      %v971 = vmul.f32 %v966, %v970
      %v972 = vpack.c.bf16 %v971, %v971
      %973 = vrot.lane.b32.xlu0 %v681, 48
      %v974 = vpop.permute.xlu0 %973
      %v976 = vsel %vm748, %v972, 0
      %v979 = vand.u32 %v974, %v755
      %981 = vmatprep.subr.bf16.mxu0 0
      %982 = vmatpush1.bf16.msra.mxu0 0
      %983 = vmatprep.subr.bf16.mxu0 0
      %984 = vmatpush1.bf16.msra.mxu0 0
      %985 = vmatprep.subr.bf16.mxu0 0
      %986 = vmatpush1.bf16.msra.mxu0 0
      %987 = vmatprep.subr.bf16.mxu0 0
      %988 = vmatpush1.bf16.msra.mxu0 0
      %989 = vmatprep.subr.bf16.mxu0 0
      %990 = vmatpush1.bf16.msra.mxu0 0
      %991 = vmatprep.subr.bf16.mxu0 0
      %992 = vmatpush1.bf16.msra.mxu0 0
      %993 = vmatprep.subr.bf16.mxu0 0
      %994 = vmatpush1.bf16.msra.mxu0 0
      %995 = vmatprep.subr.bf16.mxu0 0
      %996 = vmatpush1.bf16.msra.mxu0 %v979
      %997 = vmatprep.subr.bf16.mxu0 0
      %998 = vmatpush2.bf16.msra.mxu0 0
      %999 = vmatprep.subr.bf16.mxu0 0
      %1000 = vmatpush2.bf16.msra.mxu0 0
      %1001 = vmatprep.subr.bf16.mxu0 0
      %1002 = vmatpush2.bf16.msra.mxu0 0
      %1003 = vmatprep.subr.bf16.mxu0 0
      %1004 = vmatpush2.bf16.msra.mxu0 0
      %1005 = vmatprep.subr.bf16.mxu0 0
      %1006 = vmatpush2.bf16.msra.mxu0 0
      %1007 = vmatprep.subr.bf16.mxu0 0
      %1008 = vmatpush2.bf16.msra.mxu0 0
      %1009 = vmatprep.subr.bf16.mxu0 0
      %1010 = vmatpush2.bf16.msra.mxu0 0
      %1011 = vmatprep.subr.bf16.mxu0 0
      %1012 = vmatpush2.bf16.msra.mxu0 0
      %1013 = vmatprep.mubr.bf16.mxu0 0
      %1014 = vmatmul.mubr.bf16.gmra.mxu0 %v976
      %v1015 = vpop.f32.mrf.mxu0
      %v1016 = vadd.f32 0.0, %v1015
      %v1017 = vpop.f32.mrf.mxu0
      %v1018 = vpop.f32.mrf.mxu0
      %v1019 = vpop.f32.mrf.mxu0
      %1020 = vdwg.mxu0
      %1021 = vrot.lane.b32.xlu0 %v681, 104
      %v1022 = vpop.permute.xlu0 %1021
      %1023 = vrot.lane.b32.xlu0 %v681, 72
      %v1024 = vpop.permute.xlu0 %1023
      %v1026 = vsel %vm685, %v1022, 0
      %v1029 = vsel %vm685, %v1024, 0
      %1031 = vmatprep.subr.bf16.mxu0 0
      %1032 = vmatpush1.bf16.xpose.msra.mxu0 0
      %1033 = vmatprep.subr.bf16.mxu0 0
      %1034 = vmatpush1.bf16.xpose.msra.mxu0 0
      %1035 = vmatprep.subr.bf16.mxu0 0
      %1036 = vmatpush1.bf16.xpose.msra.mxu0 0
      %1037 = vmatprep.subr.bf16.mxu0 0
      %1038 = vmatpush1.bf16.xpose.msra.mxu0 0
      %1039 = vmatprep.subr.bf16.mxu0 0
      %1040 = vmatpush1.bf16.xpose.msra.mxu0 0
      %1041 = vmatprep.subr.bf16.mxu0 0
      %1042 = vmatpush1.bf16.xpose.msra.mxu0 0
      %1043 = vmatprep.subr.bf16.mxu0 0
      %1044 = vmatpush1.bf16.xpose.msra.mxu0 0
      %1045 = vmatprep.subr.bf16.mxu0 0
      %1046 = vmatpush1.bf16.xpose.msra.mxu0 %v1029
      %1047 = vmatprep.subr.bf16.mxu0 0
      %1048 = vmatpush2.bf16.xpose.msra.mxu0 0
      %1049 = vmatprep.subr.bf16.mxu0 0
      %1050 = vmatpush2.bf16.xpose.msra.mxu0 0
      %1051 = vmatprep.subr.bf16.mxu0 0
      %1052 = vmatpush2.bf16.xpose.msra.mxu0 0
      %1053 = vmatprep.subr.bf16.mxu0 0
      %1054 = vmatpush2.bf16.xpose.msra.mxu0 0
      %1055 = vmatprep.subr.bf16.mxu0 0
      %1056 = vmatpush2.bf16.xpose.msra.mxu0 0
      %1057 = vmatprep.subr.bf16.mxu0 0
      %1058 = vmatpush2.bf16.xpose.msra.mxu0 0
      %1059 = vmatprep.subr.bf16.mxu0 0
      %1060 = vmatpush2.bf16.xpose.msra.mxu0 0
      %1061 = vmatprep.subr.bf16.mxu0 0
      %1062 = vmatpush2.bf16.xpose.msra.mxu0 0
      %1063 = vmatprep.mubr.bf16.mxu0 0
      %1064 = vmatmul.mubr.bf16.gmra.mxu0 %v1026
      %v1065 = vpop.f32.mrf.mxu0
      %v1066 = vadd.f32 0.0, %v1065
      %v1067 = vpop.f32.mrf.mxu0
      %v1068 = vpop.f32.mrf.mxu0
      %v1069 = vpop.f32.mrf.mxu0
      %1070 = vdwg.mxu0
      %v1071 = vmul.f32 %v1066, 0.35355338
      %v1072 = vsel %vm733, %v1071, -inf
      %1073 = vmax.xlane.f32.xlu0 %v1072
      %v1074 = vpop.xlane.xlu0 %1073
      %v1075 = vsub.f32 %v1071, %v1074
      %v1076 = vmul.f32 %v1075, 1.442695
      %v1077 = vpow.pop %v1076
      %v1078 = vsel %vm733, %v1077, 0.0
      %1079 = vadd.xlane.f32.xlu0 %v1078
      %v1080 = vpop.xlane.xlu0 %1079
      %v1081 = vrcp.pop %v1080
      %v1082 = vmul.f32 %v1077, %v1081
      %v1083 = vpack.c.bf16 %v1082, %v1082
      %1084 = vrot.lane.b32.xlu0 %v681, 40
      %v1085 = vpop.permute.xlu0 %1084
      %v1087 = vsel %vm748, %v1083, 0
      %v1090 = vand.u32 %v1085, %v755
      %1092 = vmatprep.subr.bf16.mxu0 0
      %1093 = vmatpush1.bf16.msra.mxu0 0
      %1094 = vmatprep.subr.bf16.mxu0 0
      %1095 = vmatpush1.bf16.msra.mxu0 0
      %1096 = vmatprep.subr.bf16.mxu0 0
      %1097 = vmatpush1.bf16.msra.mxu0 0
      %1098 = vmatprep.subr.bf16.mxu0 0
      %1099 = vmatpush1.bf16.msra.mxu0 0
      %1100 = vmatprep.subr.bf16.mxu0 0
      %1101 = vmatpush1.bf16.msra.mxu0 0
      %1102 = vmatprep.subr.bf16.mxu0 0
      %1103 = vmatpush1.bf16.msra.mxu0 0
      %1104 = vmatprep.subr.bf16.mxu0 0
      %1105 = vmatpush1.bf16.msra.mxu0 0
      %1106 = vmatprep.subr.bf16.mxu0 0
      %1107 = vmatpush1.bf16.msra.mxu0 %v1090
      %1108 = vmatprep.subr.bf16.mxu0 0
      %1109 = vmatpush2.bf16.msra.mxu0 0
      %1110 = vmatprep.subr.bf16.mxu0 0
      %1111 = vmatpush2.bf16.msra.mxu0 0
      %1112 = vmatprep.subr.bf16.mxu0 0
      %1113 = vmatpush2.bf16.msra.mxu0 0
      %1114 = vmatprep.subr.bf16.mxu0 0
      %1115 = vmatpush2.bf16.msra.mxu0 0
      %1116 = vmatprep.subr.bf16.mxu0 0
      %1117 = vmatpush2.bf16.msra.mxu0 0
      %1118 = vmatprep.subr.bf16.mxu0 0
      %1119 = vmatpush2.bf16.msra.mxu0 0
      %1120 = vmatprep.subr.bf16.mxu0 0
      %1121 = vmatpush2.bf16.msra.mxu0 0
      %1122 = vmatprep.subr.bf16.mxu0 0
      %1123 = vmatpush2.bf16.msra.mxu0 0
      %1124 = vmatprep.mubr.bf16.mxu0 0
      %1125 = vmatmul.mubr.bf16.gmra.mxu0 %v1087
      %v1126 = vpop.f32.mrf.mxu0
      %v1127 = vadd.f32 0.0, %v1126
      %v1128 = vpop.f32.mrf.mxu0
      %v1129 = vpop.f32.mrf.mxu0
      %v1130 = vpop.f32.mrf.mxu0
      %1131 = vdwg.mxu0
      %1133 = vrot.lane.b32.xlu0 %v905, 8
      %v1134 = vpop.permute.xlu0 %1133
      %1137 = vrot.lane.b32.xlu0 %v1016, 16
      %v1138 = vpop.permute.xlu0 %1137
      %1141 = vrot.lane.b32.xlu0 %v1127, 24
      %v1142 = vpop.permute.xlu0 %1141
      %v1144 = vsel %vm685, %v794, %v1134
      %vm1145 = vcmask 130048
      %v1146 = vsel %vm1145, %v1144, %v1138
      %vm1147 = vcmask 195584
      %v1148 = vsel %vm1147, %v1146, %v1142
      %v1149 = vpack.c.bf16 %v1148, %v1148
      %v1151 = vlaneseq
      %v1152 = vshrl.u32 %v1151, 7
      %v1153 = vsub.s32 0, %v1152
      %v1154 = vrot.slane %v579, %v1153
      %v1160 = vunpack.c.l.b16 %v575
      %v1161 = vunpack.c.l.b16 %v576
      %v1162 = vunpack.c.l.b16 %v577
      %v1163 = vunpack.c.l.b16 %v578
      %v1164 = vpack.c.b16 %v1161, %v1160
      %v1165 = vpack.c.b16 %v1163, %v1162
      %v1169 = vsel %vm637, %v1149, 0
      %1171 = vmatprep.subr.bf16.mxu0 0
      %1172 = vmatpush1.bf16.msra.mxu0 0
      %1173 = vmatprep.subr.bf16.mxu0 0
      %1174 = vmatpush1.bf16.msra.mxu0 0
      %1175 = vmatprep.subr.bf16.mxu0 0
      %1176 = vmatpush1.bf16.msra.mxu0 0
      %1177 = vmatprep.subr.bf16.mxu0 0
      %1178 = vmatpush1.bf16.msra.mxu0 0
      %1179 = vmatprep.subr.bf16.mxu0 0
      %1180 = vmatpush1.bf16.msra.mxu0 0
      %1181 = vmatprep.subr.bf16.mxu0 0
      %1182 = vmatpush1.bf16.msra.mxu0 0
      %1183 = vmatprep.subr.bf16.mxu0 0
      %1184 = vmatpush1.bf16.msra.mxu0 %v1165
      %1185 = vmatprep.subr.bf16.mxu0 0
      %1186 = vmatpush1.bf16.msra.mxu0 %v1164
      %1187 = vmatprep.subr.bf16.mxu0 0
      %1188 = vmatpush2.bf16.msra.mxu0 0
      %1189 = vmatprep.subr.bf16.mxu0 0
      %1190 = vmatpush2.bf16.msra.mxu0 0
      %1191 = vmatprep.subr.bf16.mxu0 0
      %1192 = vmatpush2.bf16.msra.mxu0 0
      %1193 = vmatprep.subr.bf16.mxu0 0
      %1194 = vmatpush2.bf16.msra.mxu0 0
      %1195 = vmatprep.subr.bf16.mxu0 0
      %1196 = vmatpush2.bf16.msra.mxu0 0
      %1197 = vmatprep.subr.bf16.mxu0 0
      %1198 = vmatpush2.bf16.msra.mxu0 0
      %1199 = vmatprep.subr.bf16.mxu0 0
      %1200 = vmatpush2.bf16.msra.mxu0 0
      %1201 = vmatprep.subr.bf16.mxu0 0
      %1202 = vmatpush2.bf16.msra.mxu0 0
      %1203 = vmatprep.mubr.bf16.mxu0 0
      %1204 = vmatmul.mubr.bf16.gmra.mxu0 %v1169
      %v1205 = vpop.f32.mrf.mxu0
      %v1206 = vadd.f32 %v1154, %v1205
      %v1207 = vpop.f32.mrf.mxu0
      %v1208 = vpop.f32.mrf.mxu0
      %v1209 = vpop.f32.mrf.mxu0
      %1210 = vdwg.mxu0
      %v1211 = vadd.f32 %v1206, %v594
      %v1212 = vsel %vm595, %v1211, 0.0
      %1213 = vadd.xlane.f32.xlu0 %v1212
      %v1214 = vpop.xlane.xlu0 %1213
      %v1215 = vmul.f32 %v1214, %v599
      %v1216 = vsub.f32 %v1211, %v1215
      %v1217 = vmul.f32 %v1216, %v1216
      %v1218 = vsel %vm595, %v1217, 0.0
      %1219 = vadd.xlane.f32.xlu0 %v1218
      %v1220 = vpop.xlane.xlu0 %1219
      %v1221 = vmul.f32 %v1220, %v599
      %v1222 = vadd.f32 %v1221, 1e-05
      %v1223 = vrsqrt.pop %v1222
      %v1224 = vmul.f32 %v1216, %v1223
      %v1226 = vlaneseq
      %v1227 = vshrl.u32 %v1226, 7
      %v1228 = vsub.s32 0, %v1227
      %v1229 = vrot.slane %v569, %v1228
      %v1231 = vmul.f32 %v1224, %v1229
      %v1233 = vlaneseq
      %v1234 = vshrl.u32 %v1233, 7
      %v1235 = vsub.s32 0, %v1234
      %v1236 = vrot.slane %v570, %v1235
      %v1238 = vadd.f32 %v1231, %v1236
      %v1239 = vpack.c.bf16 %v1238, %v1238
      %v1241 = vlaneseq
      %v1242 = vshrl.u32 %v1241, 7
      %v1243 = vsub.s32 0, %v1242
      %v1244 = vrot.slane %v584, %v1243
      %v1250 = vunpack.c.l.b16 %v580
      %v1251 = vunpack.c.l.b16 %v581
      %v1252 = vunpack.c.l.b16 %v582
      %v1253 = vunpack.c.l.b16 %v583
      %v1254 = vpack.c.b16 %v1251, %v1250
      %v1255 = vpack.c.b16 %v1253, %v1252
      %v1259 = vsel %vm637, %v1239, 0
      %1261 = vmatprep.subr.bf16.mxu0 0
      %1262 = vmatpush1.bf16.msra.mxu0 0
      %1263 = vmatprep.subr.bf16.mxu0 0
      %1264 = vmatpush1.bf16.msra.mxu0 0
      %1265 = vmatprep.subr.bf16.mxu0 0
      %1266 = vmatpush1.bf16.msra.mxu0 0
      %1267 = vmatprep.subr.bf16.mxu0 0
      %1268 = vmatpush1.bf16.msra.mxu0 0
      %1269 = vmatprep.subr.bf16.mxu0 0
      %1270 = vmatpush1.bf16.msra.mxu0 0
      %1271 = vmatprep.subr.bf16.mxu0 0
      %1272 = vmatpush1.bf16.msra.mxu0 0
      %1273 = vmatprep.subr.bf16.mxu0 0
      %1274 = vmatpush1.bf16.msra.mxu0 %v1255
      %1275 = vmatprep.subr.bf16.mxu0 0
      %1276 = vmatpush1.bf16.msra.mxu0 %v1254
      %1277 = vmatprep.subr.bf16.mxu0 0
      %1278 = vmatpush2.bf16.msra.mxu0 0
      %1279 = vmatprep.subr.bf16.mxu0 0
      %1280 = vmatpush2.bf16.msra.mxu0 0
      %1281 = vmatprep.subr.bf16.mxu0 0
      %1282 = vmatpush2.bf16.msra.mxu0 0
      %1283 = vmatprep.subr.bf16.mxu0 0
      %1284 = vmatpush2.bf16.msra.mxu0 0
      %1285 = vmatprep.subr.bf16.mxu0 0
      %1286 = vmatpush2.bf16.msra.mxu0 0
      %1287 = vmatprep.subr.bf16.mxu0 0
      %1288 = vmatpush2.bf16.msra.mxu0 0
      %1289 = vmatprep.subr.bf16.mxu0 0
      %1290 = vmatpush2.bf16.msra.mxu0 0
      %1291 = vmatprep.subr.bf16.mxu0 0
      %1292 = vmatpush2.bf16.msra.mxu0 0
      %1293 = vmatprep.mubr.bf16.mxu0 0
      %1294 = vmatmul.mubr.bf16.gmra.mxu0 %v1259
      %v1295 = vpop.f32.mrf.mxu0
      %v1296 = vadd.f32 %v1244, %v1295
      %v1297 = vpop.f32.mrf.mxu0
      %v1298 = vpop.f32.mrf.mxu0
      %v1299 = vpop.f32.mrf.mxu0
      %1300 = vdwg.mxu0
      %v1301 = vmul.f32 %v1296, 0.5
      %v1302 = vmul.f32 %v1296, 0.044715
      %v1303 = vmul.f32 %v1302, %v1296
      %v1304 = vmul.f32 %v1303, %v1296
      %v1305 = vadd.f32 %v1296, %v1304
      %v1306 = vmul.f32 %v1305, 0.7978846
      %v1307 = vtanh.pop %v1306
      %v1308 = vadd.f32 %v1307, 1.0
      %v1309 = vmul.f32 %v1301, %v1308
      %v1310 = vpack.c.bf16 %v1309, %v1309
      %v1312 = vlaneseq
      %v1313 = vshrl.u32 %v1312, 7
      %v1314 = vsub.s32 0, %v1313
      %v1315 = vrot.slane %v593, %v1314
      %v1325 = vunpack.c.l.b16 %v585
      %v1326 = vunpack.c.l.b16 %v586
      %v1327 = vunpack.c.l.b16 %v587
      %v1328 = vunpack.c.l.b16 %v588
      %v1329 = vunpack.c.l.b16 %v589
      %v1330 = vunpack.c.l.b16 %v590
      %v1331 = vunpack.c.l.b16 %v591
      %v1332 = vunpack.c.l.b16 %v592
      %v1333 = vpack.c.b16 %v1326, %v1325
      %v1334 = vpack.c.b16 %v1328, %v1327
      %v1335 = vpack.c.b16 %v1330, %v1329
      %v1336 = vpack.c.b16 %v1332, %v1331
      %vm1341 = vcmask 523264
      %v1343 = vsel %vm1341, %v1310, 0
      %1345 = vmatprep.subr.bf16.mxu0 0
      %1346 = vmatpush1.bf16.msra.mxu0 0
      %1347 = vmatprep.subr.bf16.mxu0 0
      %1348 = vmatpush1.bf16.msra.mxu0 0
      %1349 = vmatprep.subr.bf16.mxu0 0
      %1350 = vmatpush1.bf16.msra.mxu0 0
      %1351 = vmatprep.subr.bf16.mxu0 0
      %1352 = vmatpush1.bf16.msra.mxu0 0
      %1353 = vmatprep.subr.bf16.mxu0 0
      %1354 = vmatpush1.bf16.msra.mxu0 %v1336
      %1355 = vmatprep.subr.bf16.mxu0 0
      %1356 = vmatpush1.bf16.msra.mxu0 %v1335
      %1357 = vmatprep.subr.bf16.mxu0 0
      %1358 = vmatpush1.bf16.msra.mxu0 %v1334
      %1359 = vmatprep.subr.bf16.mxu0 0
      %1360 = vmatpush1.bf16.msra.mxu0 %v1333
      %1361 = vmatprep.subr.bf16.mxu0 0
      %1362 = vmatpush2.bf16.msra.mxu0 0
      %1363 = vmatprep.subr.bf16.mxu0 0
      %1364 = vmatpush2.bf16.msra.mxu0 0
      %1365 = vmatprep.subr.bf16.mxu0 0
      %1366 = vmatpush2.bf16.msra.mxu0 0
      %1367 = vmatprep.subr.bf16.mxu0 0
      %1368 = vmatpush2.bf16.msra.mxu0 0
      %1369 = vmatprep.subr.bf16.mxu0 0
      %1370 = vmatpush2.bf16.msra.mxu0 0
      %1371 = vmatprep.subr.bf16.mxu0 0
      %1372 = vmatpush2.bf16.msra.mxu0 0
      %1373 = vmatprep.subr.bf16.mxu0 0
      %1374 = vmatpush2.bf16.msra.mxu0 0
      %1375 = vmatprep.subr.bf16.mxu0 0
      %1376 = vmatpush2.bf16.msra.mxu0 0
      %1377 = vmatprep.mubr.bf16.mxu0 0
      %1378 = vmatmul.mubr.bf16.gmra.mxu0 %v1343
      %v1379 = vpop.f32.mrf.mxu0
      %v1380 = vadd.f32 %v1315, %v1379
      %v1381 = vpop.f32.mrf.mxu0
      %v1382 = vpop.f32.mrf.mxu0
      %v1383 = vpop.f32.mrf.mxu0
      %1384 = vdwg.mxu0
      %v1385 = vadd.f32 %v1380, %v1211
      %1386 = vst.msk [vmem:[%s12] sm:$0x1f] %vm595, %v1385
      %s1387 = scalar_lea.vmem %s12, 8
      %v1388 = vld [vmem:[%s1387] sm:$0x1f]
      %v1389 = vsel %vm595, %v1388, 0.0
      %1390 = vadd.xlane.f32.xlu0 %v1389
      %v1391 = vpop.xlane.xlu0 %1390
      %v1392 = vmul.f32 %v1391, %v599
      %v1393 = vsub.f32 %v1388, %v1392
      %v1394 = vmul.f32 %v1393, %v1393
      %v1395 = vsel %vm595, %v1394, 0.0
      %1396 = vadd.xlane.f32.xlu0 %v1395
      %v1397 = vpop.xlane.xlu0 %1396
      %v1398 = vmul.f32 %v1397, %v599
      %v1399 = vadd.f32 %v1398, 1e-05
      %v1400 = vrsqrt.pop %v1399
      %v1401 = vmul.f32 %v1393, %v1400
      %v1402 = vmul.f32 %v1401, %v614
      %v1403 = vadd.f32 %v1402, %v621
      %v1404 = vpack.c.bf16 %v1403, %v1403
      %v1406 = vsel %vm637, %v1404, 0
      %1408 = vmatprep.subr.bf16.mxu0 0
      %1409 = vmatpush1.bf16.msra.mxu0 0
      %1410 = vmatprep.subr.bf16.mxu0 0
      %1411 = vmatpush1.bf16.msra.mxu0 0
      %1412 = vmatprep.subr.bf16.mxu0 0
      %1413 = vmatpush1.bf16.msra.mxu0 0
      %1414 = vmatprep.subr.bf16.mxu0 0
      %1415 = vmatpush1.bf16.msra.mxu0 0
      %1416 = vmatprep.subr.bf16.mxu0 0
      %1417 = vmatpush1.bf16.msra.mxu0 0
      %1418 = vmatprep.subr.bf16.mxu0 0
      %1419 = vmatpush1.bf16.msra.mxu0 0
      %1420 = vmatprep.subr.bf16.mxu0 0
      %1421 = vmatpush1.bf16.msra.mxu0 %v634
      %1422 = vmatprep.subr.bf16.mxu0 0
      %1423 = vmatpush1.bf16.msra.mxu0 %v633
      %1424 = vmatprep.subr.bf16.mxu0 0
      %1425 = vmatpush2.bf16.msra.mxu0 0
      %1426 = vmatprep.subr.bf16.mxu0 0
      %1427 = vmatpush2.bf16.msra.mxu0 0
      %1428 = vmatprep.subr.bf16.mxu0 0
      %1429 = vmatpush2.bf16.msra.mxu0 0
      %1430 = vmatprep.subr.bf16.mxu0 0
      %1431 = vmatpush2.bf16.msra.mxu0 0
      %1432 = vmatprep.subr.bf16.mxu0 0
      %1433 = vmatpush2.bf16.msra.mxu0 0
      %1434 = vmatprep.subr.bf16.mxu0 0
      %1435 = vmatpush2.bf16.msra.mxu0 0
      %1436 = vmatprep.subr.bf16.mxu0 0
      %1437 = vmatpush2.bf16.msra.mxu0 0
      %1438 = vmatprep.subr.bf16.mxu0 0
      %1439 = vmatpush2.bf16.msra.mxu0 0
      %1440 = vmatprep.mubr.bf16.mxu0 0
      %1441 = vmatmul.mubr.bf16.gmra.mxu0 %v1406
      %v1442 = vpop.f32.mrf.mxu0
      %v1443 = vadd.f32 0.0, %v1442
      %v1444 = vpop.f32.mrf.mxu0
      %v1445 = vpop.f32.mrf.mxu0
      %v1446 = vpop.f32.mrf.mxu0
      %1447 = vdwg.mxu0
      %v1448 = vpack.c.bf16 %v1443, %v1443
      %1450 = vrot.lane.b32.xlu0 %v1448, 96
      %v1451 = vpop.permute.xlu0 %1450
      %v1453 = vsel %vm685, %v1448, 0
      %v1456 = vsel %vm685, %v1451, 0
      %1458 = vmatprep.subr.bf16.mxu0 0
      %1459 = vmatpush1.bf16.xpose.msra.mxu0 0
      %1460 = vmatprep.subr.bf16.mxu0 0
      %1461 = vmatpush1.bf16.xpose.msra.mxu0 0
      %1462 = vmatprep.subr.bf16.mxu0 0
      %1463 = vmatpush1.bf16.xpose.msra.mxu0 0
      %1464 = vmatprep.subr.bf16.mxu0 0
      %1465 = vmatpush1.bf16.xpose.msra.mxu0 0
      %1466 = vmatprep.subr.bf16.mxu0 0
      %1467 = vmatpush1.bf16.xpose.msra.mxu0 0
      %1468 = vmatprep.subr.bf16.mxu0 0
      %1469 = vmatpush1.bf16.xpose.msra.mxu0 0
      %1470 = vmatprep.subr.bf16.mxu0 0
      %1471 = vmatpush1.bf16.xpose.msra.mxu0 0
      %1472 = vmatprep.subr.bf16.mxu0 0
      %1473 = vmatpush1.bf16.xpose.msra.mxu0 %v1456
      %1474 = vmatprep.subr.bf16.mxu0 0
      %1475 = vmatpush2.bf16.xpose.msra.mxu0 0
      %1476 = vmatprep.subr.bf16.mxu0 0
      %1477 = vmatpush2.bf16.xpose.msra.mxu0 0
      %1478 = vmatprep.subr.bf16.mxu0 0
      %1479 = vmatpush2.bf16.xpose.msra.mxu0 0
      %1480 = vmatprep.subr.bf16.mxu0 0
      %1481 = vmatpush2.bf16.xpose.msra.mxu0 0
      %1482 = vmatprep.subr.bf16.mxu0 0
      %1483 = vmatpush2.bf16.xpose.msra.mxu0 0
      %1484 = vmatprep.subr.bf16.mxu0 0
      %1485 = vmatpush2.bf16.xpose.msra.mxu0 0
      %1486 = vmatprep.subr.bf16.mxu0 0
      %1487 = vmatpush2.bf16.xpose.msra.mxu0 0
      %1488 = vmatprep.subr.bf16.mxu0 0
      %1489 = vmatpush2.bf16.xpose.msra.mxu0 0
      %1490 = vmatprep.mubr.bf16.mxu0 0
      %1491 = vmatmul.mubr.bf16.gmra.mxu0 %v1453
      %v1492 = vpop.f32.mrf.mxu0
      %v1493 = vadd.f32 0.0, %v1492
      %v1494 = vpop.f32.mrf.mxu0
      %v1495 = vpop.f32.mrf.mxu0
      %v1496 = vpop.f32.mrf.mxu0
      %1497 = vdwg.mxu0
      %v1498 = vmul.f32 %v1493, 0.35355338
      %v1499 = vsel %vm733, %v1498, -inf
      %1500 = vmax.xlane.f32.xlu0 %v1499
      %v1501 = vpop.xlane.xlu0 %1500
      %v1502 = vsub.f32 %v1498, %v1501
      %v1503 = vmul.f32 %v1502, 1.442695
      %v1504 = vpow.pop %v1503
      %v1505 = vsel %vm733, %v1504, 0.0
      %1506 = vadd.xlane.f32.xlu0 %v1505
      %v1507 = vpop.xlane.xlu0 %1506
      %v1508 = vrcp.pop %v1507
      %v1509 = vmul.f32 %v1504, %v1508
      %v1510 = vpack.c.bf16 %v1509, %v1509
      %1511 = vrot.lane.b32.xlu0 %v1448, 64
      %v1512 = vpop.permute.xlu0 %1511
      %v1514 = vsel %vm748, %v1510, 0
      %v1517 = vand.u32 %v1512, %v755
      %1519 = vmatprep.subr.bf16.mxu0 0
      %1520 = vmatpush1.bf16.msra.mxu0 0
      %1521 = vmatprep.subr.bf16.mxu0 0
      %1522 = vmatpush1.bf16.msra.mxu0 0
      %1523 = vmatprep.subr.bf16.mxu0 0
      %1524 = vmatpush1.bf16.msra.mxu0 0
      %1525 = vmatprep.subr.bf16.mxu0 0
      %1526 = vmatpush1.bf16.msra.mxu0 0
      %1527 = vmatprep.subr.bf16.mxu0 0
      %1528 = vmatpush1.bf16.msra.mxu0 0
      %1529 = vmatprep.subr.bf16.mxu0 0
      %1530 = vmatpush1.bf16.msra.mxu0 0
      %1531 = vmatprep.subr.bf16.mxu0 0
      %1532 = vmatpush1.bf16.msra.mxu0 0
      %1533 = vmatprep.subr.bf16.mxu0 0
      %1534 = vmatpush1.bf16.msra.mxu0 %v1517
      %1535 = vmatprep.subr.bf16.mxu0 0
      %1536 = vmatpush2.bf16.msra.mxu0 0
      %1537 = vmatprep.subr.bf16.mxu0 0
      %1538 = vmatpush2.bf16.msra.mxu0 0
      %1539 = vmatprep.subr.bf16.mxu0 0
      %1540 = vmatpush2.bf16.msra.mxu0 0
      %1541 = vmatprep.subr.bf16.mxu0 0
      %1542 = vmatpush2.bf16.msra.mxu0 0
      %1543 = vmatprep.subr.bf16.mxu0 0
      %1544 = vmatpush2.bf16.msra.mxu0 0
      %1545 = vmatprep.subr.bf16.mxu0 0
      %1546 = vmatpush2.bf16.msra.mxu0 0
      %1547 = vmatprep.subr.bf16.mxu0 0
      %1548 = vmatpush2.bf16.msra.mxu0 0
      %1549 = vmatprep.subr.bf16.mxu0 0
      %1550 = vmatpush2.bf16.msra.mxu0 0
      %1551 = vmatprep.mubr.bf16.mxu0 0
      %1552 = vmatmul.mubr.bf16.gmra.mxu0 %v1514
      %v1553 = vpop.f32.mrf.mxu0
      %v1554 = vadd.f32 0.0, %v1553
      %v1555 = vpop.f32.mrf.mxu0
      %v1556 = vpop.f32.mrf.mxu0
      %v1557 = vpop.f32.mrf.mxu0
      %1558 = vdwg.mxu0
      %1559 = vrot.lane.b32.xlu0 %v1448, 120
      %v1560 = vpop.permute.xlu0 %1559
      %1561 = vrot.lane.b32.xlu0 %v1448, 88
      %v1562 = vpop.permute.xlu0 %1561
      %v1564 = vsel %vm685, %v1560, 0
      %v1567 = vsel %vm685, %v1562, 0
      %1569 = vmatprep.subr.bf16.mxu0 0
      %1570 = vmatpush1.bf16.xpose.msra.mxu0 0
      %1571 = vmatprep.subr.bf16.mxu0 0
      %1572 = vmatpush1.bf16.xpose.msra.mxu0 0
      %1573 = vmatprep.subr.bf16.mxu0 0
      %1574 = vmatpush1.bf16.xpose.msra.mxu0 0
      %1575 = vmatprep.subr.bf16.mxu0 0
      %1576 = vmatpush1.bf16.xpose.msra.mxu0 0
      %1577 = vmatprep.subr.bf16.mxu0 0
      %1578 = vmatpush1.bf16.xpose.msra.mxu0 0
      %1579 = vmatprep.subr.bf16.mxu0 0
      %1580 = vmatpush1.bf16.xpose.msra.mxu0 0
      %1581 = vmatprep.subr.bf16.mxu0 0
      %1582 = vmatpush1.bf16.xpose.msra.mxu0 0
      %1583 = vmatprep.subr.bf16.mxu0 0
      %1584 = vmatpush1.bf16.xpose.msra.mxu0 %v1567
      %1585 = vmatprep.subr.bf16.mxu0 0
      %1586 = vmatpush2.bf16.xpose.msra.mxu0 0
      %1587 = vmatprep.subr.bf16.mxu0 0
      %1588 = vmatpush2.bf16.xpose.msra.mxu0 0
      %1589 = vmatprep.subr.bf16.mxu0 0
      %1590 = vmatpush2.bf16.xpose.msra.mxu0 0
      %1591 = vmatprep.subr.bf16.mxu0 0
      %1592 = vmatpush2.bf16.xpose.msra.mxu0 0
      %1593 = vmatprep.subr.bf16.mxu0 0
      %1594 = vmatpush2.bf16.xpose.msra.mxu0 0
      %1595 = vmatprep.subr.bf16.mxu0 0
      %1596 = vmatpush2.bf16.xpose.msra.mxu0 0
      %1597 = vmatprep.subr.bf16.mxu0 0
      %1598 = vmatpush2.bf16.xpose.msra.mxu0 0
      %1599 = vmatprep.subr.bf16.mxu0 0
      %1600 = vmatpush2.bf16.xpose.msra.mxu0 0
      %1601 = vmatprep.mubr.bf16.mxu0 0
      %1602 = vmatmul.mubr.bf16.gmra.mxu0 %v1564
      %v1603 = vpop.f32.mrf.mxu0
      %v1604 = vadd.f32 0.0, %v1603
      %v1605 = vpop.f32.mrf.mxu0
      %v1606 = vpop.f32.mrf.mxu0
      %v1607 = vpop.f32.mrf.mxu0
      %1608 = vdwg.mxu0
      %v1609 = vmul.f32 %v1604, 0.35355338
      %v1610 = vsel %vm733, %v1609, -inf
      %1611 = vmax.xlane.f32.xlu0 %v1610
      %v1612 = vpop.xlane.xlu0 %1611
      %v1613 = vsub.f32 %v1609, %v1612
      %v1614 = vmul.f32 %v1613, 1.442695
      %v1615 = vpow.pop %v1614
      %v1616 = vsel %vm733, %v1615, 0.0
      %1617 = vadd.xlane.f32.xlu0 %v1616
      %v1618 = vpop.xlane.xlu0 %1617
      %v1619 = vrcp.pop %v1618
      %v1620 = vmul.f32 %v1615, %v1619
      %v1621 = vpack.c.bf16 %v1620, %v1620
      %1622 = vrot.lane.b32.xlu0 %v1448, 56
      %v1623 = vpop.permute.xlu0 %1622
      %v1625 = vsel %vm748, %v1621, 0
      %v1628 = vand.u32 %v1623, %v755
      %1630 = vmatprep.subr.bf16.mxu0 0
      %1631 = vmatpush1.bf16.msra.mxu0 0
      %1632 = vmatprep.subr.bf16.mxu0 0
      %1633 = vmatpush1.bf16.msra.mxu0 0
      %1634 = vmatprep.subr.bf16.mxu0 0
      %1635 = vmatpush1.bf16.msra.mxu0 0
      %1636 = vmatprep.subr.bf16.mxu0 0
      %1637 = vmatpush1.bf16.msra.mxu0 0
      %1638 = vmatprep.subr.bf16.mxu0 0
      %1639 = vmatpush1.bf16.msra.mxu0 0
      %1640 = vmatprep.subr.bf16.mxu0 0
      %1641 = vmatpush1.bf16.msra.mxu0 0
      %1642 = vmatprep.subr.bf16.mxu0 0
      %1643 = vmatpush1.bf16.msra.mxu0 0
      %1644 = vmatprep.subr.bf16.mxu0 0
      %1645 = vmatpush1.bf16.msra.mxu0 %v1628
      %1646 = vmatprep.subr.bf16.mxu0 0
      %1647 = vmatpush2.bf16.msra.mxu0 0
      %1648 = vmatprep.subr.bf16.mxu0 0
      %1649 = vmatpush2.bf16.msra.mxu0 0
      %1650 = vmatprep.subr.bf16.mxu0 0
      %1651 = vmatpush2.bf16.msra.mxu0 0
      %1652 = vmatprep.subr.bf16.mxu0 0
      %1653 = vmatpush2.bf16.msra.mxu0 0
      %1654 = vmatprep.subr.bf16.mxu0 0
      %1655 = vmatpush2.bf16.msra.mxu0 0
      %1656 = vmatprep.subr.bf16.mxu0 0
      %1657 = vmatpush2.bf16.msra.mxu0 0
      %1658 = vmatprep.subr.bf16.mxu0 0
      %1659 = vmatpush2.bf16.msra.mxu0 0
      %1660 = vmatprep.subr.bf16.mxu0 0
      %1661 = vmatpush2.bf16.msra.mxu0 0
      %1662 = vmatprep.mubr.bf16.mxu0 0
      %1663 = vmatmul.mubr.bf16.gmra.mxu0 %v1625
      %v1664 = vpop.f32.mrf.mxu0
      %v1665 = vadd.f32 0.0, %v1664
      %v1666 = vpop.f32.mrf.mxu0
      %v1667 = vpop.f32.mrf.mxu0
      %v1668 = vpop.f32.mrf.mxu0
      %1669 = vdwg.mxu0
      %1670 = vrot.lane.b32.xlu0 %v1448, 112
      %v1671 = vpop.permute.xlu0 %1670
      %1672 = vrot.lane.b32.xlu0 %v1448, 80
      %v1673 = vpop.permute.xlu0 %1672
      %v1675 = vsel %vm685, %v1671, 0
      %v1678 = vsel %vm685, %v1673, 0
      %1680 = vmatprep.subr.bf16.mxu0 0
      %1681 = vmatpush1.bf16.xpose.msra.mxu0 0
      %1682 = vmatprep.subr.bf16.mxu0 0
      %1683 = vmatpush1.bf16.xpose.msra.mxu0 0
      %1684 = vmatprep.subr.bf16.mxu0 0
      %1685 = vmatpush1.bf16.xpose.msra.mxu0 0
      %1686 = vmatprep.subr.bf16.mxu0 0
      %1687 = vmatpush1.bf16.xpose.msra.mxu0 0
      %1688 = vmatprep.subr.bf16.mxu0 0
      %1689 = vmatpush1.bf16.xpose.msra.mxu0 0
      %1690 = vmatprep.subr.bf16.mxu0 0
      %1691 = vmatpush1.bf16.xpose.msra.mxu0 0
      %1692 = vmatprep.subr.bf16.mxu0 0
      %1693 = vmatpush1.bf16.xpose.msra.mxu0 0
      %1694 = vmatprep.subr.bf16.mxu0 0
      %1695 = vmatpush1.bf16.xpose.msra.mxu0 %v1678
      %1696 = vmatprep.subr.bf16.mxu0 0
      %1697 = vmatpush2.bf16.xpose.msra.mxu0 0
      %1698 = vmatprep.subr.bf16.mxu0 0
      %1699 = vmatpush2.bf16.xpose.msra.mxu0 0
      %1700 = vmatprep.subr.bf16.mxu0 0
      %1701 = vmatpush2.bf16.xpose.msra.mxu0 0
      %1702 = vmatprep.subr.bf16.mxu0 0
      %1703 = vmatpush2.bf16.xpose.msra.mxu0 0
      %1704 = vmatprep.subr.bf16.mxu0 0
      %1705 = vmatpush2.bf16.xpose.msra.mxu0 0
      %1706 = vmatprep.subr.bf16.mxu0 0
      %1707 = vmatpush2.bf16.xpose.msra.mxu0 0
      %1708 = vmatprep.subr.bf16.mxu0 0
      %1709 = vmatpush2.bf16.xpose.msra.mxu0 0
      %1710 = vmatprep.subr.bf16.mxu0 0
      %1711 = vmatpush2.bf16.xpose.msra.mxu0 0
      %1712 = vmatprep.mubr.bf16.mxu0 0
      %1713 = vmatmul.mubr.bf16.gmra.mxu0 %v1675
      %v1714 = vpop.f32.mrf.mxu0
      %v1715 = vadd.f32 0.0, %v1714
      %v1716 = vpop.f32.mrf.mxu0
      %v1717 = vpop.f32.mrf.mxu0
      %v1718 = vpop.f32.mrf.mxu0
      %1719 = vdwg.mxu0
      %v1720 = vmul.f32 %v1715, 0.35355338
      %v1721 = vsel %vm733, %v1720, -inf
      %1722 = vmax.xlane.f32.xlu0 %v1721
      %v1723 = vpop.xlane.xlu0 %1722
      %v1724 = vsub.f32 %v1720, %v1723
      %v1725 = vmul.f32 %v1724, 1.442695
      %v1726 = vpow.pop %v1725
      %v1727 = vsel %vm733, %v1726, 0.0
      %1728 = vadd.xlane.f32.xlu0 %v1727
      %v1729 = vpop.xlane.xlu0 %1728
      %v1730 = vrcp.pop %v1729
      %v1731 = vmul.f32 %v1726, %v1730
      %v1732 = vpack.c.bf16 %v1731, %v1731
      %1733 = vrot.lane.b32.xlu0 %v1448, 48
      %v1734 = vpop.permute.xlu0 %1733
      %v1736 = vsel %vm748, %v1732, 0
      %v1739 = vand.u32 %v1734, %v755
      %1741 = vmatprep.subr.bf16.mxu0 0
      %1742 = vmatpush1.bf16.msra.mxu0 0
      %1743 = vmatprep.subr.bf16.mxu0 0
      %1744 = vmatpush1.bf16.msra.mxu0 0
      %1745 = vmatprep.subr.bf16.mxu0 0
      %1746 = vmatpush1.bf16.msra.mxu0 0
      %1747 = vmatprep.subr.bf16.mxu0 0
      %1748 = vmatpush1.bf16.msra.mxu0 0
      %1749 = vmatprep.subr.bf16.mxu0 0
      %1750 = vmatpush1.bf16.msra.mxu0 0
      %1751 = vmatprep.subr.bf16.mxu0 0
      %1752 = vmatpush1.bf16.msra.mxu0 0
      %1753 = vmatprep.subr.bf16.mxu0 0
      %1754 = vmatpush1.bf16.msra.mxu0 0
      %1755 = vmatprep.subr.bf16.mxu0 0
      %1756 = vmatpush1.bf16.msra.mxu0 %v1739
      %1757 = vmatprep.subr.bf16.mxu0 0
      %1758 = vmatpush2.bf16.msra.mxu0 0
      %1759 = vmatprep.subr.bf16.mxu0 0
      %1760 = vmatpush2.bf16.msra.mxu0 0
      %1761 = vmatprep.subr.bf16.mxu0 0
      %1762 = vmatpush2.bf16.msra.mxu0 0
      %1763 = vmatprep.subr.bf16.mxu0 0
      %1764 = vmatpush2.bf16.msra.mxu0 0
      %1765 = vmatprep.subr.bf16.mxu0 0
      %1766 = vmatpush2.bf16.msra.mxu0 0
      %1767 = vmatprep.subr.bf16.mxu0 0
      %1768 = vmatpush2.bf16.msra.mxu0 0
      %1769 = vmatprep.subr.bf16.mxu0 0
      %1770 = vmatpush2.bf16.msra.mxu0 0
      %1771 = vmatprep.subr.bf16.mxu0 0
      %1772 = vmatpush2.bf16.msra.mxu0 0
      %1773 = vmatprep.mubr.bf16.mxu0 0
      %1774 = vmatmul.mubr.bf16.gmra.mxu0 %v1736
      %v1775 = vpop.f32.mrf.mxu0
      %v1776 = vadd.f32 0.0, %v1775
      %v1777 = vpop.f32.mrf.mxu0
      %v1778 = vpop.f32.mrf.mxu0
      %v1779 = vpop.f32.mrf.mxu0
      %1780 = vdwg.mxu0
      %1781 = vrot.lane.b32.xlu0 %v1448, 104
      %v1782 = vpop.permute.xlu0 %1781
      %1783 = vrot.lane.b32.xlu0 %v1448, 72
      %v1784 = vpop.permute.xlu0 %1783
      %v1786 = vsel %vm685, %v1782, 0
      %v1789 = vsel %vm685, %v1784, 0
      %1791 = vmatprep.subr.bf16.mxu0 0
      %1792 = vmatpush1.bf16.xpose.msra.mxu0 0
      %1793 = vmatprep.subr.bf16.mxu0 0
      %1794 = vmatpush1.bf16.xpose.msra.mxu0 0
      %1795 = vmatprep.subr.bf16.mxu0 0
      %1796 = vmatpush1.bf16.xpose.msra.mxu0 0
      %1797 = vmatprep.subr.bf16.mxu0 0
      %1798 = vmatpush1.bf16.xpose.msra.mxu0 0
      %1799 = vmatprep.subr.bf16.mxu0 0
      %1800 = vmatpush1.bf16.xpose.msra.mxu0 0
      %1801 = vmatprep.subr.bf16.mxu0 0
      %1802 = vmatpush1.bf16.xpose.msra.mxu0 0
      %1803 = vmatprep.subr.bf16.mxu0 0
      %1804 = vmatpush1.bf16.xpose.msra.mxu0 0
      %1805 = vmatprep.subr.bf16.mxu0 0
      %1806 = vmatpush1.bf16.xpose.msra.mxu0 %v1789
      %1807 = vmatprep.subr.bf16.mxu0 0
      %1808 = vmatpush2.bf16.xpose.msra.mxu0 0
      %1809 = vmatprep.subr.bf16.mxu0 0
      %1810 = vmatpush2.bf16.xpose.msra.mxu0 0
      %1811 = vmatprep.subr.bf16.mxu0 0
      %1812 = vmatpush2.bf16.xpose.msra.mxu0 0
      %1813 = vmatprep.subr.bf16.mxu0 0
      %1814 = vmatpush2.bf16.xpose.msra.mxu0 0
      %1815 = vmatprep.subr.bf16.mxu0 0
      %1816 = vmatpush2.bf16.xpose.msra.mxu0 0
      %1817 = vmatprep.subr.bf16.mxu0 0
      %1818 = vmatpush2.bf16.xpose.msra.mxu0 0
      %1819 = vmatprep.subr.bf16.mxu0 0
      %1820 = vmatpush2.bf16.xpose.msra.mxu0 0
      %1821 = vmatprep.subr.bf16.mxu0 0
      %1822 = vmatpush2.bf16.xpose.msra.mxu0 0
      %1823 = vmatprep.mubr.bf16.mxu0 0
      %1824 = vmatmul.mubr.bf16.gmra.mxu0 %v1786
      %v1825 = vpop.f32.mrf.mxu0
      %v1826 = vadd.f32 0.0, %v1825
      %v1827 = vpop.f32.mrf.mxu0
      %v1828 = vpop.f32.mrf.mxu0
      %v1829 = vpop.f32.mrf.mxu0
      %1830 = vdwg.mxu0
      %v1831 = vmul.f32 %v1826, 0.35355338
      %v1832 = vsel %vm733, %v1831, -inf
      %1833 = vmax.xlane.f32.xlu0 %v1832
      %v1834 = vpop.xlane.xlu0 %1833
      %v1835 = vsub.f32 %v1831, %v1834
      %v1836 = vmul.f32 %v1835, 1.442695
      %v1837 = vpow.pop %v1836
      %v1838 = vsel %vm733, %v1837, 0.0
      %1839 = vadd.xlane.f32.xlu0 %v1838
      %v1840 = vpop.xlane.xlu0 %1839
      %v1841 = vrcp.pop %v1840
      %v1842 = vmul.f32 %v1837, %v1841
      %v1843 = vpack.c.bf16 %v1842, %v1842
      %1844 = vrot.lane.b32.xlu0 %v1448, 40
      %v1845 = vpop.permute.xlu0 %1844
      %v1847 = vsel %vm748, %v1843, 0
      %v1850 = vand.u32 %v1845, %v755
      %1852 = vmatprep.subr.bf16.mxu0 0
      %1853 = vmatpush1.bf16.msra.mxu0 0
      %1854 = vmatprep.subr.bf16.mxu0 0
      %1855 = vmatpush1.bf16.msra.mxu0 0
      %1856 = vmatprep.subr.bf16.mxu0 0
      %1857 = vmatpush1.bf16.msra.mxu0 0
      %1858 = vmatprep.subr.bf16.mxu0 0
      %1859 = vmatpush1.bf16.msra.mxu0 0
      %1860 = vmatprep.subr.bf16.mxu0 0
      %1861 = vmatpush1.bf16.msra.mxu0 0
      %1862 = vmatprep.subr.bf16.mxu0 0
      %1863 = vmatpush1.bf16.msra.mxu0 0
      %1864 = vmatprep.subr.bf16.mxu0 0
      %1865 = vmatpush1.bf16.msra.mxu0 0
      %1866 = vmatprep.subr.bf16.mxu0 0
      %1867 = vmatpush1.bf16.msra.mxu0 %v1850
      %1868 = vmatprep.subr.bf16.mxu0 0
      %1869 = vmatpush2.bf16.msra.mxu0 0
      %1870 = vmatprep.subr.bf16.mxu0 0
      %1871 = vmatpush2.bf16.msra.mxu0 0
      %1872 = vmatprep.subr.bf16.mxu0 0
      %1873 = vmatpush2.bf16.msra.mxu0 0
      %1874 = vmatprep.subr.bf16.mxu0 0
      %1875 = vmatpush2.bf16.msra.mxu0 0
      %1876 = vmatprep.subr.bf16.mxu0 0
      %1877 = vmatpush2.bf16.msra.mxu0 0
      %1878 = vmatprep.subr.bf16.mxu0 0
      %1879 = vmatpush2.bf16.msra.mxu0 0
      %1880 = vmatprep.subr.bf16.mxu0 0
      %1881 = vmatpush2.bf16.msra.mxu0 0
      %1882 = vmatprep.subr.bf16.mxu0 0
      %1883 = vmatpush2.bf16.msra.mxu0 0
      %1884 = vmatprep.mubr.bf16.mxu0 0
      %1885 = vmatmul.mubr.bf16.gmra.mxu0 %v1847
      %v1886 = vpop.f32.mrf.mxu0
      %v1887 = vadd.f32 0.0, %v1886
      %v1888 = vpop.f32.mrf.mxu0
      %v1889 = vpop.f32.mrf.mxu0
      %v1890 = vpop.f32.mrf.mxu0
      %1891 = vdwg.mxu0
      %1893 = vrot.lane.b32.xlu0 %v1665, 8
      %v1894 = vpop.permute.xlu0 %1893
      %1897 = vrot.lane.b32.xlu0 %v1776, 16
      %v1898 = vpop.permute.xlu0 %1897
      %1901 = vrot.lane.b32.xlu0 %v1887, 24
      %v1902 = vpop.permute.xlu0 %1901
      %v1904 = vsel %vm685, %v1554, %v1894
      %v1905 = vsel %vm1145, %v1904, %v1898
      %v1906 = vsel %vm1147, %v1905, %v1902
      %v1907 = vpack.c.bf16 %v1906, %v1906
      %v1909 = vsel %vm637, %v1907, 0
      %1911 = vmatprep.subr.bf16.mxu0 0
      %1912 = vmatpush1.bf16.msra.mxu0 0
      %1913 = vmatprep.subr.bf16.mxu0 0
      %1914 = vmatpush1.bf16.msra.mxu0 0
      %1915 = vmatprep.subr.bf16.mxu0 0
      %1916 = vmatpush1.bf16.msra.mxu0 0
      %1917 = vmatprep.subr.bf16.mxu0 0
      %1918 = vmatpush1.bf16.msra.mxu0 0
      %1919 = vmatprep.subr.bf16.mxu0 0
      %1920 = vmatpush1.bf16.msra.mxu0 0
      %1921 = vmatprep.subr.bf16.mxu0 0
      %1922 = vmatpush1.bf16.msra.mxu0 0
      %1923 = vmatprep.subr.bf16.mxu0 0
      %1924 = vmatpush1.bf16.msra.mxu0 %v1165
      %1925 = vmatprep.subr.bf16.mxu0 0
      %1926 = vmatpush1.bf16.msra.mxu0 %v1164
      %1927 = vmatprep.subr.bf16.mxu0 0
      %1928 = vmatpush2.bf16.msra.mxu0 0
      %1929 = vmatprep.subr.bf16.mxu0 0
      %1930 = vmatpush2.bf16.msra.mxu0 0
      %1931 = vmatprep.subr.bf16.mxu0 0
      %1932 = vmatpush2.bf16.msra.mxu0 0
      %1933 = vmatprep.subr.bf16.mxu0 0
      %1934 = vmatpush2.bf16.msra.mxu0 0
      %1935 = vmatprep.subr.bf16.mxu0 0
      %1936 = vmatpush2.bf16.msra.mxu0 0
      %1937 = vmatprep.subr.bf16.mxu0 0
      %1938 = vmatpush2.bf16.msra.mxu0 0
      %1939 = vmatprep.subr.bf16.mxu0 0
      %1940 = vmatpush2.bf16.msra.mxu0 0
      %1941 = vmatprep.subr.bf16.mxu0 0
      %1942 = vmatpush2.bf16.msra.mxu0 0
      %1943 = vmatprep.mubr.bf16.mxu0 0
      %1944 = vmatmul.mubr.bf16.gmra.mxu0 %v1909
      %v1945 = vpop.f32.mrf.mxu0
      %v1946 = vadd.f32 %v1154, %v1945
      %v1947 = vpop.f32.mrf.mxu0
      %v1948 = vpop.f32.mrf.mxu0
      %v1949 = vpop.f32.mrf.mxu0
      %1950 = vdwg.mxu0
      %v1951 = vadd.f32 %v1946, %v1388
      %v1952 = vsel %vm595, %v1951, 0.0
      %1953 = vadd.xlane.f32.xlu0 %v1952
      %v1954 = vpop.xlane.xlu0 %1953
      %v1955 = vmul.f32 %v1954, %v599
      %v1956 = vsub.f32 %v1951, %v1955
      %v1957 = vmul.f32 %v1956, %v1956
      %v1958 = vsel %vm595, %v1957, 0.0
      %1959 = vadd.xlane.f32.xlu0 %v1958
      %v1960 = vpop.xlane.xlu0 %1959
      %v1961 = vmul.f32 %v1960, %v599
      %v1962 = vadd.f32 %v1961, 1e-05
      %v1963 = vrsqrt.pop %v1962
      %v1964 = vmul.f32 %v1956, %v1963
      %v1965 = vmul.f32 %v1964, %v1229
      %v1966 = vadd.f32 %v1965, %v1236
      %v1967 = vpack.c.bf16 %v1966, %v1966
      %v1969 = vsel %vm637, %v1967, 0
      %1971 = vmatprep.subr.bf16.mxu0 0
      %1972 = vmatpush1.bf16.msra.mxu0 0
      %1973 = vmatprep.subr.bf16.mxu0 0
      %1974 = vmatpush1.bf16.msra.mxu0 0
      %1975 = vmatprep.subr.bf16.mxu0 0
      %1976 = vmatpush1.bf16.msra.mxu0 0
      %1977 = vmatprep.subr.bf16.mxu0 0
      %1978 = vmatpush1.bf16.msra.mxu0 0
      %1979 = vmatprep.subr.bf16.mxu0 0
      %1980 = vmatpush1.bf16.msra.mxu0 0
      %1981 = vmatprep.subr.bf16.mxu0 0
      %1982 = vmatpush1.bf16.msra.mxu0 0
      %1983 = vmatprep.subr.bf16.mxu0 0
      %1984 = vmatpush1.bf16.msra.mxu0 %v1255
      %1985 = vmatprep.subr.bf16.mxu0 0
      %1986 = vmatpush1.bf16.msra.mxu0 %v1254
      %1987 = vmatprep.subr.bf16.mxu0 0
      %1988 = vmatpush2.bf16.msra.mxu0 0
      %1989 = vmatprep.subr.bf16.mxu0 0
      %1990 = vmatpush2.bf16.msra.mxu0 0
      %1991 = vmatprep.subr.bf16.mxu0 0
      %1992 = vmatpush2.bf16.msra.mxu0 0
      %1993 = vmatprep.subr.bf16.mxu0 0
      %1994 = vmatpush2.bf16.msra.mxu0 0
      %1995 = vmatprep.subr.bf16.mxu0 0
      %1996 = vmatpush2.bf16.msra.mxu0 0
      %1997 = vmatprep.subr.bf16.mxu0 0
      %1998 = vmatpush2.bf16.msra.mxu0 0
      %1999 = vmatprep.subr.bf16.mxu0 0
      %2000 = vmatpush2.bf16.msra.mxu0 0
      %2001 = vmatprep.subr.bf16.mxu0 0
      %2002 = vmatpush2.bf16.msra.mxu0 0
      %2003 = vmatprep.mubr.bf16.mxu0 0
      %2004 = vmatmul.mubr.bf16.gmra.mxu0 %v1969
      %v2005 = vpop.f32.mrf.mxu0
      %v2006 = vadd.f32 %v1244, %v2005
      %v2007 = vpop.f32.mrf.mxu0
      %v2008 = vpop.f32.mrf.mxu0
      %v2009 = vpop.f32.mrf.mxu0
      %2010 = vdwg.mxu0
      %v2011 = vmul.f32 %v2006, 0.5
      %v2012 = vmul.f32 %v2006, 0.044715
      %v2013 = vmul.f32 %v2012, %v2006
      %v2014 = vmul.f32 %v2013, %v2006
      %v2015 = vadd.f32 %v2006, %v2014
      %v2016 = vmul.f32 %v2015, 0.7978846
      %v2017 = vtanh.pop %v2016
      %v2018 = vadd.f32 %v2017, 1.0
      %v2019 = vmul.f32 %v2011, %v2018
      %v2020 = vpack.c.bf16 %v2019, %v2019
      %v2022 = vsel %vm1341, %v2020, 0
      %2024 = vmatprep.subr.bf16.mxu0 0
      %2025 = vmatpush1.bf16.msra.mxu0 0
      %2026 = vmatprep.subr.bf16.mxu0 0
      %2027 = vmatpush1.bf16.msra.mxu0 0
      %2028 = vmatprep.subr.bf16.mxu0 0
      %2029 = vmatpush1.bf16.msra.mxu0 0
      %2030 = vmatprep.subr.bf16.mxu0 0
      %2031 = vmatpush1.bf16.msra.mxu0 0
      %2032 = vmatprep.subr.bf16.mxu0 0
      %2033 = vmatpush1.bf16.msra.mxu0 %v1336
      %2034 = vmatprep.subr.bf16.mxu0 0
      %2035 = vmatpush1.bf16.msra.mxu0 %v1335
      %2036 = vmatprep.subr.bf16.mxu0 0
      %2037 = vmatpush1.bf16.msra.mxu0 %v1334
      %2038 = vmatprep.subr.bf16.mxu0 0
      %2039 = vmatpush1.bf16.msra.mxu0 %v1333
      %2040 = vmatprep.subr.bf16.mxu0 0
      %2041 = vmatpush2.bf16.msra.mxu0 0
      %2042 = vmatprep.subr.bf16.mxu0 0
      %2043 = vmatpush2.bf16.msra.mxu0 0
      %2044 = vmatprep.subr.bf16.mxu0 0
      %2045 = vmatpush2.bf16.msra.mxu0 0
      %2046 = vmatprep.subr.bf16.mxu0 0
      %2047 = vmatpush2.bf16.msra.mxu0 0
      %2048 = vmatprep.subr.bf16.mxu0 0
      %2049 = vmatpush2.bf16.msra.mxu0 0
      %2050 = vmatprep.subr.bf16.mxu0 0
      %2051 = vmatpush2.bf16.msra.mxu0 0
      %2052 = vmatprep.subr.bf16.mxu0 0
      %2053 = vmatpush2.bf16.msra.mxu0 0
      %2054 = vmatprep.subr.bf16.mxu0 0
      %2055 = vmatpush2.bf16.msra.mxu0 0
      %2056 = vmatprep.mubr.bf16.mxu0 0
      %2057 = vmatmul.mubr.bf16.gmra.mxu0 %v2022
      %v2058 = vpop.f32.mrf.mxu0
      %v2059 = vadd.f32 %v1315, %v2058
      %v2060 = vpop.f32.mrf.mxu0
      %v2061 = vpop.f32.mrf.mxu0
      %v2062 = vpop.f32.mrf.mxu0
      %2063 = vdwg.mxu0
      %v2064 = vadd.f32 %v2059, %v1951
      %2065 = vst.msk [vmem:[%s1387] sm:$0x1f] %vm595, %v2064
      // Predicated region
      $region73: #{vit_forward.4} parent=67 // pred_check
        %p2066 = pneg %p343
      $region74: #{vit_forward.4} parent=67 // pred_check_branch
        %2068 = sbr.rel (%p2066) target = $region76
      $region75: #{vit_forward.4} parent=67 // pred_region
        _
      $region76: #{vit_forward.4} parent=67 // pred_fallthru
        _
      // Predicated region
      $region77: #{vit_forward.4} parent=67 // pred_check
        %p2069 = pneg %p343
      $region78: #{vit_forward.4} parent=67 // pred_check_branch
        %2071 = sbr.rel (%p2069) target = $region80
      $region79: #{vit_forward.4} parent=67 // pred_region
        _
      $region80: #{vit_forward.4} parent=67 // pred_fallthru
        _
    $region68: #{vit_forward.4} parent=5 // pred_fallthru
      _
    %p2072 = scmp.le.s32.totalorder 2, %s18
    // Predicated region
    $region81: #{vit_forward.4} parent=5 // pred_check
      %p2073 = pneg %p2072
    $region82: #{vit_forward.4} parent=5 // pred_check_branch
      %2075 = sbr.rel (%p2073) target = $region84
    $region83: #{vit_forward.4} parent=5 // pred_region
      %s2076 = ssub.s32 %s18, 2
    $region84: #{vit_forward.4} parent=5 // pred_fallthru
      _
  $region6: #{vit_forward.4} parent=0 // loop_footer
    %s22 = sadd.s32 1, %s18
  $region7: #{vit_forward.4} parent=0 // loop_footer_branch
    %17 = sbr.rel target = $region3
  $region8: #{vit_forward.4} parent=0 // loop_exit
    _

</llo_original>
